<compile_context>
chip_gen: v7x
topology: tpu7x:2x2x1
jax: 0.10.0
libtpu: 0.0.40
codegen_flags: <defaults>
</compile_context>

<pallas_src>
import functools
import math

import jax
import jax.numpy as jnp
from jax import lax
from jax.experimental import pallas as pl
from jax.experimental.pallas import tpu as pltpu


# ----------------------------------------------------------------------------- helpers

def _gelu(x):
    # TODO(synk): nn.GELU default is exact (erf); tanh approximation used for
    # guaranteed Mosaic lowering of the transcendental (EUP tanh path).
    return 0.5 * x * (1.0 + jnp.tanh(0.7978845608028654 * (x + 0.044715 * x * x * x)))


def _layer_norm_channels(x, w, b, eps=1e-5):
    """LayerNorm over the channel axis for (C, S)-layout activations; w, b are (C, 1)."""
    mu = jnp.mean(x, axis=0, keepdims=True)
    var = jnp.mean((x - mu) ** 2, axis=0, keepdims=True)
    return (x - mu) * lax.rsqrt(var + eps) * w + b


def _trilinear_resize(x, out_size):
    """PyTorch F.interpolate(..., mode='trilinear', align_corners=False), no antialias.
    x: [B, C, D, H, W] -> [B, C, *out_size].  Plain-JAX glue (index/weight setup)."""
    def resize_axis(v, axis, out_len):
        in_len = v.shape[axis]
        scale = in_len / out_len
        coords = (jnp.arange(out_len, dtype=jnp.float32) + 0.5) * scale - 0.5
        coords = jnp.clip(coords, 0.0, in_len - 1)
        lo = jnp.floor(coords).astype(jnp.int32)
        hi = jnp.minimum(lo + 1, in_len - 1)
        w = coords - lo.astype(jnp.float32)
        vlo = jnp.take(v, lo, axis=axis)
        vhi = jnp.take(v, hi, axis=axis)
        wshape = [1] * v.ndim
        wshape[axis] = out_len
        w = w.reshape(wshape)
        return vlo * (1.0 - w) + vhi * w

    for ax, sz in zip((2, 3, 4), out_size):
        x = resize_axis(x, ax, sz)
    return x


# ----------------------------------------------------------------------------- fused kernel

def _fused_classifier_kernel(
        x_ref, m_ref, pos_ref,
        wqkv_ref, bqkv_ref, wo_ref, w1_ref, w2_ref, vec_ref,
        fc1w_ref, fc1b_ref, fc2w_ref, fc2b_ref,
        o_ref, *, num_heads, num_layers):
    f32 = jnp.float32
    bf16 = jnp.bfloat16

    C, S = pos_ref.shape
    F = w1_ref.shape[1]
    Dp = wo_ref.shape[2]            # padded per-head dim (8, sublane-aligned)

    # static row offsets inside the per-layer vector slab [b1, bo, ln1w, ln1b, ln2w, ln2b, b2]
    o_b1 = 0
    o_bo = F
    o_ln1w = F + C
    o_ln1b = F + 2 * C
    o_ln2w = F + 3 * C
    o_ln2b = F + 4 * C
    o_b2 = F + 5 * C

    # ---- embed: x * mask + positional encoding ----------------------------------
    x0 = x_ref[0] * m_ref[0] + pos_ref[...]                     # (C, S) f32

    def layer_body(l, x):
        vec = vec_ref[l]                                        # (F + 6C, 1) f32
        b1 = vec[o_b1:o_b1 + F]
        bo = vec[o_bo:o_bo + C]
        ln1w = vec[o_ln1w:o_ln1w + C]
        ln1b = vec[o_ln1b:o_ln1b + C]
        ln2w = vec[o_ln2w:o_ln2w + C]
        ln2b = vec[o_ln2b:o_ln2b + C]
        b2 = vec[o_b2:o_b2 + C]

        xb = x.astype(bf16)

        # ---- multi-head self-attention (fori_loop over heads, fused QKV weight) --
        def head_body(h, attn):
            idx = l * num_heads + h
            # fused per-head projection: (3*Dp, C) @ (C, S); 1/sqrt(Dh) folded in wq/bq
            qkv = jnp.dot(wqkv_ref[idx], xb,
                          preferred_element_type=f32) + bqkv_ref[idx]   # (3*Dp, S)
            q = qkv[0:Dp].astype(bf16)                                  # tile-aligned slices
            k = qkv[Dp:2 * Dp].astype(bf16)
            v = qkv[2 * Dp:3 * Dp].astype(bf16)

            # scores laid out (S_k, S_q): softmax reductions run over SUBLANES (VPU)
            s = lax.dot_general(k, q, (((0,), (0,)), ((), ())),
                                preferred_element_type=f32)             # (S, S)
            m = jnp.max(s, axis=0, keepdims=True)                       # (1, S_q)
            e = jnp.exp(s - m)                                          # f32
            denom = jnp.sum(e, axis=0, keepdims=True)                   # (1, S_q)

            # o[d, i] = sum_j v[d, j] e[j, i]; normalize AFTER the matmul (tiny tensor)
            o_h = jnp.dot(v, e.astype(bf16), preferred_element_type=f32)   # (Dp, S_q)
            o_h = o_h * pl.reciprocal(denom, approx=True)

            # per-head slice of the output projection, accumulated into (C, S)
            return attn + jnp.dot(wo_ref[idx], o_h.astype(bf16),
                                  preferred_element_type=f32)

        attn = lax.fori_loop(0, num_heads, head_body, jnp.zeros_like(x))

        # ---- post-norm encoder layer: residual + LN, FFN, residual + LN ----------
        x = _layer_norm_channels(x + attn + bo, ln1w, ln1b)
        hb = x.astype(bf16)
        h1 = _gelu(jnp.dot(w1_ref[l], hb, preferred_element_type=f32) + b1)   # (F, S)
        h2 = jnp.dot(w2_ref[l], h1.astype(bf16), preferred_element_type=f32) + b2
        return _layer_norm_channels(x + h2, ln2w, ln2b)

    xL = lax.fori_loop(0, num_layers, layer_body, x0)

    # ---- pooled classification head (row-oriented, lane-dense output) -----------
    ones_row = jnp.ones((1, S), f32)
    pooled = lax.dot_general(ones_row, xL, (((1,), (1,)), ((), ())),
                             preferred_element_type=f32) * (1.0 / S)          # (1, C)
    hidden = _gelu(jnp.dot(pooled, fc1w_ref[...],
                           preferred_element_type=f32) + fc1b_ref[...])       # (1, hid)
    logits = jnp.dot(hidden, fc2w_ref[...],
                     preferred_element_type=f32) + fc2b_ref[...]              # (1, NCP)
    o_ref[0] = logits


def classifier_forward_fused(x_tok, m_tok, pos, kp, num_heads, num_layers):
    B, C, S = x_tok.shape
    NCP = kp["fc2w"].shape[1]

    def const_spec(shape):
        n = len(shape)
        return pl.BlockSpec(shape, lambda b, n=n: (0,) * n)

    kernel = functools.partial(_fused_classifier_kernel,
                               num_heads=num_heads, num_layers=num_layers)

    out = pl.pallas_call(
        kernel,
        out_shape=jax.ShapeDtypeStruct((B, 1, NCP), jnp.float32),
        grid=(B,),
        in_specs=[
            pl.BlockSpec((1, C, S), lambda b: (b, 0, 0)),   # x tokens (C, S) per batch
            pl.BlockSpec((1, 1, S), lambda b: (b, 0, 0)),   # resized mask
            const_spec(pos.shape),                          # positional encoding
            const_spec(kp["wqkv"].shape),                   # (L*H, 3*Dp, C) bf16
            const_spec(kp["bqkv"].shape),                   # (L*H, 3*Dp, 1) f32
            const_spec(kp["wo"].shape),                     # (L*H, C, Dp) bf16
            const_spec(kp["w1"].shape),                     # (L, F, C) bf16
            const_spec(kp["w2"].shape),                     # (L, C, F) bf16
            const_spec(kp["vec"].shape),                    # (L, F+6C, 1) f32 bias/LN slab
            const_spec(kp["fc1w"].shape),                   # (C, hid) f32
            const_spec(kp["fc1b"].shape),                   # (1, hid) f32
            const_spec(kp["fc2w"].shape),                   # (hid, NCP) f32
            const_spec(kp["fc2b"].shape),                   # (1, NCP) f32
        ],
        out_specs=pl.BlockSpec((1, 1, NCP), lambda b: (b, 0, 0)),
        compiler_params=pltpu.CompilerParams(
            dimension_semantics=("parallel",),
            vmem_limit_bytes=32 * 1024 * 1024,
        ),
    )(x_tok, m_tok, pos,
      kp["wqkv"], kp["bqkv"], kp["wo"], kp["w1"], kp["w2"], kp["vec"],
      kp["fc1w"], kp["fc1b"], kp["fc2w"], kp["fc2b"])
    return out[:, 0, :]


# ----------------------------------------------------------------------------- params

def init_params(key, input_dim, num_classes=117, mlp_ratio=2.0, num_layers=6):
    C = input_dim
    F = 4 * C
    hid = int(C * mlp_ratio)

    def dense(k, fi, fo):
        return jax.random.normal(k, (fi, fo), jnp.float32) * (1.0 / math.sqrt(fi))

    ks = jax.random.split(key, num_layers + 2)
    pos = jax.random.normal(ks[0], (1, C, 8, 8, 8), jnp.float32) * 0.02

    layers = []
    for i in range(num_layers):
        lk = jax.random.split(ks[1 + i], 4)
        layers.append(dict(
            wqkv=dense(lk[0], C, 3 * C), bqkv=jnp.zeros((1, 3 * C), jnp.float32),
            wo=dense(lk[1], C, C), bo=jnp.zeros((1, C), jnp.float32),
            ln1w=jnp.ones((1, C), jnp.float32), ln1b=jnp.zeros((1, C), jnp.float32),
            w1=dense(lk[2], C, F), b1=jnp.zeros((1, F), jnp.float32),
            w2=dense(lk[3], F, C), b2=jnp.zeros((1, C), jnp.float32),
            ln2w=jnp.ones((1, C), jnp.float32), ln2b=jnp.zeros((1, C), jnp.float32),
        ))

    hk = jax.random.split(ks[num_layers + 1], 2)
    return dict(
        pos=pos,
        layers=layers,
        fc1_w=dense(hk[0], C, hid), fc1_b=jnp.zeros((1, hid), jnp.float32),
        fc2_w=dense(hk[1], hid, num_classes), fc2_b=jnp.zeros((1, num_classes), jnp.float32),
    )


def prepare_kernel_params(params, num_heads):
    """Split / transpose / pad / stack weights at trace time into the kernel's
    (C, S) channels-on-sublanes layout.  Per-head Q/K/V weights are fused into a
    single (3*Dp, C) block per head with the head dim zero-padded 4 -> 8 so the
    in-kernel q/k/v slices are 8-sublane-tile aligned.  Big MXU weights are bf16."""
    layers = params["layers"]
    L = len(layers)
    C = layers[0]["wqkv"].shape[0]
    H = num_heads
    Dh = C // H
    Dp = 8                                   # padded head dim (sublane-aligned)
    F = layers[0]["w1"].shape[1]
    scale = 1.0 / math.sqrt(Dh)
    bf16 = jnp.bfloat16

    def stack(k):
        return jnp.stack([lp[k] for lp in layers], axis=0)

    wqkv = stack("wqkv")                                  # (L, C, 3C), y = x @ W
    bqkv = stack("bqkv")[:, 0, :]                         # (L, 3C)
    wq, wk, wv = wqkv[:, :, :C], wqkv[:, :, C:2 * C], wqkv[:, :, 2 * C:]
    bq, bk, bv = bqkv[:, :C], bqkv[:, C:2 * C], bqkv[:, 2 * C:]

    def head_t(w):     # (L, C, C) -> (L, H, Dh, C): w_t[l,h,d,c] = w[l,c,h*Dh+d]
        return jnp.transpose(w.reshape(L, C, H, Dh), (0, 2, 3, 1))

    def head_b(b):     # (L, C) -> (L, H, Dh, 1)
        return b.reshape(L, H, Dh, 1)

    def pad_rows(t):   # zero-pad the head dim (axis 2) Dh -> Dp
        return jnp.pad(t, ((0, 0), (0, 0), (0, Dp - Dh), (0, 0)))

    # fused per-head projection weight / bias, rows [q(pad), k(pad), v(pad)]
    w_fused = jnp.concatenate([pad_rows(head_t(wq) * scale),
                               pad_rows(head_t(wk)),
                               pad_rows(head_t(wv))], axis=2)        # (L, H, 3*Dp, C)
    w_fused = w_fused.reshape(L * H, 3 * Dp, C).astype(bf16)
    b_fused = jnp.concatenate([pad_rows(head_b(bq) * scale),
                               pad_rows(head_b(bk)),
                               pad_rows(head_b(bv))], axis=2)        # (L, H, 3*Dp, 1)
    b_fused = b_fused.reshape(L * H, 3 * Dp, 1)

    wo = stack("wo")                                      # (L, C, C): attn = headcat @ wo
    wo_t = jnp.transpose(wo.reshape(L, H, Dh, C), (0, 1, 3, 2))      # (L, H, C, Dh)
    wo_t = jnp.pad(wo_t, ((0, 0), (0, 0), (0, 0), (0, Dp - Dh)))     # (L, H, C, Dp)
    wo_t = wo_t.reshape(L * H, C, Dp).astype(bf16)

    def col(k):        # (L, 1, n) -> (L, n, 1)
        return jnp.transpose(stack(k), (0, 2, 1))

    # single per-layer f32 slab for all bias / layernorm vectors (one DMA)
    vec = jnp.concatenate([col("b1"), col("bo"), col("ln1w"), col("ln1b"),
                           col("ln2w"), col("ln2b"), col("b2")], axis=1)   # (L, F+6C, 1)

    # classification head, row orientation, classes padded to a lane-dense 128
    fc2w = params["fc2_w"]
    fc2b = params["fc2_b"]
    NC = fc2w.shape[1]
    NCP = ((NC + 127) // 128) * 128
    fc2w = jnp.pad(fc2w, ((0, 0), (0, NCP - NC)))
    fc2b = jnp.pad(fc2b, ((0, 0), (0, NCP - NC)))

    return dict(
        wqkv=w_fused, bqkv=b_fused, wo=wo_t,
        w1=jnp.transpose(stack("w1"), (0, 2, 1)).astype(bf16),       # (L, F, C)
        w2=jnp.transpose(stack("w2"), (0, 2, 1)).astype(bf16),       # (L, C, F)
        vec=vec,
        fc1w=params["fc1_w"], fc1b=params["fc1_b"],                  # (C, hid), (1, hid)
        fc2w=fc2w, fc2b=fc2b,                                        # (hid, NCP), (1, NCP)
    )


# ----------------------------------------------------------------------------- model

def classifier_forward(features, mask, params, num_heads=8):
    # FeatureConcatenator: concat along channel dim (NCDHW)
    x = jnp.concatenate(features, axis=1)                         # (B, C, 8, 8, 8)
    B, C, D, Hs, Ws = x.shape
    S = D * Hs * Ws

    # F.interpolate(mask, size=(8,8,8), mode='trilinear', align_corners=False)
    m = _trilinear_resize(mask.astype(jnp.float32), (D, Hs, Ws))  # (B, 1, 8, 8, 8)

    # NCDHW -> (B, C, S): channels on sublanes, S=512 voxels on lanes (free reshape)
    x_tok = x.reshape(B, C, S)
    m_tok = m.reshape(B, 1, S)
    pos = params["pos"].reshape(C, S)

    kp = prepare_kernel_params(params, num_heads)
    num_layers = len(params["layers"])
    num_classes = params["fc2_w"].shape[1]
    out = classifier_forward_fused(x_tok, m_tok, pos, kp, num_heads, num_layers)
    return out[:, :num_classes]


# ----------------------------------------------------------------------------- main

if __name__ == "__main__":
    key = jax.random.PRNGKey(0)
    k_f1, k_f2, k_m, k_p = jax.random.split(key, 4)

    B = 2
    input_dim = 32          # sum of concatenated feature channels
    # two feature maps to concatenate -> [B, 32, 8, 8, 8]
    feat1 = jax.random.normal(k_f1, (B, 16, 8, 8, 8), jnp.float32)
    feat2 = jax.random.normal(k_f2, (B, 16, 8, 8, 8), jnp.float32)
    # binary mask at higher resolution, trilinearly interpolated down to (8,8,8)
    mask = (jax.random.uniform(k_m, (B, 1, 16, 16, 16)) > 0.5).astype(jnp.float32)

    params = init_params(k_p, input_dim, num_classes=117, mlp_ratio=2.0, num_layers=6)

    fwd = jax.jit(functools.partial(classifier_forward, num_heads=8))
    out = jax.block_until_ready(fwd([feat1, feat2], mask, params))
    assert out.shape == (B, 117), out.shape
    assert bool(jnp.all(jnp.isfinite(out)))
    print("KERNEL_OK")
</pallas_src>

<mosaic_0001>
module attributes {stable_mosaic.version = 11 : i64} {
  func.func @_fused_classifier_kernel(%arg0: i32, %arg1: memref<1x32x512xf32, #tpu.memory_space<vmem>>, %arg2: memref<1x1x512xf32, #tpu.memory_space<vmem>>, %arg3: memref<32x512xf32, #tpu.memory_space<vmem>>, %arg4: memref<48x24x32xbf16, #tpu.memory_space<vmem>>, %arg5: memref<48x24x1xf32, #tpu.memory_space<vmem>>, %arg6: memref<48x32x8xbf16, #tpu.memory_space<vmem>>, %arg7: memref<6x128x32xbf16, #tpu.memory_space<vmem>>, %arg8: memref<6x32x128xbf16, #tpu.memory_space<vmem>>, %arg9: memref<6x320x1xf32, #tpu.memory_space<vmem>>, %arg10: memref<32x64xf32, #tpu.memory_space<vmem>>, %arg11: memref<1x64xf32, #tpu.memory_space<vmem>>, %arg12: memref<64x128xf32, #tpu.memory_space<vmem>>, %arg13: memref<1x128xf32, #tpu.memory_space<vmem>>, %arg14: memref<1x1x128xf32, #tpu.memory_space<vmem>>) attributes {dimension_semantics = [#tpu.dimension_semantics<parallel>], iteration_bounds = array<i64: 2>, scalar_prefetch = 0 : i64, scratch_operands = 0 : i64, tpu.core_type = #tpu.core_type<tc>, window_params = [{transform_indices = @transform_0, window_bounds = array<i64: 1, 32, 512>}, {transform_indices = @transform_1, window_bounds = array<i64: 1, 1, 512>}, {pipeline_mode = #tpu.pipeline_mode<synchronous>, transform_indices = @transform_2, window_bounds = array<i64: 32, 512>}, {pipeline_mode = #tpu.pipeline_mode<synchronous>, transform_indices = @transform_3, window_bounds = array<i64: 48, 24, 32>}, {pipeline_mode = #tpu.pipeline_mode<synchronous>, transform_indices = @transform_4, window_bounds = array<i64: 48, 24, 1>}, {pipeline_mode = #tpu.pipeline_mode<synchronous>, transform_indices = @transform_5, window_bounds = array<i64: 48, 32, 8>}, {pipeline_mode = #tpu.pipeline_mode<synchronous>, transform_indices = @transform_6, window_bounds = array<i64: 6, 128, 32>}, {pipeline_mode = #tpu.pipeline_mode<synchronous>, transform_indices = @transform_7, window_bounds = array<i64: 6, 32, 128>}, {pipeline_mode = #tpu.pipeline_mode<synchronous>, transform_indices = @transform_8, window_bounds = array<i64: 6, 320, 1>}, {pipeline_mode = #tpu.pipeline_mode<synchronous>, transform_indices = @transform_9, window_bounds = array<i64: 32, 64>}, {pipeline_mode = #tpu.pipeline_mode<synchronous>, transform_indices = @transform_10, window_bounds = array<i64: 1, 64>}, {pipeline_mode = #tpu.pipeline_mode<synchronous>, transform_indices = @transform_11, window_bounds = array<i64: 64, 128>}, {pipeline_mode = #tpu.pipeline_mode<synchronous>, transform_indices = @transform_12, window_bounds = array<i64: 1, 128>}, {transform_indices = @transform_13, window_bounds = array<i64: 1, 1, 128>}]} {
    %c0 = arith.constant 0 : index
    %c0_0 = arith.constant 0 : index
    %c0_1 = arith.constant 0 : index
    %0 = vector.load %arg1[%c0, %c0_0, %c0_1] : memref<1x32x512xf32, #tpu.memory_space<vmem>>, vector<1x32x512xf32>
    %1 = vector.shape_cast %0 : vector<1x32x512xf32> to vector<32x512xf32>
    %c0_2 = arith.constant 0 : index
    %c0_3 = arith.constant 0 : index
    %c0_4 = arith.constant 0 : index
    %2 = vector.load %arg2[%c0_2, %c0_3, %c0_4] : memref<1x1x512xf32, #tpu.memory_space<vmem>>, vector<1x1x512xf32>
    %3 = vector.shape_cast %2 : vector<1x1x512xf32> to vector<1x512xf32>
    %4 = vector.broadcast %3 : vector<1x512xf32> to vector<32x512xf32>
    %5 = arith.mulf %1, %4 : vector<32x512xf32>
    %c0_5 = arith.constant 0 : index
    %c0_6 = arith.constant 0 : index
    %6 = vector.load %arg3[%c0_5, %c0_6] : memref<32x512xf32, #tpu.memory_space<vmem>>, vector<32x512xf32>
    %7 = arith.addf %5, %6 : vector<32x512xf32>
    %c0_i32 = arith.constant 0 : i32
    %c6_i32 = arith.constant 6 : i32
    %8 = arith.addi %c0_i32, %c6_i32 : i32
    %c1_i32 = arith.constant 1 : i32
    %9 = scf.for %arg15 = %c0_i32 to %8 step %c1_i32 iter_args(%arg16 = %7) -> (vector<32x512xf32>)  : i32 {
      %38 = arith.index_cast %arg15 : i32 to index
      %c0_27 = arith.constant 0 : index
      %c0_28 = arith.constant 0 : index
      %39 = vector.load %arg9[%38, %c0_27, %c0_28] : memref<6x320x1xf32, #tpu.memory_space<vmem>>, vector<1x320x1xf32>
      %40 = vector.shape_cast %39 : vector<1x320x1xf32> to vector<320x1xf32>
      %41 = vector.extract_strided_slice %40 {offsets = [0, 0], sizes = [128, 1], strides = [1, 1]} : vector<320x1xf32> to vector<128x1xf32>
      %42 = vector.extract_strided_slice %40 {offsets = [128, 0], sizes = [32, 1], strides = [1, 1]} : vector<320x1xf32> to vector<32x1xf32>
      %43 = vector.extract_strided_slice %40 {offsets = [160, 0], sizes = [32, 1], strides = [1, 1]} : vector<320x1xf32> to vector<32x1xf32>
      %44 = vector.extract_strided_slice %40 {offsets = [192, 0], sizes = [32, 1], strides = [1, 1]} : vector<320x1xf32> to vector<32x1xf32>
      %45 = vector.extract_strided_slice %40 {offsets = [224, 0], sizes = [32, 1], strides = [1, 1]} : vector<320x1xf32> to vector<32x1xf32>
      %46 = vector.extract_strided_slice %40 {offsets = [256, 0], sizes = [32, 1], strides = [1, 1]} : vector<320x1xf32> to vector<32x1xf32>
      %47 = vector.extract_strided_slice %40 {offsets = [288, 0], sizes = [32, 1], strides = [1, 1]} : vector<320x1xf32> to vector<32x1xf32>
      %48 = arith.truncf %arg16 : vector<32x512xf32> to vector<32x512xbf16>
      %cst_29 = arith.constant 0.000000e+00 : f32
      %49 = vector.broadcast %cst_29 : f32 to vector<32x512xf32>
      %c0_i32_30 = arith.constant 0 : i32
      %c8_i32 = arith.constant 8 : i32
      %50 = arith.addi %c0_i32_30, %c8_i32 : i32
      %c1_i32_31 = arith.constant 1 : i32
      %51 = scf.for %arg17 = %c0_i32_30 to %50 step %c1_i32_31 iter_args(%arg18 = %49) -> (vector<32x512xf32>)  : i32 {
        %c8_i32_53 = arith.constant 8 : i32
        %127 = arith.muli %arg15, %c8_i32_53 : i32
        %128 = arith.addi %127, %arg17 : i32
        %129 = arith.index_cast %128 : i32 to index
        %c0_54 = arith.constant 0 : index
        %c0_55 = arith.constant 0 : index
        %130 = vector.load %arg4[%129, %c0_54, %c0_55] : memref<48x24x32xbf16, #tpu.memory_space<vmem>>, vector<1x24x32xbf16>
        %131 = vector.shape_cast %130 : vector<1x24x32xbf16> to vector<24x32xbf16>
        %cst_56 = arith.constant dense<0.000000e+00> : vector<24x512xf32>
        %132 = tpu.matmul %131, %48, %cst_56 {dimension_numbers = #tpu.dot_dimension_numbers<[1], [0], [0], [1], [0, 0, 1, 1], [], []>} : vector<24x32xbf16>, vector<32x512xbf16>, vector<24x512xf32> -> vector<24x512xf32>
        %133 = arith.index_cast %128 : i32 to index
        %c0_57 = arith.constant 0 : index
        %c0_58 = arith.constant 0 : index
        %134 = vector.load %arg5[%133, %c0_57, %c0_58] : memref<48x24x1xf32, #tpu.memory_space<vmem>>, vector<1x24x1xf32>
        %135 = vector.shape_cast %134 : vector<1x24x1xf32> to vector<24x1xf32>
        %136 = vector.broadcast %135 : vector<24x1xf32> to vector<24x512xf32>
        %137 = arith.addf %132, %136 : vector<24x512xf32>
        %138 = vector.extract_strided_slice %137 {offsets = [0, 0], sizes = [8, 512], strides = [1, 1]} : vector<24x512xf32> to vector<8x512xf32>
        %139 = arith.truncf %138 : vector<8x512xf32> to vector<8x512xbf16>
        %140 = vector.extract_strided_slice %137 {offsets = [8, 0], sizes = [8, 512], strides = [1, 1]} : vector<24x512xf32> to vector<8x512xf32>
        %141 = arith.truncf %140 : vector<8x512xf32> to vector<8x512xbf16>
        %142 = vector.extract_strided_slice %137 {offsets = [16, 0], sizes = [8, 512], strides = [1, 1]} : vector<24x512xf32> to vector<8x512xf32>
        %143 = arith.truncf %142 : vector<8x512xf32> to vector<8x512xbf16>
        %cst_59 = arith.constant dense<0.000000e+00> : vector<512x512xf32>
        %144 = tpu.matmul %141, %139, %cst_59 {dimension_numbers = #tpu.dot_dimension_numbers<[0], [0], [1], [1], [0, 1, 1, 1], [], []>} : vector<8x512xbf16>, vector<8x512xbf16>, vector<512x512xf32> -> vector<512x512xf32>
        %cst_60 = arith.constant dense<0xFF800000> : vector<512xf32>
        %145 = vector.multi_reduction <maximumf>, %144, %cst_60 [0] : vector<512x512xf32> to vector<512xf32>
        %146 = vector.shape_cast %145 : vector<512xf32> to vector<1x512xf32>
        %147 = vector.broadcast %146 : vector<1x512xf32> to vector<512x512xf32>
        %148 = arith.subf %144, %147 : vector<512x512xf32>
        %149 = math.exp %148 : vector<512x512xf32>
        %cst_61 = arith.constant dense<0.000000e+00> : vector<512xf32>
        %150 = vector.multi_reduction <add>, %149, %cst_61 [0] : vector<512x512xf32> to vector<512xf32>
        %151 = vector.shape_cast %150 : vector<512xf32> to vector<1x512xf32>
        %152 = arith.truncf %149 : vector<512x512xf32> to vector<512x512xbf16>
        %cst_62 = arith.constant dense<0.000000e+00> : vector<8x512xf32>
        %153 = tpu.matmul %143, %152, %cst_62 {dimension_numbers = #tpu.dot_dimension_numbers<[1], [0], [0], [1], [0, 0, 1, 1], [], []>} : vector<8x512xbf16>, vector<512x512xbf16>, vector<8x512xf32> -> vector<8x512xf32>
        %154 = tpu.reciprocal %151 {approx = true} : vector<1x512xf32> -> vector<1x512xf32>
        %155 = vector.broadcast %154 : vector<1x512xf32> to vector<8x512xf32>
        %156 = arith.mulf %153, %155 : vector<8x512xf32>
        %157 = arith.index_cast %128 : i32 to index
        %c0_63 = arith.constant 0 : index
        %c0_64 = arith.constant 0 : index
        %158 = vector.load %arg6[%157, %c0_63, %c0_64] : memref<48x32x8xbf16, #tpu.memory_space<vmem>>, vector<1x32x8xbf16>
        %159 = vector.shape_cast %158 : vector<1x32x8xbf16> to vector<32x8xbf16>
        %160 = arith.truncf %156 : vector<8x512xf32> to vector<8x512xbf16>
        %cst_65 = arith.constant dense<0.000000e+00> : vector<32x512xf32>
        %161 = tpu.matmul %159, %160, %cst_65 {dimension_numbers = #tpu.dot_dimension_numbers<[1], [0], [0], [1], [0, 0, 1, 1], [], []>} : vector<32x8xbf16>, vector<8x512xbf16>, vector<32x512xf32> -> vector<32x512xf32>
        %162 = arith.addf %arg18, %161 : vector<32x512xf32>
        scf.yield %162 : vector<32x512xf32>
      }
      %c8_i32_32 = arith.constant 8 : i32
      %52 = arith.addf %arg16, %51 : vector<32x512xf32>
      %53 = vector.broadcast %42 : vector<32x1xf32> to vector<32x512xf32>
      %54 = arith.addf %52, %53 : vector<32x512xf32>
      %cst_33 = arith.constant dense<0.000000e+00> : vector<512xf32>
      %55 = vector.multi_reduction <add>, %54, %cst_33 [0] : vector<32x512xf32> to vector<512xf32>
      %56 = vector.shape_cast %55 : vector<512xf32> to vector<1x512xf32>
      %cst_34 = arith.constant 3.200000e+01 : f32
      %57 = vector.broadcast %cst_34 : f32 to vector<1x512xf32>
      %58 = arith.divf %56, %57 : vector<1x512xf32>
      %59 = vector.broadcast %58 : vector<1x512xf32> to vector<32x512xf32>
      %60 = arith.subf %54, %59 : vector<32x512xf32>
      %61 = arith.mulf %60, %60 : vector<32x512xf32>
      %cst_35 = arith.constant dense<0.000000e+00> : vector<512xf32>
      %62 = vector.multi_reduction <add>, %61, %cst_35 [0] : vector<32x512xf32> to vector<512xf32>
      %63 = vector.shape_cast %62 : vector<512xf32> to vector<1x512xf32>
      %cst_36 = arith.constant 3.200000e+01 : f32
      %64 = vector.broadcast %cst_36 : f32 to vector<1x512xf32>
      %65 = arith.divf %63, %64 : vector<1x512xf32>
      %66 = vector.broadcast %58 : vector<1x512xf32> to vector<32x512xf32>
      %67 = arith.subf %54, %66 : vector<32x512xf32>
      %cst_37 = arith.constant 9.99999974E-6 : f32
      %68 = vector.broadcast %cst_37 : f32 to vector<1x512xf32>
      %69 = arith.addf %65, %68 : vector<1x512xf32>
      %70 = math.rsqrt %69 : vector<1x512xf32>
      %71 = vector.broadcast %70 : vector<1x512xf32> to vector<32x512xf32>
      %72 = arith.mulf %67, %71 : vector<32x512xf32>
      %73 = vector.broadcast %43 : vector<32x1xf32> to vector<32x512xf32>
      %74 = arith.mulf %72, %73 : vector<32x512xf32>
      %75 = vector.broadcast %44 : vector<32x1xf32> to vector<32x512xf32>
      %76 = arith.addf %74, %75 : vector<32x512xf32>
      %77 = arith.truncf %76 : vector<32x512xf32> to vector<32x512xbf16>
      %78 = arith.index_cast %arg15 : i32 to index
      %c0_38 = arith.constant 0 : index
      %c0_39 = arith.constant 0 : index
      %79 = vector.load %arg7[%78, %c0_38, %c0_39] : memref<6x128x32xbf16, #tpu.memory_space<vmem>>, vector<1x128x32xbf16>
      %80 = vector.shape_cast %79 : vector<1x128x32xbf16> to vector<128x32xbf16>
      %cst_40 = arith.constant dense<0.000000e+00> : vector<128x512xf32>
      %81 = tpu.matmul %80, %77, %cst_40 {dimension_numbers = #tpu.dot_dimension_numbers<[1], [0], [0], [1], [0, 0, 1, 1], [], []>} : vector<128x32xbf16>, vector<32x512xbf16>, vector<128x512xf32> -> vector<128x512xf32>
      %82 = vector.broadcast %41 : vector<128x1xf32> to vector<128x512xf32>
      %83 = arith.addf %81, %82 : vector<128x512xf32>
      %cst_41 = arith.constant 5.000000e-01 : f32
      %84 = vector.broadcast %cst_41 : f32 to vector<128x512xf32>
      %85 = arith.mulf %84, %83 : vector<128x512xf32>
      %cst_42 = arith.constant 4.471500e-02 : f32
      %86 = vector.broadcast %cst_42 : f32 to vector<128x512xf32>
      %87 = arith.mulf %86, %83 : vector<128x512xf32>
      %88 = arith.mulf %87, %83 : vector<128x512xf32>
      %89 = arith.mulf %88, %83 : vector<128x512xf32>
      %90 = arith.addf %83, %89 : vector<128x512xf32>
      %cst_43 = arith.constant 0.797884583 : f32
      %91 = vector.broadcast %cst_43 : f32 to vector<128x512xf32>
      %92 = arith.mulf %91, %90 : vector<128x512xf32>
      %93 = math.tanh %92 : vector<128x512xf32>
      %cst_44 = arith.constant 1.000000e+00 : f32
      %94 = vector.broadcast %cst_44 : f32 to vector<128x512xf32>
      %95 = arith.addf %94, %93 : vector<128x512xf32>
      %96 = arith.mulf %85, %95 : vector<128x512xf32>
      %97 = arith.index_cast %arg15 : i32 to index
      %c0_45 = arith.constant 0 : index
      %c0_46 = arith.constant 0 : index
      %98 = vector.load %arg8[%97, %c0_45, %c0_46] : memref<6x32x128xbf16, #tpu.memory_space<vmem>>, vector<1x32x128xbf16>
      %99 = vector.shape_cast %98 : vector<1x32x128xbf16> to vector<32x128xbf16>
      %100 = arith.truncf %96 : vector<128x512xf32> to vector<128x512xbf16>
      %cst_47 = arith.constant dense<0.000000e+00> : vector<32x512xf32>
      %101 = tpu.matmul %99, %100, %cst_47 {dimension_numbers = #tpu.dot_dimension_numbers<[1], [0], [0], [1], [0, 0, 1, 1], [], []>} : vector<32x128xbf16>, vector<128x512xbf16>, vector<32x512xf32> -> vector<32x512xf32>
      %102 = vector.broadcast %47 : vector<32x1xf32> to vector<32x512xf32>
      %103 = arith.addf %101, %102 : vector<32x512xf32>
      %104 = arith.addf %76, %103 : vector<32x512xf32>
      %cst_48 = arith.constant dense<0.000000e+00> : vector<512xf32>
      %105 = vector.multi_reduction <add>, %104, %cst_48 [0] : vector<32x512xf32> to vector<512xf32>
      %106 = vector.shape_cast %105 : vector<512xf32> to vector<1x512xf32>
      %cst_49 = arith.constant 3.200000e+01 : f32
      %107 = vector.broadcast %cst_49 : f32 to vector<1x512xf32>
      %108 = arith.divf %106, %107 : vector<1x512xf32>
      %109 = vector.broadcast %108 : vector<1x512xf32> to vector<32x512xf32>
      %110 = arith.subf %104, %109 : vector<32x512xf32>
      %111 = arith.mulf %110, %110 : vector<32x512xf32>
      %cst_50 = arith.constant dense<0.000000e+00> : vector<512xf32>
      %112 = vector.multi_reduction <add>, %111, %cst_50 [0] : vector<32x512xf32> to vector<512xf32>
      %113 = vector.shape_cast %112 : vector<512xf32> to vector<1x512xf32>
      %cst_51 = arith.constant 3.200000e+01 : f32
      %114 = vector.broadcast %cst_51 : f32 to vector<1x512xf32>
      %115 = arith.divf %113, %114 : vector<1x512xf32>
      %116 = vector.broadcast %108 : vector<1x512xf32> to vector<32x512xf32>
      %117 = arith.subf %104, %116 : vector<32x512xf32>
      %cst_52 = arith.constant 9.99999974E-6 : f32
      %118 = vector.broadcast %cst_52 : f32 to vector<1x512xf32>
      %119 = arith.addf %115, %118 : vector<1x512xf32>
      %120 = math.rsqrt %119 : vector<1x512xf32>
      %121 = vector.broadcast %120 : vector<1x512xf32> to vector<32x512xf32>
      %122 = arith.mulf %117, %121 : vector<32x512xf32>
      %123 = vector.broadcast %45 : vector<32x1xf32> to vector<32x512xf32>
      %124 = arith.mulf %122, %123 : vector<32x512xf32>
      %125 = vector.broadcast %46 : vector<32x1xf32> to vector<32x512xf32>
      %126 = arith.addf %124, %125 : vector<32x512xf32>
      scf.yield %126 : vector<32x512xf32>
    }
    %c6_i32_7 = arith.constant 6 : i32
    %cst = arith.constant 1.000000e+00 : f32
    %10 = vector.broadcast %cst : f32 to vector<1x512xf32>
    %cst_8 = arith.constant dense<0.000000e+00> : vector<1x32xf32>
    %11 = tpu.matmul %10, %9, %cst_8 {dimension_numbers = #tpu.dot_dimension_numbers<[1], [1], [0], [0], [0, 0, 1, 0], [], []>} : vector<1x512xf32>, vector<32x512xf32>, vector<1x32xf32> -> vector<1x32xf32>
    %cst_9 = arith.constant 0.001953125 : f32
    %12 = vector.broadcast %cst_9 : f32 to vector<1x32xf32>
    %13 = arith.mulf %11, %12 : vector<1x32xf32>
    %c0_10 = arith.constant 0 : index
    %c0_11 = arith.constant 0 : index
    %14 = vector.load %arg10[%c0_10, %c0_11] : memref<32x64xf32, #tpu.memory_space<vmem>>, vector<32x64xf32>
    %cst_12 = arith.constant dense<0.000000e+00> : vector<1x64xf32>
    %15 = tpu.matmul %13, %14, %cst_12 {dimension_numbers = #tpu.dot_dimension_numbers<[1], [0], [0], [1], [0, 0, 1, 1], [], []>} : vector<1x32xf32>, vector<32x64xf32>, vector<1x64xf32> -> vector<1x64xf32>
    %c0_13 = arith.constant 0 : index
    %c0_14 = arith.constant 0 : index
    %16 = vector.load %arg11[%c0_13, %c0_14] : memref<1x64xf32, #tpu.memory_space<vmem>>, vector<1x64xf32>
    %17 = arith.addf %15, %16 : vector<1x64xf32>
    %cst_15 = arith.constant 5.000000e-01 : f32
    %18 = vector.broadcast %cst_15 : f32 to vector<1x64xf32>
    %19 = arith.mulf %18, %17 : vector<1x64xf32>
    %cst_16 = arith.constant 4.471500e-02 : f32
    %20 = vector.broadcast %cst_16 : f32 to vector<1x64xf32>
    %21 = arith.mulf %20, %17 : vector<1x64xf32>
    %22 = arith.mulf %21, %17 : vector<1x64xf32>
    %23 = arith.mulf %22, %17 : vector<1x64xf32>
    %24 = arith.addf %17, %23 : vector<1x64xf32>
    %cst_17 = arith.constant 0.797884583 : f32
    %25 = vector.broadcast %cst_17 : f32 to vector<1x64xf32>
    %26 = arith.mulf %25, %24 : vector<1x64xf32>
    %27 = math.tanh %26 : vector<1x64xf32>
    %cst_18 = arith.constant 1.000000e+00 : f32
    %28 = vector.broadcast %cst_18 : f32 to vector<1x64xf32>
    %29 = arith.addf %28, %27 : vector<1x64xf32>
    %30 = arith.mulf %19, %29 : vector<1x64xf32>
    %c0_19 = arith.constant 0 : index
    %c0_20 = arith.constant 0 : index
    %31 = vector.load %arg12[%c0_19, %c0_20] : memref<64x128xf32, #tpu.memory_space<vmem>>, vector<64x128xf32>
    %cst_21 = arith.constant dense<0.000000e+00> : vector<1x128xf32>
    %32 = tpu.matmul %30, %31, %cst_21 {dimension_numbers = #tpu.dot_dimension_numbers<[1], [0], [0], [1], [0, 0, 1, 1], [], []>} : vector<1x64xf32>, vector<64x128xf32>, vector<1x128xf32> -> vector<1x128xf32>
    %c0_22 = arith.constant 0 : index
    %c0_23 = arith.constant 0 : index
    %33 = vector.load %arg13[%c0_22, %c0_23] : memref<1x128xf32, #tpu.memory_space<vmem>>, vector<1x128xf32>
    %34 = arith.addf %32, %33 : vector<1x128xf32>
    %c0_24 = arith.constant 0 : index
    %c0_25 = arith.constant 0 : index
    %c0_26 = arith.constant 0 : index
    %35 = vector.load %arg14[%c0_24, %c0_25, %c0_26] : memref<1x1x128xf32, #tpu.memory_space<vmem>>, vector<1x1x128xf32>
    %36 = vector.shape_cast %35 : vector<1x1x128xf32> to vector<1x128xf32>
    %37 = vector.shape_cast %34 : vector<1x128xf32> to vector<1x1x128xf32>
    tpu.vector_store %arg14[%c0_24, %c0_25, %c0_26], %37 {strides = array<i32>} : memref<1x1x128xf32, #tpu.memory_space<vmem>>, vector<1x1x128xf32>,
    return
  }
  func.func @transform_0(%arg0: i32) -> (i32, i32, i32) {
    %c0_i32 = arith.constant 0 : i32
    %c0_i32_0 = arith.constant 0 : i32
    %c0_i32_1 = arith.constant 0 : i32
    return %arg0, %c0_i32, %c0_i32_0 : i32, i32, i32
  }
  func.func @transform_1(%arg0: i32) -> (i32, i32, i32) {
    %c0_i32 = arith.constant 0 : i32
    %c0_i32_0 = arith.constant 0 : i32
    %c0_i32_1 = arith.constant 0 : i32
    return %arg0, %c0_i32, %c0_i32_0 : i32, i32, i32
  }
  func.func @transform_2(%arg0: i32) -> (i32, i32) {
    %c0_i32 = arith.constant 0 : i32
    %c0_i32_0 = arith.constant 0 : i32
    %c0_i32_1 = arith.constant 0 : i32
    return %c0_i32, %c0_i32_0 : i32, i32
  }
  func.func @transform_3(%arg0: i32) -> (i32, i32, i32) {
    %c0_i32 = arith.constant 0 : i32
    %c0_i32_0 = arith.constant 0 : i32
    %c0_i32_1 = arith.constant 0 : i32
    %c0_i32_2 = arith.constant 0 : i32
    return %c0_i32, %c0_i32_0, %c0_i32_1 : i32, i32, i32
  }
  func.func @transform_4(%arg0: i32) -> (i32, i32, i32) {
    %c0_i32 = arith.constant 0 : i32
    %c0_i32_0 = arith.constant 0 : i32
    %c0_i32_1 = arith.constant 0 : i32
    %c0_i32_2 = arith.constant 0 : i32
    return %c0_i32, %c0_i32_0, %c0_i32_1 : i32, i32, i32
  }
  func.func @transform_5(%arg0: i32) -> (i32, i32, i32) {
    %c0_i32 = arith.constant 0 : i32
    %c0_i32_0 = arith.constant 0 : i32
    %c0_i32_1 = arith.constant 0 : i32
    %c0_i32_2 = arith.constant 0 : i32
    return %c0_i32, %c0_i32_0, %c0_i32_1 : i32, i32, i32
  }
  func.func @transform_6(%arg0: i32) -> (i32, i32, i32) {
    %c0_i32 = arith.constant 0 : i32
    %c0_i32_0 = arith.constant 0 : i32
    %c0_i32_1 = arith.constant 0 : i32
    %c0_i32_2 = arith.constant 0 : i32
    return %c0_i32, %c0_i32_0, %c0_i32_1 : i32, i32, i32
  }
  func.func @transform_7(%arg0: i32) -> (i32, i32, i32) {
    %c0_i32 = arith.constant 0 : i32
    %c0_i32_0 = arith.constant 0 : i32
    %c0_i32_1 = arith.constant 0 : i32
    %c0_i32_2 = arith.constant 0 : i32
    return %c0_i32, %c0_i32_0, %c0_i32_1 : i32, i32, i32
  }
  func.func @transform_8(%arg0: i32) -> (i32, i32, i32) {
    %c0_i32 = arith.constant 0 : i32
    %c0_i32_0 = arith.constant 0 : i32
    %c0_i32_1 = arith.constant 0 : i32
    %c0_i32_2 = arith.constant 0 : i32
    return %c0_i32, %c0_i32_0, %c0_i32_1 : i32, i32, i32
  }
  func.func @transform_9(%arg0: i32) -> (i32, i32) {
    %c0_i32 = arith.constant 0 : i32
    %c0_i32_0 = arith.constant 0 : i32
    %c0_i32_1 = arith.constant 0 : i32
    return %c0_i32, %c0_i32_0 : i32, i32
  }
  func.func @transform_10(%arg0: i32) -> (i32, i32) {
    %c0_i32 = arith.constant 0 : i32
    %c0_i32_0 = arith.constant 0 : i32
    %c0_i32_1 = arith.constant 0 : i32
    return %c0_i32, %c0_i32_0 : i32, i32
  }
  func.func @transform_11(%arg0: i32) -> (i32, i32) {
    %c0_i32 = arith.constant 0 : i32
    %c0_i32_0 = arith.constant 0 : i32
    %c0_i32_1 = arith.constant 0 : i32
    return %c0_i32, %c0_i32_0 : i32, i32
  }
  func.func @transform_12(%arg0: i32) -> (i32, i32) {
    %c0_i32 = arith.constant 0 : i32
    %c0_i32_0 = arith.constant 0 : i32
    %c0_i32_1 = arith.constant 0 : i32
    return %c0_i32, %c0_i32_0 : i32, i32
  }
  func.func @transform_13(%arg0: i32) -> (i32, i32, i32) {
    %c0_i32 = arith.constant 0 : i32
    %c0_i32_0 = arith.constant 0 : i32
    %c0_i32_1 = arith.constant 0 : i32
    return %arg0, %c0_i32, %c0_i32_0 : i32, i32, i32
  }
}

</mosaic_0001>

<llo_original>
// kernel: classifier_forward.1
$region0: #{classifier_forward.1}
  #allocation0 [shape = 'u32[]', space=smem, size = 0x4, offset = 0x4, fixed_abs, tag = 'smem constant byte address 0x4 - core index']
  #allocation1 [shape = 'u32[144,128]{1,0:T(1,128)}', space=vmem, size = 0x12000, scoped, tag = 'internal scratch']
  %s0 = inlined_call_operand.vmem [shape: f32[2,32,512], index: 0, kind: input, shape index: {}]
  %s1 = inlined_call_operand.vmem [shape: f32[2,1,512], index: 1, kind: input, shape index: {}]
  %s2 = inlined_call_operand.vmem [shape: f32[32,512], index: 2, kind: input, shape index: {}]
  %s3 = inlined_call_operand.vmem [shape: bf16[48,24,32], index: 3, kind: input, shape index: {}]
  %s4 = inlined_call_operand.vmem [shape: f32[48,24,1], index: 4, kind: input, shape index: {}]
  %s5 = inlined_call_operand.vmem [shape: bf16[48,32,8], index: 5, kind: input, shape index: {}]
  %s6 = inlined_call_operand.vmem [shape: bf16[6,128,32], index: 6, kind: input, shape index: {}]
  %s7 = inlined_call_operand.vmem [shape: bf16[6,32,128], index: 7, kind: input, shape index: {}]
  %s8 = inlined_call_operand.vmem [shape: f32[6,320,1], index: 8, kind: input, shape index: {}]
  %s9 = inlined_call_operand.vmem [shape: f32[32,64], index: 9, kind: input, shape index: {}]
  %s10 = inlined_call_operand.vmem [shape: f32[1,64], index: 10, kind: input, shape index: {}]
  %s11 = inlined_call_operand.vmem [shape: f32[64,128], index: 11, kind: input, shape index: {}]
  %s12 = inlined_call_operand.vmem [shape: f32[1,128], index: 12, kind: input, shape index: {}]
  %s13 = inlined_call_operand.hbm [shape: f32[2,1,128], index: 13, kind: output, shape index: {}]
  %s14 = sld [smem:[#allocation0]]
  $region99: #{classifier_forward.1} parent=0
    _
  %s16 = ssub.s32 1, %s14
  %s17 = scalar_select 0, %s16, %s14
  $region1: #{classifier_forward.1} parent=0
    #allocation2 [shape = 'u8[1024]{0}', space=vmem, size = 0x400, scoped, tag = 'output window, operand 0']
    #allocation3 [shape = 's32[2]{0}', space=sflag, size = 0x8, scoped, tag = 'scoped memory for classifier_forward.1']
    %18 = vsyncpa [#allocation3], 0
    %s19 = scalar_lea.sflag [#allocation3], 1
    %20 = vsyncpa %s19, 0
    loop: start=0, step=1, limit=4
    $region2: #{classifier_forward.1} parent=1 // loop_pre_header
      _
    $region3: #{classifier_forward.1} parent=1 // loop_header
      %s22 = sphi 0, %s26
      %p23 = scmp.ge.s32.totalorder %s22, 4
      %s32 = sphi 0, %s34
      %s35 = sphi 0, %s32
      %s36 = sphi 0, %s35
      %s52 = sphi 0, %s36
      %s58 = sphi 0, %s60
      %s61 = sphi 0, %s58
      %s62 = sphi 0, %s61
      %s78 = sphi 0, %s62
      %s82 = sphi 0, %s82
      %s84 = sphi 0, %s82
      %s85 = sphi 0, %s84
      %s99 = sphi 0, %s85
      %s103 = sphi 0, %s103
      %s105 = sphi 0, %s103
      %s106 = sphi 0, %s105
      %s120 = sphi 0, %s106
      %s124 = sphi 0, %s124
      %s126 = sphi 0, %s124
      %s127 = sphi 0, %s126
      %s141 = sphi 0, %s127
      %s145 = sphi 0, %s145
      %s147 = sphi 0, %s145
      %s148 = sphi 0, %s147
      %s162 = sphi 0, %s148
      %s166 = sphi 0, %s166
      %s168 = sphi 0, %s166
      %s169 = sphi 0, %s168
      %s183 = sphi 0, %s169
      %s187 = sphi 0, %s187
      %s189 = sphi 0, %s187
      %s190 = sphi 0, %s189
      %s204 = sphi 0, %s190
      %s208 = sphi 0, %s208
      %s210 = sphi 0, %s208
      %s211 = sphi 0, %s210
      %s225 = sphi 0, %s211
      %s229 = sphi 0, %s229
      %s231 = sphi 0, %s229
      %s232 = sphi 0, %s231
      %s246 = sphi 0, %s232
      %s250 = sphi 0, %s250
      %s252 = sphi 0, %s250
      %s253 = sphi 0, %s252
      %s267 = sphi 0, %s253
      %s271 = sphi 0, %s271
      %s273 = sphi 0, %s271
      %s274 = sphi 0, %s273
      %s288 = sphi 0, %s274
      %s292 = sphi 0, %s292
      %s294 = sphi 0, %s292
      %s295 = sphi 0, %s294
      %s309 = sphi 0, %s295
      %s315 = sphi 0, %s317
      %s318 = sphi 0, %s315
      %s319 = sphi 0, %s318
      %s335 = sphi 0, %s319
    $region4: #{classifier_forward.1} parent=1 // loop_header_branch
      %25 = sbr.rel (%p23) target = $region8
    $region5: #{classifier_forward.1} parent=1 // loop_body
      %s27 = ssub.s32 %s22, 1
      %s28 = ssub.s32 %s22, 2
      %s29 = sadd.s32 %s22, 1
      %s30 = ssub.s32 %s22, %s29
      %p31 = scmp.eq.s32.totalorder %s30, 0
      %s33 = sadd.s32 %s32, 1
      %s34 = scalar_select %p31, %s32, %s33
      %p37 = pneg %p31
      %p38 = scmp.eq.s32.totalorder %s22, 1
      %p39 = por %p37, %p38
      %p40 = scmp.ne.s32.totalorder %s32, %s35
      %p41 = scmp.eq.s32.totalorder %s22, 0
      %p42 = por %p40, %p41
      %p43 = scmp.ne.s32.totalorder %s32, %s35
      %p44 = scmp.eq.s32.totalorder %s27, 1
      %p45 = por %p43, %p44
      %p46 = scmp.ne.s32.totalorder %s35, %s36
      %p47 = scmp.eq.s32.totalorder %s27, 0
      %p48 = por %p46, %p47
      %p49 = scmp.ne.s32.totalorder %s35, %s36
      %p50 = scmp.eq.s32.totalorder %s28, 1
      %p51 = por %p49, %p50
      %p53 = scmp.ne.s32.totalorder %s36, %s52
      %p54 = scmp.eq.s32.totalorder %s28, 0
      %p55 = por %p53, %p54
      %s56 = ssub.s32 %s22, %s29
      %p57 = scmp.eq.s32.totalorder %s56, 0
      %s59 = sadd.s32 %s58, 1
      %s60 = scalar_select %p57, %s58, %s59
      %p63 = pneg %p57
      %p64 = scmp.eq.s32.totalorder %s22, 1
      %p65 = por %p63, %p64
      %p66 = scmp.ne.s32.totalorder %s58, %s61
      %p67 = scmp.eq.s32.totalorder %s22, 0
      %p68 = por %p66, %p67
      %p69 = scmp.ne.s32.totalorder %s58, %s61
      %p70 = scmp.eq.s32.totalorder %s27, 1
      %p71 = por %p69, %p70
      %p72 = scmp.ne.s32.totalorder %s61, %s62
      %p73 = scmp.eq.s32.totalorder %s27, 0
      %p74 = por %p72, %p73
      %p75 = scmp.ne.s32.totalorder %s61, %s62
      %p76 = scmp.eq.s32.totalorder %s28, 1
      %p77 = por %p75, %p76
      %p79 = scmp.ne.s32.totalorder %s62, %s78
      %p80 = scmp.eq.s32.totalorder %s28, 0
      %p81 = por %p79, %p80
      %s83 = sadd.s32 %s82, 1
      %p86 = scmp.eq.s32.totalorder %s22, 1
      %p87 = scmp.ne.s32.totalorder %s82, %s84
      %p88 = scmp.eq.s32.totalorder %s22, 0
      %p89 = por %p87, %p88
      %p90 = scmp.ne.s32.totalorder %s82, %s84
      %p91 = scmp.eq.s32.totalorder %s27, 1
      %p92 = por %p90, %p91
      %p93 = scmp.ne.s32.totalorder %s84, %s85
      %p94 = scmp.eq.s32.totalorder %s27, 0
      %p95 = por %p93, %p94
      %p96 = scmp.ne.s32.totalorder %s84, %s85
      %p97 = scmp.eq.s32.totalorder %s28, 1
      %p98 = por %p96, %p97
      %p100 = scmp.ne.s32.totalorder %s85, %s99
      %p101 = scmp.eq.s32.totalorder %s28, 0
      %p102 = por %p100, %p101
      %s104 = sadd.s32 %s103, 1
      %p107 = scmp.eq.s32.totalorder %s22, 1
      %p108 = scmp.ne.s32.totalorder %s103, %s105
      %p109 = scmp.eq.s32.totalorder %s22, 0
      %p110 = por %p108, %p109
      %p111 = scmp.ne.s32.totalorder %s103, %s105
      %p112 = scmp.eq.s32.totalorder %s27, 1
      %p113 = por %p111, %p112
      %p114 = scmp.ne.s32.totalorder %s105, %s106
      %p115 = scmp.eq.s32.totalorder %s27, 0
      %p116 = por %p114, %p115
      %p117 = scmp.ne.s32.totalorder %s105, %s106
      %p118 = scmp.eq.s32.totalorder %s28, 1
      %p119 = por %p117, %p118
      %p121 = scmp.ne.s32.totalorder %s106, %s120
      %p122 = scmp.eq.s32.totalorder %s28, 0
      %p123 = por %p121, %p122
      %s125 = sadd.s32 %s124, 1
      %p128 = scmp.eq.s32.totalorder %s22, 1
      %p129 = scmp.ne.s32.totalorder %s124, %s126
      %p130 = scmp.eq.s32.totalorder %s22, 0
      %p131 = por %p129, %p130
      %p132 = scmp.ne.s32.totalorder %s124, %s126
      %p133 = scmp.eq.s32.totalorder %s27, 1
      %p134 = por %p132, %p133
      %p135 = scmp.ne.s32.totalorder %s126, %s127
      %p136 = scmp.eq.s32.totalorder %s27, 0
      %p137 = por %p135, %p136
      %p138 = scmp.ne.s32.totalorder %s126, %s127
      %p139 = scmp.eq.s32.totalorder %s28, 1
      %p140 = por %p138, %p139
      %p142 = scmp.ne.s32.totalorder %s127, %s141
      %p143 = scmp.eq.s32.totalorder %s28, 0
      %p144 = por %p142, %p143
      %s146 = sadd.s32 %s145, 1
      %p149 = scmp.eq.s32.totalorder %s22, 1
      %p150 = scmp.ne.s32.totalorder %s145, %s147
      %p151 = scmp.eq.s32.totalorder %s22, 0
      %p152 = por %p150, %p151
      %p153 = scmp.ne.s32.totalorder %s145, %s147
      %p154 = scmp.eq.s32.totalorder %s27, 1
      %p155 = por %p153, %p154
      %p156 = scmp.ne.s32.totalorder %s147, %s148
      %p157 = scmp.eq.s32.totalorder %s27, 0
      %p158 = por %p156, %p157
      %p159 = scmp.ne.s32.totalorder %s147, %s148
      %p160 = scmp.eq.s32.totalorder %s28, 1
      %p161 = por %p159, %p160
      %p163 = scmp.ne.s32.totalorder %s148, %s162
      %p164 = scmp.eq.s32.totalorder %s28, 0
      %p165 = por %p163, %p164
      %s167 = sadd.s32 %s166, 1
      %p170 = scmp.eq.s32.totalorder %s22, 1
      %p171 = scmp.ne.s32.totalorder %s166, %s168
      %p172 = scmp.eq.s32.totalorder %s22, 0
      %p173 = por %p171, %p172
      %p174 = scmp.ne.s32.totalorder %s166, %s168
      %p175 = scmp.eq.s32.totalorder %s27, 1
      %p176 = por %p174, %p175
      %p177 = scmp.ne.s32.totalorder %s168, %s169
      %p178 = scmp.eq.s32.totalorder %s27, 0
      %p179 = por %p177, %p178
      %p180 = scmp.ne.s32.totalorder %s168, %s169
      %p181 = scmp.eq.s32.totalorder %s28, 1
      %p182 = por %p180, %p181
      %p184 = scmp.ne.s32.totalorder %s169, %s183
      %p185 = scmp.eq.s32.totalorder %s28, 0
      %p186 = por %p184, %p185
      %s188 = sadd.s32 %s187, 1
      %p191 = scmp.eq.s32.totalorder %s22, 1
      %p192 = scmp.ne.s32.totalorder %s187, %s189
      %p193 = scmp.eq.s32.totalorder %s22, 0
      %p194 = por %p192, %p193
      %p195 = scmp.ne.s32.totalorder %s187, %s189
      %p196 = scmp.eq.s32.totalorder %s27, 1
      %p197 = por %p195, %p196
      %p198 = scmp.ne.s32.totalorder %s189, %s190
      %p199 = scmp.eq.s32.totalorder %s27, 0
      %p200 = por %p198, %p199
      %p201 = scmp.ne.s32.totalorder %s189, %s190
      %p202 = scmp.eq.s32.totalorder %s28, 1
      %p203 = por %p201, %p202
      %p205 = scmp.ne.s32.totalorder %s190, %s204
      %p206 = scmp.eq.s32.totalorder %s28, 0
      %p207 = por %p205, %p206
      %s209 = sadd.s32 %s208, 1
      %p212 = scmp.eq.s32.totalorder %s22, 1
      %p213 = scmp.ne.s32.totalorder %s208, %s210
      %p214 = scmp.eq.s32.totalorder %s22, 0
      %p215 = por %p213, %p214
      %p216 = scmp.ne.s32.totalorder %s208, %s210
      %p217 = scmp.eq.s32.totalorder %s27, 1
      %p218 = por %p216, %p217
      %p219 = scmp.ne.s32.totalorder %s210, %s211
      %p220 = scmp.eq.s32.totalorder %s27, 0
      %p221 = por %p219, %p220
      %p222 = scmp.ne.s32.totalorder %s210, %s211
      %p223 = scmp.eq.s32.totalorder %s28, 1
      %p224 = por %p222, %p223
      %p226 = scmp.ne.s32.totalorder %s211, %s225
      %p227 = scmp.eq.s32.totalorder %s28, 0
      %p228 = por %p226, %p227
      %s230 = sadd.s32 %s229, 1
      %p233 = scmp.eq.s32.totalorder %s22, 1
      %p234 = scmp.ne.s32.totalorder %s229, %s231
      %p235 = scmp.eq.s32.totalorder %s22, 0
      %p236 = por %p234, %p235
      %p237 = scmp.ne.s32.totalorder %s229, %s231
      %p238 = scmp.eq.s32.totalorder %s27, 1
      %p239 = por %p237, %p238
      %p240 = scmp.ne.s32.totalorder %s231, %s232
      %p241 = scmp.eq.s32.totalorder %s27, 0
      %p242 = por %p240, %p241
      %p243 = scmp.ne.s32.totalorder %s231, %s232
      %p244 = scmp.eq.s32.totalorder %s28, 1
      %p245 = por %p243, %p244
      %p247 = scmp.ne.s32.totalorder %s232, %s246
      %p248 = scmp.eq.s32.totalorder %s28, 0
      %p249 = por %p247, %p248
      %s251 = sadd.s32 %s250, 1
      %p254 = scmp.eq.s32.totalorder %s22, 1
      %p255 = scmp.ne.s32.totalorder %s250, %s252
      %p256 = scmp.eq.s32.totalorder %s22, 0
      %p257 = por %p255, %p256
      %p258 = scmp.ne.s32.totalorder %s250, %s252
      %p259 = scmp.eq.s32.totalorder %s27, 1
      %p260 = por %p258, %p259
      %p261 = scmp.ne.s32.totalorder %s252, %s253
      %p262 = scmp.eq.s32.totalorder %s27, 0
      %p263 = por %p261, %p262
      %p264 = scmp.ne.s32.totalorder %s252, %s253
      %p265 = scmp.eq.s32.totalorder %s28, 1
      %p266 = por %p264, %p265
      %p268 = scmp.ne.s32.totalorder %s253, %s267
      %p269 = scmp.eq.s32.totalorder %s28, 0
      %p270 = por %p268, %p269
      %s272 = sadd.s32 %s271, 1
      %p275 = scmp.eq.s32.totalorder %s22, 1
      %p276 = scmp.ne.s32.totalorder %s271, %s273
      %p277 = scmp.eq.s32.totalorder %s22, 0
      %p278 = por %p276, %p277
      %p279 = scmp.ne.s32.totalorder %s271, %s273
      %p280 = scmp.eq.s32.totalorder %s27, 1
      %p281 = por %p279, %p280
      %p282 = scmp.ne.s32.totalorder %s273, %s274
      %p283 = scmp.eq.s32.totalorder %s27, 0
      %p284 = por %p282, %p283
      %p285 = scmp.ne.s32.totalorder %s273, %s274
      %p286 = scmp.eq.s32.totalorder %s28, 1
      %p287 = por %p285, %p286
      %p289 = scmp.ne.s32.totalorder %s274, %s288
      %p290 = scmp.eq.s32.totalorder %s28, 0
      %p291 = por %p289, %p290
      %s293 = sadd.s32 %s292, 1
      %p296 = scmp.eq.s32.totalorder %s22, 1
      %p297 = scmp.ne.s32.totalorder %s292, %s294
      %p298 = scmp.eq.s32.totalorder %s22, 0
      %p299 = por %p297, %p298
      %p300 = scmp.ne.s32.totalorder %s292, %s294
      %p301 = scmp.eq.s32.totalorder %s27, 1
      %p302 = por %p300, %p301
      %p303 = scmp.ne.s32.totalorder %s294, %s295
      %p304 = scmp.eq.s32.totalorder %s27, 0
      %p305 = por %p303, %p304
      %p306 = scmp.ne.s32.totalorder %s294, %s295
      %p307 = scmp.eq.s32.totalorder %s28, 1
      %p308 = por %p306, %p307
      %p310 = scmp.ne.s32.totalorder %s295, %s309
      %p311 = scmp.eq.s32.totalorder %s28, 0
      %p312 = por %p310, %p311
      %s313 = ssub.s32 %s22, %s29
      %p314 = scmp.eq.s32.totalorder %s313, 0
      %s316 = sadd.s32 %s315, 1
      %s317 = scalar_select %p314, %s315, %s316
      %p320 = pneg %p314
      %p321 = scmp.eq.s32.totalorder %s22, 1
      %p322 = por %p320, %p321
      %p323 = scmp.ne.s32.totalorder %s315, %s318
      %p324 = scmp.eq.s32.totalorder %s22, 0
      %p325 = por %p323, %p324
      %p326 = scmp.ne.s32.totalorder %s315, %s318
      %p327 = scmp.eq.s32.totalorder %s27, 1
      %p328 = por %p326, %p327
      %p329 = scmp.ne.s32.totalorder %s318, %s319
      %p330 = scmp.eq.s32.totalorder %s27, 0
      %p331 = por %p329, %p330
      %p332 = scmp.ne.s32.totalorder %s318, %s319
      %p333 = scmp.eq.s32.totalorder %s28, 1
      %p334 = por %p332, %p333
      %p336 = scmp.ne.s32.totalorder %s319, %s335
      %p337 = scmp.eq.s32.totalorder %s28, 0
      %p338 = por %p336, %p337
      %p339 = scmp.le.s32.totalorder 1, %s22
      %p340 = scmp.lt.s32.totalorder %s22, 3
      %p341 = pnand %p339, %p340
      %p342 = pneg %p341
      // Predicated region
      $region9: #{classifier_forward.1} parent=5 // pred_check
        _
      $region10: #{classifier_forward.1} parent=5 // pred_check_branch
        %344 = sbr.rel (%p341) target = $region12
      $region11: #{classifier_forward.1} parent=5 // pred_region
        %s345 = ssub.s32 %s22, 1
        // Predicated region
        $region13: #{classifier_forward.1} parent=11 // pred_check
          %p346 = pneg %p95
        $region14: #{classifier_forward.1} parent=11 // pred_check_branch
          %348 = sbr.rel (%p346) target = $region16
        $region15: #{classifier_forward.1} parent=11 // pred_region
          _
        $region16: #{classifier_forward.1} parent=11 // pred_fallthru
          _
        // Predicated region
        $region17: #{classifier_forward.1} parent=11 // pred_check
          %p349 = pneg %p116
        $region18: #{classifier_forward.1} parent=11 // pred_check_branch
          %351 = sbr.rel (%p349) target = $region20
        $region19: #{classifier_forward.1} parent=11 // pred_region
          _
        $region20: #{classifier_forward.1} parent=11 // pred_fallthru
          _
        // Predicated region
        $region21: #{classifier_forward.1} parent=11 // pred_check
          %p352 = pneg %p137
        $region22: #{classifier_forward.1} parent=11 // pred_check_branch
          %354 = sbr.rel (%p352) target = $region24
        $region23: #{classifier_forward.1} parent=11 // pred_region
          _
        $region24: #{classifier_forward.1} parent=11 // pred_fallthru
          _
        // Predicated region
        $region25: #{classifier_forward.1} parent=11 // pred_check
          %p355 = pneg %p158
        $region26: #{classifier_forward.1} parent=11 // pred_check_branch
          %357 = sbr.rel (%p355) target = $region28
        $region27: #{classifier_forward.1} parent=11 // pred_region
          _
        $region28: #{classifier_forward.1} parent=11 // pred_fallthru
          _
        // Predicated region
        $region29: #{classifier_forward.1} parent=11 // pred_check
          %p358 = pneg %p179
        $region30: #{classifier_forward.1} parent=11 // pred_check_branch
          %360 = sbr.rel (%p358) target = $region32
        $region31: #{classifier_forward.1} parent=11 // pred_region
          _
        $region32: #{classifier_forward.1} parent=11 // pred_fallthru
          _
        // Predicated region
        $region33: #{classifier_forward.1} parent=11 // pred_check
          %p361 = pneg %p200
        $region34: #{classifier_forward.1} parent=11 // pred_check_branch
          %363 = sbr.rel (%p361) target = $region36
        $region35: #{classifier_forward.1} parent=11 // pred_region
          _
        $region36: #{classifier_forward.1} parent=11 // pred_fallthru
          _
        // Predicated region
        $region37: #{classifier_forward.1} parent=11 // pred_check
          %p364 = pneg %p221
        $region38: #{classifier_forward.1} parent=11 // pred_check_branch
          %366 = sbr.rel (%p364) target = $region40
        $region39: #{classifier_forward.1} parent=11 // pred_region
          _
        $region40: #{classifier_forward.1} parent=11 // pred_fallthru
          _
        // Predicated region
        $region41: #{classifier_forward.1} parent=11 // pred_check
          %p367 = pneg %p242
        $region42: #{classifier_forward.1} parent=11 // pred_check_branch
          %369 = sbr.rel (%p367) target = $region44
        $region43: #{classifier_forward.1} parent=11 // pred_region
          _
        $region44: #{classifier_forward.1} parent=11 // pred_fallthru
          _
        // Predicated region
        $region45: #{classifier_forward.1} parent=11 // pred_check
          %p370 = pneg %p263
        $region46: #{classifier_forward.1} parent=11 // pred_check_branch
          %372 = sbr.rel (%p370) target = $region48
        $region47: #{classifier_forward.1} parent=11 // pred_region
          _
        $region48: #{classifier_forward.1} parent=11 // pred_fallthru
          _
        // Predicated region
        $region49: #{classifier_forward.1} parent=11 // pred_check
          %p373 = pneg %p284
        $region50: #{classifier_forward.1} parent=11 // pred_check_branch
          %375 = sbr.rel (%p373) target = $region52
        $region51: #{classifier_forward.1} parent=11 // pred_region
          _
        $region52: #{classifier_forward.1} parent=11 // pred_fallthru
          _
        // Predicated region
        $region53: #{classifier_forward.1} parent=11 // pred_check
          %p376 = pneg %p305
        $region54: #{classifier_forward.1} parent=11 // pred_check_branch
          %378 = sbr.rel (%p376) target = $region56
        $region55: #{classifier_forward.1} parent=11 // pred_region
          _
        $region56: #{classifier_forward.1} parent=11 // pred_fallthru
          _
      $region12: #{classifier_forward.1} parent=5 // pred_fallthru
        _
      %p379 = scmp.lt.s32.totalorder %s22, 2
      // Predicated region
      $region57: #{classifier_forward.1} parent=5 // pred_check
        %p380 = pneg %p379
      $region58: #{classifier_forward.1} parent=5 // pred_check_branch
        %382 = sbr.rel (%p380) target = $region60
      $region59: #{classifier_forward.1} parent=5 // pred_region
        // Predicated region
        $region61: #{classifier_forward.1} parent=59 // pred_check
          %p383 = pneg %p42
        $region62: #{classifier_forward.1} parent=59 // pred_check_branch
          %385 = sbr.rel (%p383) target = $region64
        $region63: #{classifier_forward.1} parent=59 // pred_region
          %p386 = scmp.lt.s32.totalorder %s22, 1
          %s387 = scalar_select %p386, %s22, 1
          %s388 = smul.addr %s387, 16
          %s389 = smul.addr %s388, 8
          %s390 = scalar_lea.vmem %s0, %s389
        $region64: #{classifier_forward.1} parent=59 // pred_fallthru
          _
        // Predicated region
        $region65: #{classifier_forward.1} parent=59 // pred_check
          %p391 = pneg %p68
        $region66: #{classifier_forward.1} parent=59 // pred_check_branch
          %393 = sbr.rel (%p391) target = $region68
        $region67: #{classifier_forward.1} parent=59 // pred_region
          %p394 = scmp.lt.s32.totalorder %s22, 1
          %s395 = scalar_select %p394, %s22, 1
          %s396 = smul.addr %s395, 4
          %s397 = scalar_lea.vmem %s1, %s396
        $region68: #{classifier_forward.1} parent=59 // pred_fallthru
          _
      $region60: #{classifier_forward.1} parent=5 // pred_fallthru
        _
      %p398 = scmp.le.s32.totalorder 1, %s22
      %p399 = scmp.lt.s32.totalorder %s22, 3
      %p400 = pnand %p398, %p399
      %p401 = pneg %p400
      // Predicated region
      $region69: #{classifier_forward.1} parent=5 // pred_check
        _
      $region70: #{classifier_forward.1} parent=5 // pred_check_branch
        %403 = sbr.rel (%p400) target = $region72
      $region71: #{classifier_forward.1} parent=5 // pred_region
        %s404 = ssub.s32 %s22, 1
        %p405 = scmp.lt.s32.totalorder %s27, 1
        %s406 = scalar_select %p405, %s27, 1
        %s407 = smul.addr %s406, 16
        %s408 = smul.addr %s407, 8
        %s409 = scalar_lea.vmem %s0, %s408
        %p410 = pneg %p48
        %p411 = pneg %p45
        %p412 = scmp.lt.s32.totalorder %s27, 1
        %s413 = scalar_select %p412, %s27, 1
        %s414 = smul.addr %s413, 4
        %s415 = scalar_lea.vmem %s1, %s414
        %p416 = pneg %p74
        %p417 = pneg %p71
        %p418 = pneg %p95
        %p419 = pneg %p92
        %p420 = pneg %p116
        %p421 = pneg %p113
        %p422 = pneg %p137
        %p423 = pneg %p134
        %p424 = pneg %p158
        %p425 = pneg %p155
        %p426 = pneg %p179
        %p427 = pneg %p176
        %p428 = pneg %p200
        %p429 = pneg %p197
        %p430 = pneg %p221
        %p431 = pneg %p218
        %p432 = pneg %p242
        %p433 = pneg %p239
        %p434 = pneg %p263
        %p435 = pneg %p260
        %p436 = pneg %p284
        %p437 = pneg %p281
        %p438 = pneg %p305
        %p439 = pneg %p302
        %p440 = pneg %p331
        %p441 = pneg %p328
        %s442 = sand.u32 %s318, 1
        %s443 = scalar_lea.sflag [#allocation3], %s442
        %s444 = sand.u32 %s318, 1
        %s445 = scalar_lea.vmem [#allocation2], %s444
        %p446 = scmp.lt.s32.totalorder %s27, 1
        %s447 = scalar_select %p446, %s27, 1
        %s448 = smul.addr %s447, 16
        %s449 = smul.addr %s448, 8
        %s450 = scalar_lea.vmem %s0, %s449
        %p451 = scmp.lt.s32.totalorder %s27, 1
        %s452 = scalar_select %p451, %s27, 1
        %s453 = smul.addr %s452, 4
        %s454 = scalar_lea.vmem %s1, %s453
        %v456 = vld [vmem:[%s450] sm:$0xff]
        %v457 = vld [vmem:[%s450 + $0x8] sm:$0xff]
        %v458 = vld [vmem:[%s450 + $0x10] sm:$0xff]
        %v459 = vld [vmem:[%s450 + $0x18] sm:$0xff]
        %v460 = vld [vmem:[%s450 + $0x20] sm:$0xff]
        %v461 = vld [vmem:[%s450 + $0x28] sm:$0xff]
        %v462 = vld [vmem:[%s450 + $0x30] sm:$0xff]
        %v463 = vld [vmem:[%s450 + $0x38] sm:$0xff]
        %v464 = vld [vmem:[%s450 + $0x40] sm:$0xff]
        %v465 = vld [vmem:[%s450 + $0x48] sm:$0xff]
        %v466 = vld [vmem:[%s450 + $0x50] sm:$0xff]
        %v467 = vld [vmem:[%s450 + $0x58] sm:$0xff]
        %v468 = vld [vmem:[%s450 + $0x60] sm:$0xff]
        %v469 = vld [vmem:[%s450 + $0x68] sm:$0xff]
        %v470 = vld [vmem:[%s450 + $0x70] sm:$0xff]
        %v471 = vld [vmem:[%s450 + $0x78] sm:$0xff]
        %v472 = vld [vmem:[%s454] sm:$0xf]
        %v474 = vlaneseq
        %v475 = vshrl.u32 %v474, 7
        %v476 = vsub.s32 0, %v475
        %v477 = vrot.slane %v472, %v476
        %v478 = vlaneseq
        %v479 = vshrl.u32 %v478, 7
        %v480 = vsub.s32 1, %v479
        %v481 = vrot.slane %v472, %v480
        %v482 = vlaneseq
        %v483 = vshrl.u32 %v482, 7
        %v484 = vsub.s32 2, %v483
        %v485 = vrot.slane %v472, %v484
        %v486 = vlaneseq
        %v487 = vshrl.u32 %v486, 7
        %v488 = vsub.s32 3, %v487
        %v489 = vrot.slane %v472, %v488
        %v494 = vmul.f32 %v456, %v477
        %v495 = vmul.f32 %v457, %v481
        %v496 = vmul.f32 %v458, %v485
        %v497 = vmul.f32 %v459, %v489
        %v498 = vmul.f32 %v460, %v477
        %v499 = vmul.f32 %v461, %v481
        %v500 = vmul.f32 %v462, %v485
        %v501 = vmul.f32 %v463, %v489
        %v502 = vmul.f32 %v464, %v477
        %v503 = vmul.f32 %v465, %v481
        %v504 = vmul.f32 %v466, %v485
        %v505 = vmul.f32 %v467, %v489
        %v506 = vmul.f32 %v468, %v477
        %v507 = vmul.f32 %v469, %v481
        %v508 = vmul.f32 %v470, %v485
        %v509 = vmul.f32 %v471, %v489
        %v510 = vld [vmem:[%s2] sm:$0xff]
        %v511 = vld [vmem:[%s2 + $0x8] sm:$0xff]
        %v512 = vld [vmem:[%s2 + $0x10] sm:$0xff]
        %v513 = vld [vmem:[%s2 + $0x18] sm:$0xff]
        %v514 = vld [vmem:[%s2 + $0x20] sm:$0xff]
        %v515 = vld [vmem:[%s2 + $0x28] sm:$0xff]
        %v516 = vld [vmem:[%s2 + $0x30] sm:$0xff]
        %v517 = vld [vmem:[%s2 + $0x38] sm:$0xff]
        %v518 = vld [vmem:[%s2 + $0x40] sm:$0xff]
        %v519 = vld [vmem:[%s2 + $0x48] sm:$0xff]
        %v520 = vld [vmem:[%s2 + $0x50] sm:$0xff]
        %v521 = vld [vmem:[%s2 + $0x58] sm:$0xff]
        %v522 = vld [vmem:[%s2 + $0x60] sm:$0xff]
        %v523 = vld [vmem:[%s2 + $0x68] sm:$0xff]
        %v524 = vld [vmem:[%s2 + $0x70] sm:$0xff]
        %v525 = vld [vmem:[%s2 + $0x78] sm:$0xff]
        %v526 = vadd.f32 %v494, %v510
        %v527 = vadd.f32 %v495, %v511
        %v528 = vadd.f32 %v496, %v512
        %v529 = vadd.f32 %v497, %v513
        %v530 = vadd.f32 %v498, %v514
        %v531 = vadd.f32 %v499, %v515
        %v532 = vadd.f32 %v500, %v516
        %v533 = vadd.f32 %v501, %v517
        %v534 = vadd.f32 %v502, %v518
        %v535 = vadd.f32 %v503, %v519
        %v536 = vadd.f32 %v504, %v520
        %v537 = vadd.f32 %v505, %v521
        %v538 = vadd.f32 %v506, %v522
        %v539 = vadd.f32 %v507, %v523
        %v540 = vadd.f32 %v508, %v524
        %v541 = vadd.f32 %v509, %v525
        loop: start=0, step=1, limit=6
        $region73: #{classifier_forward.1} parent=71 // loop_pre_header
          _
        $region74: #{classifier_forward.1} parent=71 // loop_header
          %s543 = sphi 0, %s547
          %p544 = scmp.ge.s32.totalorder %s543, 6
          %v548 = vphi %v526, %v5074
          %v549 = vphi %v527, %v5075
          %v550 = vphi %v528, %v5076
          %v551 = vphi %v529, %v5077
          %v552 = vphi %v530, %v5078
          %v553 = vphi %v531, %v5079
          %v554 = vphi %v532, %v5080
          %v555 = vphi %v533, %v5081
          %v556 = vphi %v534, %v5082
          %v557 = vphi %v535, %v5083
          %v558 = vphi %v536, %v5084
          %v559 = vphi %v537, %v5085
          %v560 = vphi %v538, %v5086
          %v561 = vphi %v539, %v5087
          %v562 = vphi %v540, %v5088
          %v563 = vphi %v541, %v5089
        $region75: #{classifier_forward.1} parent=71 // loop_header_branch
          %546 = sbr.rel (%p544) target = $region79
        $region76: #{classifier_forward.1} parent=71 // loop_body
          %s564 = smul.u32 %s543, 320
          %s565 = scalar_lea.vmem %s8, %s564
          %v566 = vld [vmem:[%s565] sm:$0xff]
          %v567 = vld [vmem:[%s565 + $0x8] sm:$0xff]
          %v568 = vld [vmem:[%s565 + $0x10] sm:$0xff]
          %v569 = vld [vmem:[%s565 + $0x18] sm:$0xff]
          %v570 = vld [vmem:[%s565 + $0x20] sm:$0xff]
          %v571 = vld [vmem:[%s565 + $0x28] sm:$0xff]
          %v572 = vld [vmem:[%s565 + $0x30] sm:$0xff]
          %v573 = vld [vmem:[%s565 + $0x38] sm:$0xff]
          %v574 = vld [vmem:[%s565 + $0x40] sm:$0xff]
          %v575 = vld [vmem:[%s565 + $0x48] sm:$0xff]
          %v576 = vld [vmem:[%s565 + $0x50] sm:$0xff]
          %v577 = vld [vmem:[%s565 + $0x58] sm:$0xff]
          %v578 = vld [vmem:[%s565 + $0x60] sm:$0xff]
          %v579 = vld [vmem:[%s565 + $0x68] sm:$0xff]
          %v580 = vld [vmem:[%s565 + $0x70] sm:$0xff]
          %v581 = vld [vmem:[%s565 + $0x78] sm:$0xff]
          %v582 = vld [vmem:[%s565 + $0x80] sm:$0xff]
          %v583 = vld [vmem:[%s565 + $0x88] sm:$0xff]
          %v584 = vld [vmem:[%s565 + $0x90] sm:$0xff]
          %v585 = vld [vmem:[%s565 + $0x98] sm:$0xff]
          %v586 = vld [vmem:[%s565 + $0xa0] sm:$0xff]
          %v587 = vld [vmem:[%s565 + $0xa8] sm:$0xff]
          %v588 = vld [vmem:[%s565 + $0xb0] sm:$0xff]
          %v589 = vld [vmem:[%s565 + $0xb8] sm:$0xff]
          %v590 = vld [vmem:[%s565 + $0xc0] sm:$0xff]
          %v591 = vld [vmem:[%s565 + $0xc8] sm:$0xff]
          %v592 = vld [vmem:[%s565 + $0xd0] sm:$0xff]
          %v593 = vld [vmem:[%s565 + $0xd8] sm:$0xff]
          %v594 = vld [vmem:[%s565 + $0xe0] sm:$0xff]
          %v595 = vld [vmem:[%s565 + $0xe8] sm:$0xff]
          %v596 = vld [vmem:[%s565 + $0xf0] sm:$0xff]
          %v597 = vld [vmem:[%s565 + $0xf8] sm:$0xff]
          %v598 = vld [vmem:[%s565 + $0x100] sm:$0xff]
          %v599 = vld [vmem:[%s565 + $0x108] sm:$0xff]
          %v600 = vld [vmem:[%s565 + $0x110] sm:$0xff]
          %v601 = vld [vmem:[%s565 + $0x118] sm:$0xff]
          %v602 = vld [vmem:[%s565 + $0x120] sm:$0xff]
          %v603 = vld [vmem:[%s565 + $0x128] sm:$0xff]
          %v604 = vld [vmem:[%s565 + $0x130] sm:$0xff]
          %v605 = vld [vmem:[%s565 + $0x138] sm:$0xff]
          %v606 = vpack.c.bf16 %v552, %v548
          %v607 = vpack.c.bf16 %v553, %v549
          %v608 = vpack.c.bf16 %v554, %v550
          %v609 = vpack.c.bf16 %v555, %v551
          %v610 = vpack.c.bf16 %v560, %v556
          %v611 = vpack.c.bf16 %v561, %v557
          %v612 = vpack.c.bf16 %v562, %v558
          %v613 = vpack.c.bf16 %v563, %v559
          loop: start=0, step=1, limit=8
          $region80: #{classifier_forward.1} parent=76 // loop_pre_header
            _
          $region81: #{classifier_forward.1} parent=76 // loop_header
            %s615 = sphi 0, %s619
            %p616 = scmp.ge.s32.totalorder %s615, 8
            %v620 = vphi 0.0, %v3438
            %v621 = vphi 0.0, %v3439
            %v622 = vphi 0.0, %v3440
            %v623 = vphi 0.0, %v3441
            %v624 = vphi 0.0, %v3442
            %v625 = vphi 0.0, %v3443
            %v626 = vphi 0.0, %v3444
            %v627 = vphi 0.0, %v3445
            %v628 = vphi 0.0, %v3446
            %v629 = vphi 0.0, %v3447
            %v630 = vphi 0.0, %v3448
            %v631 = vphi 0.0, %v3449
            %v632 = vphi 0.0, %v3450
            %v633 = vphi 0.0, %v3451
            %v634 = vphi 0.0, %v3452
            %v635 = vphi 0.0, %v3453
          $region82: #{classifier_forward.1} parent=76 // loop_header_branch
            %618 = sbr.rel (%p616) target = $region86
          $region83: #{classifier_forward.1} parent=76 // loop_body
            %s636 = smul.u32 %s543, 8
            %s637 = sadd.s32 %s636, %s615
            %s638 = smul.u32 %s637, 3
            %s639 = smul.addr %s638, 4
            %s640 = scalar_lea.vmem %s3, %s639
            %v641 = vld [vmem:[%s640] sm:$0xf]
            %v642 = vld [vmem:[%s640 + $0x4] sm:$0xf]
            %v643 = vld [vmem:[%s640 + $0x8] sm:$0xf]
            %s644 = smul.u32 %s637, 24
            %s645 = scalar_lea.vmem %s4, %s644
            %v646 = vld [vmem:[%s645] sm:$0xff]
            %v647 = vld [vmem:[%s645 + $0x8] sm:$0xff]
            %v648 = vld [vmem:[%s645 + $0x10] sm:$0xff]
            %650 = vset.pattern.permute.xlu0 0
            %651 = vperm.xlu0 %650, %v646
            %v652 = vpop.permute.xlu0 %651
            %655 = vset.pattern.permute.xlu0 0
            %656 = vperm.xlu0 %655, %v647
            %v657 = vpop.permute.xlu0 %656
            %660 = vset.pattern.permute.xlu0 0
            %661 = vperm.xlu0 %660, %v648
            %v662 = vpop.permute.xlu0 %661
            %v667 = vunpack.c.l.b16 %v641
            %v668 = vunpack.c.l.b16 %v642
            %v669 = vunpack.c.l.b16 %v643
            %v670 = vpack.c.b16 %v668, %v667
            %v671 = vpack.c.b16 %v669, %v669
            %vm672 = vcmask 261120
            %v674 = vsel %vm672, %v670, 0
            %v677 = vsel %vm672, %v671, 0
            %679 = vmatprep.subr.bf16.mxu0 %v607
            %680 = vmatpush1.bf16.msra.mxu0 %v606
            %681 = vmatprep.subr.bf16.mxu0 %v611
            %682 = vmatpush1.bf16.msra.mxu0 %v610
            %683 = vmatprep.subr.bf16.mxu0 0
            %684 = vmatpush1.bf16.msra.mxu0 0
            %685 = vmatprep.subr.bf16.mxu0 0
            %686 = vmatpush1.bf16.msra.mxu0 0
            %687 = vmatprep.subr.bf16.mxu0 0
            %688 = vmatpush1.bf16.msra.mxu0 0
            %689 = vmatprep.subr.bf16.mxu0 0
            %690 = vmatpush1.bf16.msra.mxu0 0
            %691 = vmatprep.subr.bf16.mxu0 0
            %692 = vmatpush1.bf16.msra.mxu0 0
            %693 = vmatprep.subr.bf16.mxu0 0
            %694 = vmatpush1.bf16.msra.mxu0 0
            %695 = vmatprep.subr.bf16.mxu0 0
            %696 = vmatpush1.bf16.msra.mxu0 0
            %697 = vmatprep.subr.bf16.mxu0 0
            %698 = vmatpush1.bf16.msra.mxu0 0
            %699 = vmatprep.subr.bf16.mxu0 0
            %700 = vmatpush1.bf16.msra.mxu0 0
            %701 = vmatprep.subr.bf16.mxu0 0
            %702 = vmatpush1.bf16.msra.mxu0 0
            %703 = vmatprep.subr.bf16.mxu0 0
            %704 = vmatpush1.bf16.msra.mxu0 0
            %705 = vmatprep.subr.bf16.mxu0 0
            %706 = vmatpush1.bf16.msra.mxu0 0
            %707 = vmatprep.subr.bf16.mxu0 0
            %708 = vmatpush1.bf16.msra.mxu0 0
            %709 = vmatprep.subr.bf16.mxu0 0
            %710 = vmatpush1.bf16.msra.mxu0 0
            %711 = vmatprep.mubr.bf16.mxu0 0
            %712 = vmatmul.mubr.bf16.gmra.mrb[0].mxu0 %v674
            %v713 = vpop.f32.mrb[0].mxu0
            %v714 = vadd.f32 %v652, %v713
            %v715 = vpop.f32.mrb[0].mxu0
            %v716 = vadd.f32 %v652, %v715
            %v717 = vpop.f32.mrb[0].mxu0
            %v718 = vadd.f32 %v657, %v717
            %v719 = vpop.f32.mrb[0].mxu0
            %v720 = vadd.f32 %v657, %v719
            %721 = vmatprep.mubr.bf16.mxu0 0
            %722 = vmatmul.mubr.bf16.gmra.mrb[0].mxu0 %v677
            %v723 = vpop.f32.mrb[0].mxu0
            %v724 = vadd.f32 %v662, %v723
            %v725 = vpop.f32.mrb[0].mxu0
            %v726 = vadd.f32 %v662, %v725
            %v727 = vpop.f32.mrb[0].mxu0
            %v728 = vpop.f32.mrb[0].mxu0
            %729 = vdwg.mxu0
            %730 = vmatprep.subr.bf16.mxu0 %v609
            %731 = vmatpush1.bf16.msra.mxu0 %v608
            %732 = vmatprep.subr.bf16.mxu0 %v613
            %733 = vmatpush1.bf16.msra.mxu0 %v612
            %734 = vmatprep.subr.bf16.mxu0 0
            %735 = vmatpush1.bf16.msra.mxu0 0
            %736 = vmatprep.subr.bf16.mxu0 0
            %737 = vmatpush1.bf16.msra.mxu0 0
            %738 = vmatprep.subr.bf16.mxu0 0
            %739 = vmatpush1.bf16.msra.mxu0 0
            %740 = vmatprep.subr.bf16.mxu0 0
            %741 = vmatpush1.bf16.msra.mxu0 0
            %742 = vmatprep.subr.bf16.mxu0 0
            %743 = vmatpush1.bf16.msra.mxu0 0
            %744 = vmatprep.subr.bf16.mxu0 0
            %745 = vmatpush1.bf16.msra.mxu0 0
            %746 = vmatprep.subr.bf16.mxu0 0
            %747 = vmatpush1.bf16.msra.mxu0 0
            %748 = vmatprep.subr.bf16.mxu0 0
            %749 = vmatpush1.bf16.msra.mxu0 0
            %750 = vmatprep.subr.bf16.mxu0 0
            %751 = vmatpush1.bf16.msra.mxu0 0
            %752 = vmatprep.subr.bf16.mxu0 0
            %753 = vmatpush1.bf16.msra.mxu0 0
            %754 = vmatprep.subr.bf16.mxu0 0
            %755 = vmatpush1.bf16.msra.mxu0 0
            %756 = vmatprep.subr.bf16.mxu0 0
            %757 = vmatpush1.bf16.msra.mxu0 0
            %758 = vmatprep.subr.bf16.mxu0 0
            %759 = vmatpush1.bf16.msra.mxu0 0
            %760 = vmatprep.subr.bf16.mxu0 0
            %761 = vmatpush1.bf16.msra.mxu0 0
            %762 = vmatprep.mubr.bf16.mxu0 0
            %763 = vmatmul.mubr.bf16.gmra.mrb[0].mxu0 %v674
            %v764 = vpop.f32.mrb[0].mxu0
            %v765 = vadd.f32 %v652, %v764
            %v766 = vpop.f32.mrb[0].mxu0
            %v767 = vadd.f32 %v652, %v766
            %v768 = vpop.f32.mrb[0].mxu0
            %v769 = vadd.f32 %v657, %v768
            %v770 = vpop.f32.mrb[0].mxu0
            %v771 = vadd.f32 %v657, %v770
            %772 = vmatprep.mubr.bf16.mxu0 0
            %773 = vmatmul.mubr.bf16.gmra.mrb[0].mxu0 %v677
            %v774 = vpop.f32.mrb[0].mxu0
            %v775 = vadd.f32 %v662, %v774
            %v776 = vpop.f32.mrb[0].mxu0
            %v777 = vadd.f32 %v662, %v776
            %v778 = vpop.f32.mrb[0].mxu0
            %v779 = vpop.f32.mrb[0].mxu0
            %780 = vdwg.mxu0
            %v781 = vpack.c.bf16 %v714, %v714
            %v782 = vpack.c.bf16 %v716, %v716
            %v783 = vpack.c.bf16 %v765, %v765
            %v784 = vpack.c.bf16 %v767, %v767
            %v785 = vpack.c.bf16 %v718, %v718
            %v786 = vpack.c.bf16 %v720, %v720
            %v787 = vpack.c.bf16 %v769, %v769
            %v788 = vpack.c.bf16 %v771, %v771
            %v789 = vpack.c.bf16 %v724, %v724
            %v790 = vpack.c.bf16 %v726, %v726
            %v791 = vpack.c.bf16 %v775, %v775
            %v792 = vpack.c.bf16 %v777, %v777
            %793 = vxpose.xlu0.c.b16.start [1/8] %v785, 128
            %794 = vxpose.xlu0.c.b16.cont [2/8] 0, 128
            %795 = vxpose.xlu0.c.b16.cont [3/8] 0, 128
            %796 = vxpose.xlu0.c.b16.cont [4/8] 0, 128
            %797 = vxpose.xlu0.c.b16.cont [5/8] 0, 128
            %798 = vxpose.xlu0.c.b16.cont [6/8] 0, 128
            %799 = vxpose.xlu0.c.b16.cont [7/8] 0, 128
            %800 = vxpose.xlu0.c.b16.end [8/8] 0, 128
            %v801 = vpop.trf.xlu0
            %v802 = vpop.trf.xlu0
            %v803 = vpop.trf.xlu0
            %v804 = vpop.trf.xlu0
            %v805 = vpop.trf.xlu0
            %v806 = vpop.trf.xlu0
            %v807 = vpop.trf.xlu0
            %v808 = vpop.trf.xlu0
            %809 = vxpose.xlu0.c.b16.start [1/8] %v786, 128
            %810 = vxpose.xlu0.c.b16.cont [2/8] 0, 128
            %811 = vxpose.xlu0.c.b16.cont [3/8] 0, 128
            %812 = vxpose.xlu0.c.b16.cont [4/8] 0, 128
            %813 = vxpose.xlu0.c.b16.cont [5/8] 0, 128
            %814 = vxpose.xlu0.c.b16.cont [6/8] 0, 128
            %815 = vxpose.xlu0.c.b16.cont [7/8] 0, 128
            %816 = vxpose.xlu0.c.b16.end [8/8] 0, 128
            %v817 = vpop.trf.xlu0
            %v818 = vpop.trf.xlu0
            %v819 = vpop.trf.xlu0
            %v820 = vpop.trf.xlu0
            %v821 = vpop.trf.xlu0
            %v822 = vpop.trf.xlu0
            %v823 = vpop.trf.xlu0
            %v824 = vpop.trf.xlu0
            %825 = vxpose.xlu0.c.b16.start [1/8] %v787, 128
            %826 = vxpose.xlu0.c.b16.cont [2/8] 0, 128
            %827 = vxpose.xlu0.c.b16.cont [3/8] 0, 128
            %828 = vxpose.xlu0.c.b16.cont [4/8] 0, 128
            %829 = vxpose.xlu0.c.b16.cont [5/8] 0, 128
            %830 = vxpose.xlu0.c.b16.cont [6/8] 0, 128
            %831 = vxpose.xlu0.c.b16.cont [7/8] 0, 128
            %832 = vxpose.xlu0.c.b16.end [8/8] 0, 128
            %v833 = vpop.trf.xlu0
            %v834 = vpop.trf.xlu0
            %v835 = vpop.trf.xlu0
            %v836 = vpop.trf.xlu0
            %v837 = vpop.trf.xlu0
            %v838 = vpop.trf.xlu0
            %v839 = vpop.trf.xlu0
            %v840 = vpop.trf.xlu0
            %841 = vxpose.xlu0.c.b16.start [1/8] %v788, 128
            %842 = vxpose.xlu0.c.b16.cont [2/8] 0, 128
            %843 = vxpose.xlu0.c.b16.cont [3/8] 0, 128
            %844 = vxpose.xlu0.c.b16.cont [4/8] 0, 128
            %845 = vxpose.xlu0.c.b16.cont [5/8] 0, 128
            %846 = vxpose.xlu0.c.b16.cont [6/8] 0, 128
            %847 = vxpose.xlu0.c.b16.cont [7/8] 0, 128
            %848 = vxpose.xlu0.c.b16.end [8/8] 0, 128
            %v849 = vpop.trf.xlu0
            %v850 = vpop.trf.xlu0
            %v851 = vpop.trf.xlu0
            %v852 = vpop.trf.xlu0
            %v853 = vpop.trf.xlu0
            %v854 = vpop.trf.xlu0
            %v855 = vpop.trf.xlu0
            %v856 = vpop.trf.xlu0
            %vm857 = vcmask 64512
            %v859 = vsel %vm857, %v801, 0
            %v862 = vsel %vm857, %v802, 0
            %v865 = vsel %vm857, %v803, 0
            %v868 = vsel %vm857, %v804, 0
            %v871 = vsel %vm857, %v805, 0
            %v874 = vsel %vm857, %v806, 0
            %v877 = vsel %vm857, %v807, 0
            %v880 = vsel %vm857, %v808, 0
            %v883 = vsel %vm857, %v817, 0
            %v886 = vsel %vm857, %v818, 0
            %v889 = vsel %vm857, %v819, 0
            %v892 = vsel %vm857, %v820, 0
            %v895 = vsel %vm857, %v821, 0
            %v898 = vsel %vm857, %v822, 0
            %v901 = vsel %vm857, %v823, 0
            %v904 = vsel %vm857, %v824, 0
            %v907 = vsel %vm857, %v833, 0
            %v910 = vsel %vm857, %v834, 0
            %v913 = vsel %vm857, %v835, 0
            %v916 = vsel %vm857, %v836, 0
            %v919 = vsel %vm857, %v837, 0
            %v922 = vsel %vm857, %v838, 0
            %v925 = vsel %vm857, %v839, 0
            %v928 = vsel %vm857, %v840, 0
            %v931 = vsel %vm857, %v849, 0
            %v934 = vsel %vm857, %v850, 0
            %v937 = vsel %vm857, %v851, 0
            %v940 = vsel %vm857, %v852, 0
            %v943 = vsel %vm857, %v853, 0
            %v946 = vsel %vm857, %v854, 0
            %v949 = vsel %vm857, %v855, 0
            %v952 = vsel %vm857, %v856, 0
            %vm954 = vcmask 1043456
            %v956 = vsel %vm954, %v781, 0
            %v959 = vsel %vm954, %v782, 0
            %v962 = vsel %vm954, %v783, 0
            %v965 = vsel %vm954, %v784, 0
            %967 = vmatprep.subr.bf16.mxu0 %v959
            %968 = vmatpush1.bf16.msra.mxu0 %v956
            %969 = vmatprep.subr.bf16.mxu0 0
            %970 = vmatpush1.bf16.msra.mxu0 0
            %971 = vmatprep.subr.bf16.mxu0 0
            %972 = vmatpush1.bf16.msra.mxu0 0
            %973 = vmatprep.subr.bf16.mxu0 0
            %974 = vmatpush1.bf16.msra.mxu0 0
            %975 = vmatprep.subr.bf16.mxu0 0
            %976 = vmatpush1.bf16.msra.mxu0 0
            %977 = vmatprep.subr.bf16.mxu0 0
            %978 = vmatpush1.bf16.msra.mxu0 0
            %979 = vmatprep.subr.bf16.mxu0 0
            %980 = vmatpush1.bf16.msra.mxu0 0
            %981 = vmatprep.subr.bf16.mxu0 0
            %982 = vmatpush1.bf16.msra.mxu0 0
            %983 = vmatprep.subr.bf16.mxu0 0
            %984 = vmatpush1.bf16.msra.mxu0 0
            %985 = vmatprep.subr.bf16.mxu0 0
            %986 = vmatpush1.bf16.msra.mxu0 0
            %987 = vmatprep.subr.bf16.mxu0 0
            %988 = vmatpush1.bf16.msra.mxu0 0
            %989 = vmatprep.subr.bf16.mxu0 0
            %990 = vmatpush1.bf16.msra.mxu0 0
            %991 = vmatprep.subr.bf16.mxu0 0
            %992 = vmatpush1.bf16.msra.mxu0 0
            %993 = vmatprep.subr.bf16.mxu0 0
            %994 = vmatpush1.bf16.msra.mxu0 0
            %995 = vmatprep.subr.bf16.mxu0 0
            %996 = vmatpush1.bf16.msra.mxu0 0
            %997 = vmatprep.subr.bf16.mxu0 0
            %998 = vmatpush1.bf16.msra.mxu0 0
            %999 = vmatprep.mubr.bf16.mxu0 0
            %1000 = vmatmul.mubr.bf16.gmra.mrb[0].mxu0 %v859
            %v1001 = vpop.f32.mrb[0].mxu0
            %v1002 = vadd.f32 0.0, %v1001
            %v1003 = vpop.f32.mrb[0].mxu0
            %v1004 = vadd.f32 0.0, %v1003
            %v1005 = vpop.f32.mrb[0].mxu0
            %v1006 = vadd.f32 0.0, %v1005
            %v1007 = vpop.f32.mrb[0].mxu0
            %v1008 = vadd.f32 0.0, %v1007
            %1009 = vmatprep.mubr.bf16.mxu0 0
            %1010 = vmatmul.mubr.bf16.gmra.mrb[0].mxu0 %v862
            %v1011 = vpop.f32.mrb[0].mxu0
            %v1012 = vadd.f32 0.0, %v1011
            %v1013 = vpop.f32.mrb[0].mxu0
            %v1014 = vadd.f32 0.0, %v1013
            %v1015 = vpop.f32.mrb[0].mxu0
            %v1016 = vadd.f32 0.0, %v1015
            %v1017 = vpop.f32.mrb[0].mxu0
            %v1018 = vadd.f32 0.0, %v1017
            %1019 = vmatprep.mubr.bf16.mxu0 0
            %1020 = vmatmul.mubr.bf16.gmra.mrb[0].mxu0 %v865
            %v1021 = vpop.f32.mrb[0].mxu0
            %v1022 = vadd.f32 0.0, %v1021
            %v1023 = vpop.f32.mrb[0].mxu0
            %v1024 = vadd.f32 0.0, %v1023
            %v1025 = vpop.f32.mrb[0].mxu0
            %v1026 = vadd.f32 0.0, %v1025
            %v1027 = vpop.f32.mrb[0].mxu0
            %v1028 = vadd.f32 0.0, %v1027
            %1029 = vmatprep.mubr.bf16.mxu0 0
            %1030 = vmatmul.mubr.bf16.gmra.mrb[0].mxu0 %v868
            %v1031 = vpop.f32.mrb[0].mxu0
            %v1032 = vadd.f32 0.0, %v1031
            %v1033 = vpop.f32.mrb[0].mxu0
            %v1034 = vadd.f32 0.0, %v1033
            %v1035 = vpop.f32.mrb[0].mxu0
            %v1036 = vadd.f32 0.0, %v1035
            %v1037 = vpop.f32.mrb[0].mxu0
            %v1038 = vadd.f32 0.0, %v1037
            %1039 = vmatprep.mubr.bf16.mxu0 0
            %1040 = vmatmul.mubr.bf16.gmra.mrb[0].mxu0 %v871
            %v1041 = vpop.f32.mrb[0].mxu0
            %v1042 = vadd.f32 0.0, %v1041
            %v1043 = vpop.f32.mrb[0].mxu0
            %v1044 = vadd.f32 0.0, %v1043
            %v1045 = vpop.f32.mrb[0].mxu0
            %v1046 = vadd.f32 0.0, %v1045
            %v1047 = vpop.f32.mrb[0].mxu0
            %v1048 = vadd.f32 0.0, %v1047
            %1049 = vmatprep.mubr.bf16.mxu0 0
            %1050 = vmatmul.mubr.bf16.gmra.mrb[0].mxu0 %v874
            %v1051 = vpop.f32.mrb[0].mxu0
            %v1052 = vadd.f32 0.0, %v1051
            %v1053 = vpop.f32.mrb[0].mxu0
            %v1054 = vadd.f32 0.0, %v1053
            %v1055 = vpop.f32.mrb[0].mxu0
            %v1056 = vadd.f32 0.0, %v1055
            %v1057 = vpop.f32.mrb[0].mxu0
            %v1058 = vadd.f32 0.0, %v1057
            %1059 = vmatprep.mubr.bf16.mxu0 0
            %1060 = vmatmul.mubr.bf16.gmra.mrb[0].mxu0 %v877
            %v1061 = vpop.f32.mrb[0].mxu0
            %v1062 = vadd.f32 0.0, %v1061
            %v1063 = vpop.f32.mrb[0].mxu0
            %v1064 = vadd.f32 0.0, %v1063
            %v1065 = vpop.f32.mrb[0].mxu0
            %v1066 = vadd.f32 0.0, %v1065
            %v1067 = vpop.f32.mrb[0].mxu0
            %v1068 = vadd.f32 0.0, %v1067
            %1069 = vmatprep.mubr.bf16.mxu0 0
            %1070 = vmatmul.mubr.bf16.gmra.mrb[0].mxu0 %v880
            %v1071 = vpop.f32.mrb[0].mxu0
            %v1072 = vadd.f32 0.0, %v1071
            %v1073 = vpop.f32.mrb[0].mxu0
            %v1074 = vadd.f32 0.0, %v1073
            %v1075 = vpop.f32.mrb[0].mxu0
            %v1076 = vadd.f32 0.0, %v1075
            %v1077 = vpop.f32.mrb[0].mxu0
            %v1078 = vadd.f32 0.0, %v1077
            %1079 = vmatprep.mubr.bf16.mxu0 0
            %1080 = vmatmul.mubr.bf16.gmra.mrb[0].mxu0 %v883
            %v1081 = vpop.f32.mrb[0].mxu0
            %v1082 = vadd.f32 0.0, %v1081
            %v1083 = vpop.f32.mrb[0].mxu0
            %v1084 = vadd.f32 0.0, %v1083
            %v1085 = vpop.f32.mrb[0].mxu0
            %v1086 = vadd.f32 0.0, %v1085
            %v1087 = vpop.f32.mrb[0].mxu0
            %v1088 = vadd.f32 0.0, %v1087
            %1089 = vmatprep.mubr.bf16.mxu0 0
            %1090 = vmatmul.mubr.bf16.gmra.mrb[0].mxu0 %v886
            %v1091 = vpop.f32.mrb[0].mxu0
            %v1092 = vadd.f32 0.0, %v1091
            %v1093 = vpop.f32.mrb[0].mxu0
            %v1094 = vadd.f32 0.0, %v1093
            %v1095 = vpop.f32.mrb[0].mxu0
            %v1096 = vadd.f32 0.0, %v1095
            %v1097 = vpop.f32.mrb[0].mxu0
            %v1098 = vadd.f32 0.0, %v1097
            %1099 = vmatprep.mubr.bf16.mxu0 0
            %1100 = vmatmul.mubr.bf16.gmra.mrb[0].mxu0 %v889
            %v1101 = vpop.f32.mrb[0].mxu0
            %v1102 = vadd.f32 0.0, %v1101
            %v1103 = vpop.f32.mrb[0].mxu0
            %v1104 = vadd.f32 0.0, %v1103
            %v1105 = vpop.f32.mrb[0].mxu0
            %v1106 = vadd.f32 0.0, %v1105
            %v1107 = vpop.f32.mrb[0].mxu0
            %v1108 = vadd.f32 0.0, %v1107
            %1109 = vmatprep.mubr.bf16.mxu0 0
            %1110 = vmatmul.mubr.bf16.gmra.mrb[0].mxu0 %v892
            %v1111 = vpop.f32.mrb[0].mxu0
            %v1112 = vadd.f32 0.0, %v1111
            %v1113 = vpop.f32.mrb[0].mxu0
            %v1114 = vadd.f32 0.0, %v1113
            %v1115 = vpop.f32.mrb[0].mxu0
            %v1116 = vadd.f32 0.0, %v1115
            %v1117 = vpop.f32.mrb[0].mxu0
            %v1118 = vadd.f32 0.0, %v1117
            %1119 = vmatprep.mubr.bf16.mxu0 0
            %1120 = vmatmul.mubr.bf16.gmra.mrb[0].mxu0 %v895
            %v1121 = vpop.f32.mrb[0].mxu0
            %v1122 = vadd.f32 0.0, %v1121
            %v1123 = vpop.f32.mrb[0].mxu0
            %v1124 = vadd.f32 0.0, %v1123
            %v1125 = vpop.f32.mrb[0].mxu0
            %v1126 = vadd.f32 0.0, %v1125
            %v1127 = vpop.f32.mrb[0].mxu0
            %v1128 = vadd.f32 0.0, %v1127
            %1129 = vmatprep.mubr.bf16.mxu0 0
            %1130 = vmatmul.mubr.bf16.gmra.mrb[0].mxu0 %v898
            %v1131 = vpop.f32.mrb[0].mxu0
            %v1132 = vadd.f32 0.0, %v1131
            %v1133 = vpop.f32.mrb[0].mxu0
            %v1134 = vadd.f32 0.0, %v1133
            %v1135 = vpop.f32.mrb[0].mxu0
            %v1136 = vadd.f32 0.0, %v1135
            %v1137 = vpop.f32.mrb[0].mxu0
            %v1138 = vadd.f32 0.0, %v1137
            %1139 = vmatprep.mubr.bf16.mxu0 0
            %1140 = vmatmul.mubr.bf16.gmra.mrb[0].mxu0 %v901
            %v1141 = vpop.f32.mrb[0].mxu0
            %v1142 = vadd.f32 0.0, %v1141
            %v1143 = vpop.f32.mrb[0].mxu0
            %v1144 = vadd.f32 0.0, %v1143
            %v1145 = vpop.f32.mrb[0].mxu0
            %v1146 = vadd.f32 0.0, %v1145
            %v1147 = vpop.f32.mrb[0].mxu0
            %v1148 = vadd.f32 0.0, %v1147
            %1149 = vmatprep.mubr.bf16.mxu0 0
            %1150 = vmatmul.mubr.bf16.gmra.mrb[0].mxu0 %v904
            %v1151 = vpop.f32.mrb[0].mxu0
            %v1152 = vadd.f32 0.0, %v1151
            %v1153 = vpop.f32.mrb[0].mxu0
            %v1154 = vadd.f32 0.0, %v1153
            %v1155 = vpop.f32.mrb[0].mxu0
            %v1156 = vadd.f32 0.0, %v1155
            %v1157 = vpop.f32.mrb[0].mxu0
            %v1158 = vadd.f32 0.0, %v1157
            %1159 = vmatprep.mubr.bf16.mxu0 0
            %1160 = vmatmul.mubr.bf16.gmra.mrb[0].mxu0 %v907
            %v1161 = vpop.f32.mrb[0].mxu0
            %v1162 = vadd.f32 0.0, %v1161
            %v1163 = vpop.f32.mrb[0].mxu0
            %v1164 = vadd.f32 0.0, %v1163
            %v1165 = vpop.f32.mrb[0].mxu0
            %v1166 = vadd.f32 0.0, %v1165
            %v1167 = vpop.f32.mrb[0].mxu0
            %v1168 = vadd.f32 0.0, %v1167
            %1169 = vmatprep.mubr.bf16.mxu0 0
            %1170 = vmatmul.mubr.bf16.gmra.mrb[0].mxu0 %v910
            %v1171 = vpop.f32.mrb[0].mxu0
            %v1172 = vadd.f32 0.0, %v1171
            %v1173 = vpop.f32.mrb[0].mxu0
            %v1174 = vadd.f32 0.0, %v1173
            %v1175 = vpop.f32.mrb[0].mxu0
            %v1176 = vadd.f32 0.0, %v1175
            %v1177 = vpop.f32.mrb[0].mxu0
            %v1178 = vadd.f32 0.0, %v1177
            %1179 = vmatprep.mubr.bf16.mxu0 0
            %1180 = vmatmul.mubr.bf16.gmra.mrb[0].mxu0 %v913
            %v1181 = vpop.f32.mrb[0].mxu0
            %v1182 = vadd.f32 0.0, %v1181
            %v1183 = vpop.f32.mrb[0].mxu0
            %v1184 = vadd.f32 0.0, %v1183
            %v1185 = vpop.f32.mrb[0].mxu0
            %v1186 = vadd.f32 0.0, %v1185
            %v1187 = vpop.f32.mrb[0].mxu0
            %v1188 = vadd.f32 0.0, %v1187
            %1189 = vmatprep.mubr.bf16.mxu0 0
            %1190 = vmatmul.mubr.bf16.gmra.mrb[0].mxu0 %v916
            %v1191 = vpop.f32.mrb[0].mxu0
            %v1192 = vadd.f32 0.0, %v1191
            %v1193 = vpop.f32.mrb[0].mxu0
            %v1194 = vadd.f32 0.0, %v1193
            %v1195 = vpop.f32.mrb[0].mxu0
            %v1196 = vadd.f32 0.0, %v1195
            %v1197 = vpop.f32.mrb[0].mxu0
            %v1198 = vadd.f32 0.0, %v1197
            %1199 = vmatprep.mubr.bf16.mxu0 0
            %1200 = vmatmul.mubr.bf16.gmra.mrb[0].mxu0 %v919
            %v1201 = vpop.f32.mrb[0].mxu0
            %v1202 = vadd.f32 0.0, %v1201
            %v1203 = vpop.f32.mrb[0].mxu0
            %v1204 = vadd.f32 0.0, %v1203
            %v1205 = vpop.f32.mrb[0].mxu0
            %v1206 = vadd.f32 0.0, %v1205
            %v1207 = vpop.f32.mrb[0].mxu0
            %v1208 = vadd.f32 0.0, %v1207
            %1209 = vmatprep.mubr.bf16.mxu0 0
            %1210 = vmatmul.mubr.bf16.gmra.mrb[0].mxu0 %v922
            %v1211 = vpop.f32.mrb[0].mxu0
            %v1212 = vadd.f32 0.0, %v1211
            %v1213 = vpop.f32.mrb[0].mxu0
            %v1214 = vadd.f32 0.0, %v1213
            %v1215 = vpop.f32.mrb[0].mxu0
            %v1216 = vadd.f32 0.0, %v1215
            %v1217 = vpop.f32.mrb[0].mxu0
            %v1218 = vadd.f32 0.0, %v1217
            %1219 = vmatprep.mubr.bf16.mxu0 0
            %1220 = vmatmul.mubr.bf16.gmra.mrb[0].mxu0 %v925
            %v1221 = vpop.f32.mrb[0].mxu0
            %v1222 = vadd.f32 0.0, %v1221
            %v1223 = vpop.f32.mrb[0].mxu0
            %v1224 = vadd.f32 0.0, %v1223
            %v1225 = vpop.f32.mrb[0].mxu0
            %v1226 = vadd.f32 0.0, %v1225
            %v1227 = vpop.f32.mrb[0].mxu0
            %v1228 = vadd.f32 0.0, %v1227
            %1229 = vmatprep.mubr.bf16.mxu0 0
            %1230 = vmatmul.mubr.bf16.gmra.mrb[0].mxu0 %v928
            %v1231 = vpop.f32.mrb[0].mxu0
            %v1232 = vadd.f32 0.0, %v1231
            %v1233 = vpop.f32.mrb[0].mxu0
            %v1234 = vadd.f32 0.0, %v1233
            %v1235 = vpop.f32.mrb[0].mxu0
            %v1236 = vadd.f32 0.0, %v1235
            %v1237 = vpop.f32.mrb[0].mxu0
            %v1238 = vadd.f32 0.0, %v1237
            %1239 = vmatprep.mubr.bf16.mxu0 0
            %1240 = vmatmul.mubr.bf16.gmra.mrb[0].mxu0 %v931
            %v1241 = vpop.f32.mrb[0].mxu0
            %v1242 = vadd.f32 0.0, %v1241
            %v1243 = vpop.f32.mrb[0].mxu0
            %v1244 = vadd.f32 0.0, %v1243
            %v1245 = vpop.f32.mrb[0].mxu0
            %v1246 = vadd.f32 0.0, %v1245
            %v1247 = vpop.f32.mrb[0].mxu0
            %v1248 = vadd.f32 0.0, %v1247
            %1249 = vmatprep.mubr.bf16.mxu0 0
            %1250 = vmatmul.mubr.bf16.gmra.mrb[0].mxu0 %v934
            %v1251 = vpop.f32.mrb[0].mxu0
            %v1252 = vadd.f32 0.0, %v1251
            %v1253 = vpop.f32.mrb[0].mxu0
            %v1254 = vadd.f32 0.0, %v1253
            %v1255 = vpop.f32.mrb[0].mxu0
            %v1256 = vadd.f32 0.0, %v1255
            %v1257 = vpop.f32.mrb[0].mxu0
            %v1258 = vadd.f32 0.0, %v1257
            %1259 = vmatprep.mubr.bf16.mxu0 0
            %1260 = vmatmul.mubr.bf16.gmra.mrb[0].mxu0 %v937
            %v1261 = vpop.f32.mrb[0].mxu0
            %v1262 = vadd.f32 0.0, %v1261
            %v1263 = vpop.f32.mrb[0].mxu0
            %v1264 = vadd.f32 0.0, %v1263
            %v1265 = vpop.f32.mrb[0].mxu0
            %v1266 = vadd.f32 0.0, %v1265
            %v1267 = vpop.f32.mrb[0].mxu0
            %v1268 = vadd.f32 0.0, %v1267
            %1269 = vmatprep.mubr.bf16.mxu0 0
            %1270 = vmatmul.mubr.bf16.gmra.mrb[0].mxu0 %v940
            %v1271 = vpop.f32.mrb[0].mxu0
            %v1272 = vadd.f32 0.0, %v1271
            %v1273 = vpop.f32.mrb[0].mxu0
            %v1274 = vadd.f32 0.0, %v1273
            %v1275 = vpop.f32.mrb[0].mxu0
            %v1276 = vadd.f32 0.0, %v1275
            %v1277 = vpop.f32.mrb[0].mxu0
            %v1278 = vadd.f32 0.0, %v1277
            %1279 = vmatprep.mubr.bf16.mxu0 0
            %1280 = vmatmul.mubr.bf16.gmra.mrb[0].mxu0 %v943
            %v1281 = vpop.f32.mrb[0].mxu0
            %v1282 = vadd.f32 0.0, %v1281
            %v1283 = vpop.f32.mrb[0].mxu0
            %v1284 = vadd.f32 0.0, %v1283
            %v1285 = vpop.f32.mrb[0].mxu0
            %v1286 = vadd.f32 0.0, %v1285
            %v1287 = vpop.f32.mrb[0].mxu0
            %v1288 = vadd.f32 0.0, %v1287
            %1289 = vmatprep.mubr.bf16.mxu0 0
            %1290 = vmatmul.mubr.bf16.gmra.mrb[0].mxu0 %v946
            %v1291 = vpop.f32.mrb[0].mxu0
            %v1292 = vadd.f32 0.0, %v1291
            %v1293 = vpop.f32.mrb[0].mxu0
            %v1294 = vadd.f32 0.0, %v1293
            %v1295 = vpop.f32.mrb[0].mxu0
            %v1296 = vadd.f32 0.0, %v1295
            %v1297 = vpop.f32.mrb[0].mxu0
            %v1298 = vadd.f32 0.0, %v1297
            %1299 = vmatprep.mubr.bf16.mxu0 0
            %1300 = vmatmul.mubr.bf16.gmra.mrb[0].mxu0 %v949
            %v1301 = vpop.f32.mrb[0].mxu0
            %v1302 = vadd.f32 0.0, %v1301
            %v1303 = vpop.f32.mrb[0].mxu0
            %v1304 = vadd.f32 0.0, %v1303
            %v1305 = vpop.f32.mrb[0].mxu0
            %v1306 = vadd.f32 0.0, %v1305
            %v1307 = vpop.f32.mrb[0].mxu0
            %v1308 = vadd.f32 0.0, %v1307
            %1309 = vmatprep.mubr.bf16.mxu0 0
            %1310 = vmatmul.mubr.bf16.gmra.mrb[0].mxu0 %v952
            %v1311 = vpop.f32.mrb[0].mxu0
            %v1312 = vadd.f32 0.0, %v1311
            %v1313 = vpop.f32.mrb[0].mxu0
            %v1314 = vadd.f32 0.0, %v1313
            %v1315 = vpop.f32.mrb[0].mxu0
            %v1316 = vadd.f32 0.0, %v1315
            %v1317 = vpop.f32.mrb[0].mxu0
            %v1318 = vadd.f32 0.0, %v1317
            %1319 = vdwg.mxu0
            %1320 = vmatprep.subr.bf16.mxu0 %v965
            %1321 = vmatpush1.bf16.msra.mxu0 %v962
            %1322 = vmatprep.subr.bf16.mxu0 0
            %1323 = vmatpush1.bf16.msra.mxu0 0
            %1324 = vmatprep.subr.bf16.mxu0 0
            %1325 = vmatpush1.bf16.msra.mxu0 0
            %1326 = vmatprep.subr.bf16.mxu0 0
            %1327 = vmatpush1.bf16.msra.mxu0 0
            %1328 = vmatprep.subr.bf16.mxu0 0
            %1329 = vmatpush1.bf16.msra.mxu0 0
            %1330 = vmatprep.subr.bf16.mxu0 0
            %1331 = vmatpush1.bf16.msra.mxu0 0
            %1332 = vmatprep.subr.bf16.mxu0 0
            %1333 = vmatpush1.bf16.msra.mxu0 0
            %1334 = vmatprep.subr.bf16.mxu0 0
            %1335 = vmatpush1.bf16.msra.mxu0 0
            %1336 = vmatprep.subr.bf16.mxu0 0
            %1337 = vmatpush1.bf16.msra.mxu0 0
            %1338 = vmatprep.subr.bf16.mxu0 0
            %1339 = vmatpush1.bf16.msra.mxu0 0
            %1340 = vmatprep.subr.bf16.mxu0 0
            %1341 = vmatpush1.bf16.msra.mxu0 0
            %1342 = vmatprep.subr.bf16.mxu0 0
            %1343 = vmatpush1.bf16.msra.mxu0 0
            %1344 = vmatprep.subr.bf16.mxu0 0
            %1345 = vmatpush1.bf16.msra.mxu0 0
            %1346 = vmatprep.subr.bf16.mxu0 0
            %1347 = vmatpush1.bf16.msra.mxu0 0
            %1348 = vmatprep.subr.bf16.mxu0 0
            %1349 = vmatpush1.bf16.msra.mxu0 0
            %1350 = vmatprep.subr.bf16.mxu0 0
            %1351 = vmatpush1.bf16.msra.mxu0 0
            %1352 = vmatprep.mubr.bf16.mxu0 0
            %1353 = vmatmul.mubr.bf16.gmra.mrb[0].mxu0 %v859
            %v1354 = vpop.f32.mrb[0].mxu0
            %v1355 = vadd.f32 0.0, %v1354
            %v1356 = vpop.f32.mrb[0].mxu0
            %v1357 = vadd.f32 0.0, %v1356
            %v1358 = vpop.f32.mrb[0].mxu0
            %v1359 = vadd.f32 0.0, %v1358
            %v1360 = vpop.f32.mrb[0].mxu0
            %v1361 = vadd.f32 0.0, %v1360
            %1362 = vmatprep.mubr.bf16.mxu0 0
            %1363 = vmatmul.mubr.bf16.gmra.mrb[0].mxu0 %v862
            %v1364 = vpop.f32.mrb[0].mxu0
            %v1365 = vadd.f32 0.0, %v1364
            %v1366 = vpop.f32.mrb[0].mxu0
            %v1367 = vadd.f32 0.0, %v1366
            %v1368 = vpop.f32.mrb[0].mxu0
            %v1369 = vadd.f32 0.0, %v1368
            %v1370 = vpop.f32.mrb[0].mxu0
            %v1371 = vadd.f32 0.0, %v1370
            %1372 = vmatprep.mubr.bf16.mxu0 0
            %1373 = vmatmul.mubr.bf16.gmra.mrb[0].mxu0 %v865
            %v1374 = vpop.f32.mrb[0].mxu0
            %v1375 = vadd.f32 0.0, %v1374
            %v1376 = vpop.f32.mrb[0].mxu0
            %v1377 = vadd.f32 0.0, %v1376
            %v1378 = vpop.f32.mrb[0].mxu0
            %v1379 = vadd.f32 0.0, %v1378
            %v1380 = vpop.f32.mrb[0].mxu0
            %v1381 = vadd.f32 0.0, %v1380
            %1382 = vmatprep.mubr.bf16.mxu0 0
            %1383 = vmatmul.mubr.bf16.gmra.mrb[0].mxu0 %v868
            %v1384 = vpop.f32.mrb[0].mxu0
            %v1385 = vadd.f32 0.0, %v1384
            %v1386 = vpop.f32.mrb[0].mxu0
            %v1387 = vadd.f32 0.0, %v1386
            %v1388 = vpop.f32.mrb[0].mxu0
            %v1389 = vadd.f32 0.0, %v1388
            %v1390 = vpop.f32.mrb[0].mxu0
            %v1391 = vadd.f32 0.0, %v1390
            %1392 = vmatprep.mubr.bf16.mxu0 0
            %1393 = vmatmul.mubr.bf16.gmra.mrb[0].mxu0 %v871
            %v1394 = vpop.f32.mrb[0].mxu0
            %v1395 = vadd.f32 0.0, %v1394
            %v1396 = vpop.f32.mrb[0].mxu0
            %v1397 = vadd.f32 0.0, %v1396
            %v1398 = vpop.f32.mrb[0].mxu0
            %v1399 = vadd.f32 0.0, %v1398
            %v1400 = vpop.f32.mrb[0].mxu0
            %v1401 = vadd.f32 0.0, %v1400
            %1402 = vmatprep.mubr.bf16.mxu0 0
            %1403 = vmatmul.mubr.bf16.gmra.mrb[0].mxu0 %v874
            %v1404 = vpop.f32.mrb[0].mxu0
            %v1405 = vadd.f32 0.0, %v1404
            %v1406 = vpop.f32.mrb[0].mxu0
            %v1407 = vadd.f32 0.0, %v1406
            %v1408 = vpop.f32.mrb[0].mxu0
            %v1409 = vadd.f32 0.0, %v1408
            %v1410 = vpop.f32.mrb[0].mxu0
            %v1411 = vadd.f32 0.0, %v1410
            %1412 = vmatprep.mubr.bf16.mxu0 0
            %1413 = vmatmul.mubr.bf16.gmra.mrb[0].mxu0 %v877
            %v1414 = vpop.f32.mrb[0].mxu0
            %v1415 = vadd.f32 0.0, %v1414
            %v1416 = vpop.f32.mrb[0].mxu0
            %v1417 = vadd.f32 0.0, %v1416
            %v1418 = vpop.f32.mrb[0].mxu0
            %v1419 = vadd.f32 0.0, %v1418
            %v1420 = vpop.f32.mrb[0].mxu0
            %v1421 = vadd.f32 0.0, %v1420
            %1422 = vmatprep.mubr.bf16.mxu0 0
            %1423 = vmatmul.mubr.bf16.gmra.mrb[0].mxu0 %v880
            %v1424 = vpop.f32.mrb[0].mxu0
            %v1425 = vadd.f32 0.0, %v1424
            %v1426 = vpop.f32.mrb[0].mxu0
            %v1427 = vadd.f32 0.0, %v1426
            %v1428 = vpop.f32.mrb[0].mxu0
            %v1429 = vadd.f32 0.0, %v1428
            %v1430 = vpop.f32.mrb[0].mxu0
            %v1431 = vadd.f32 0.0, %v1430
            %1432 = vmatprep.mubr.bf16.mxu0 0
            %1433 = vmatmul.mubr.bf16.gmra.mrb[0].mxu0 %v883
            %v1434 = vpop.f32.mrb[0].mxu0
            %v1435 = vadd.f32 0.0, %v1434
            %v1436 = vpop.f32.mrb[0].mxu0
            %v1437 = vadd.f32 0.0, %v1436
            %v1438 = vpop.f32.mrb[0].mxu0
            %v1439 = vadd.f32 0.0, %v1438
            %v1440 = vpop.f32.mrb[0].mxu0
            %v1441 = vadd.f32 0.0, %v1440
            %1442 = vmatprep.mubr.bf16.mxu0 0
            %1443 = vmatmul.mubr.bf16.gmra.mrb[0].mxu0 %v886
            %v1444 = vpop.f32.mrb[0].mxu0
            %v1445 = vadd.f32 0.0, %v1444
            %v1446 = vpop.f32.mrb[0].mxu0
            %v1447 = vadd.f32 0.0, %v1446
            %v1448 = vpop.f32.mrb[0].mxu0
            %v1449 = vadd.f32 0.0, %v1448
            %v1450 = vpop.f32.mrb[0].mxu0
            %v1451 = vadd.f32 0.0, %v1450
            %1452 = vmatprep.mubr.bf16.mxu0 0
            %1453 = vmatmul.mubr.bf16.gmra.mrb[0].mxu0 %v889
            %v1454 = vpop.f32.mrb[0].mxu0
            %v1455 = vadd.f32 0.0, %v1454
            %v1456 = vpop.f32.mrb[0].mxu0
            %v1457 = vadd.f32 0.0, %v1456
            %v1458 = vpop.f32.mrb[0].mxu0
            %v1459 = vadd.f32 0.0, %v1458
            %v1460 = vpop.f32.mrb[0].mxu0
            %v1461 = vadd.f32 0.0, %v1460
            %1462 = vmatprep.mubr.bf16.mxu0 0
            %1463 = vmatmul.mubr.bf16.gmra.mrb[0].mxu0 %v892
            %v1464 = vpop.f32.mrb[0].mxu0
            %v1465 = vadd.f32 0.0, %v1464
            %v1466 = vpop.f32.mrb[0].mxu0
            %v1467 = vadd.f32 0.0, %v1466
            %v1468 = vpop.f32.mrb[0].mxu0
            %v1469 = vadd.f32 0.0, %v1468
            %v1470 = vpop.f32.mrb[0].mxu0
            %v1471 = vadd.f32 0.0, %v1470
            %1472 = vmatprep.mubr.bf16.mxu0 0
            %1473 = vmatmul.mubr.bf16.gmra.mrb[0].mxu0 %v895
            %v1474 = vpop.f32.mrb[0].mxu0
            %v1475 = vadd.f32 0.0, %v1474
            %v1476 = vpop.f32.mrb[0].mxu0
            %v1477 = vadd.f32 0.0, %v1476
            %v1478 = vpop.f32.mrb[0].mxu0
            %v1479 = vadd.f32 0.0, %v1478
            %v1480 = vpop.f32.mrb[0].mxu0
            %v1481 = vadd.f32 0.0, %v1480
            %1482 = vmatprep.mubr.bf16.mxu0 0
            %1483 = vmatmul.mubr.bf16.gmra.mrb[0].mxu0 %v898
            %v1484 = vpop.f32.mrb[0].mxu0
            %v1485 = vadd.f32 0.0, %v1484
            %v1486 = vpop.f32.mrb[0].mxu0
            %v1487 = vadd.f32 0.0, %v1486
            %v1488 = vpop.f32.mrb[0].mxu0
            %v1489 = vadd.f32 0.0, %v1488
            %v1490 = vpop.f32.mrb[0].mxu0
            %v1491 = vadd.f32 0.0, %v1490
            %1492 = vmatprep.mubr.bf16.mxu0 0
            %1493 = vmatmul.mubr.bf16.gmra.mrb[0].mxu0 %v901
            %v1494 = vpop.f32.mrb[0].mxu0
            %v1495 = vadd.f32 0.0, %v1494
            %v1496 = vpop.f32.mrb[0].mxu0
            %v1497 = vadd.f32 0.0, %v1496
            %v1498 = vpop.f32.mrb[0].mxu0
            %v1499 = vadd.f32 0.0, %v1498
            %v1500 = vpop.f32.mrb[0].mxu0
            %v1501 = vadd.f32 0.0, %v1500
            %1502 = vmatprep.mubr.bf16.mxu0 0
            %1503 = vmatmul.mubr.bf16.gmra.mrb[0].mxu0 %v904
            %v1504 = vpop.f32.mrb[0].mxu0
            %v1505 = vadd.f32 0.0, %v1504
            %v1506 = vpop.f32.mrb[0].mxu0
            %v1507 = vadd.f32 0.0, %v1506
            %v1508 = vpop.f32.mrb[0].mxu0
            %v1509 = vadd.f32 0.0, %v1508
            %v1510 = vpop.f32.mrb[0].mxu0
            %v1511 = vadd.f32 0.0, %v1510
            %1512 = vmatprep.mubr.bf16.mxu0 0
            %1513 = vmatmul.mubr.bf16.gmra.mrb[0].mxu0 %v907
            %v1514 = vpop.f32.mrb[0].mxu0
            %v1515 = vadd.f32 0.0, %v1514
            %v1516 = vpop.f32.mrb[0].mxu0
            %v1517 = vadd.f32 0.0, %v1516
            %v1518 = vpop.f32.mrb[0].mxu0
            %v1519 = vadd.f32 0.0, %v1518
            %v1520 = vpop.f32.mrb[0].mxu0
            %v1521 = vadd.f32 0.0, %v1520
            %1522 = vmatprep.mubr.bf16.mxu0 0
            %1523 = vmatmul.mubr.bf16.gmra.mrb[0].mxu0 %v910
            %v1524 = vpop.f32.mrb[0].mxu0
            %v1525 = vadd.f32 0.0, %v1524
            %v1526 = vpop.f32.mrb[0].mxu0
            %v1527 = vadd.f32 0.0, %v1526
            %v1528 = vpop.f32.mrb[0].mxu0
            %v1529 = vadd.f32 0.0, %v1528
            %v1530 = vpop.f32.mrb[0].mxu0
            %v1531 = vadd.f32 0.0, %v1530
            %1532 = vmatprep.mubr.bf16.mxu0 0
            %1533 = vmatmul.mubr.bf16.gmra.mrb[0].mxu0 %v913
            %v1534 = vpop.f32.mrb[0].mxu0
            %v1535 = vadd.f32 0.0, %v1534
            %v1536 = vpop.f32.mrb[0].mxu0
            %v1537 = vadd.f32 0.0, %v1536
            %v1538 = vpop.f32.mrb[0].mxu0
            %v1539 = vadd.f32 0.0, %v1538
            %v1540 = vpop.f32.mrb[0].mxu0
            %v1541 = vadd.f32 0.0, %v1540
            %1542 = vmatprep.mubr.bf16.mxu0 0
            %1543 = vmatmul.mubr.bf16.gmra.mrb[0].mxu0 %v916
            %v1544 = vpop.f32.mrb[0].mxu0
            %v1545 = vadd.f32 0.0, %v1544
            %v1546 = vpop.f32.mrb[0].mxu0
            %v1547 = vadd.f32 0.0, %v1546
            %v1548 = vpop.f32.mrb[0].mxu0
            %v1549 = vadd.f32 0.0, %v1548
            %v1550 = vpop.f32.mrb[0].mxu0
            %v1551 = vadd.f32 0.0, %v1550
            %1552 = vmatprep.mubr.bf16.mxu0 0
            %1553 = vmatmul.mubr.bf16.gmra.mrb[0].mxu0 %v919
            %v1554 = vpop.f32.mrb[0].mxu0
            %v1555 = vadd.f32 0.0, %v1554
            %v1556 = vpop.f32.mrb[0].mxu0
            %v1557 = vadd.f32 0.0, %v1556
            %v1558 = vpop.f32.mrb[0].mxu0
            %v1559 = vadd.f32 0.0, %v1558
            %v1560 = vpop.f32.mrb[0].mxu0
            %v1561 = vadd.f32 0.0, %v1560
            %1562 = vmatprep.mubr.bf16.mxu0 0
            %1563 = vmatmul.mubr.bf16.gmra.mrb[0].mxu0 %v922
            %v1564 = vpop.f32.mrb[0].mxu0
            %v1565 = vadd.f32 0.0, %v1564
            %v1566 = vpop.f32.mrb[0].mxu0
            %v1567 = vadd.f32 0.0, %v1566
            %v1568 = vpop.f32.mrb[0].mxu0
            %v1569 = vadd.f32 0.0, %v1568
            %v1570 = vpop.f32.mrb[0].mxu0
            %v1571 = vadd.f32 0.0, %v1570
            %1572 = vmatprep.mubr.bf16.mxu0 0
            %1573 = vmatmul.mubr.bf16.gmra.mrb[0].mxu0 %v925
            %v1574 = vpop.f32.mrb[0].mxu0
            %v1575 = vadd.f32 0.0, %v1574
            %v1576 = vpop.f32.mrb[0].mxu0
            %v1577 = vadd.f32 0.0, %v1576
            %v1578 = vpop.f32.mrb[0].mxu0
            %v1579 = vadd.f32 0.0, %v1578
            %v1580 = vpop.f32.mrb[0].mxu0
            %v1581 = vadd.f32 0.0, %v1580
            %1582 = vmatprep.mubr.bf16.mxu0 0
            %1583 = vmatmul.mubr.bf16.gmra.mrb[0].mxu0 %v928
            %v1584 = vpop.f32.mrb[0].mxu0
            %v1585 = vadd.f32 0.0, %v1584
            %v1586 = vpop.f32.mrb[0].mxu0
            %v1587 = vadd.f32 0.0, %v1586
            %v1588 = vpop.f32.mrb[0].mxu0
            %v1589 = vadd.f32 0.0, %v1588
            %v1590 = vpop.f32.mrb[0].mxu0
            %v1591 = vadd.f32 0.0, %v1590
            %1592 = vmatprep.mubr.bf16.mxu0 0
            %1593 = vmatmul.mubr.bf16.gmra.mrb[0].mxu0 %v931
            %v1594 = vpop.f32.mrb[0].mxu0
            %v1595 = vadd.f32 0.0, %v1594
            %v1596 = vpop.f32.mrb[0].mxu0
            %v1597 = vadd.f32 0.0, %v1596
            %v1598 = vpop.f32.mrb[0].mxu0
            %v1599 = vadd.f32 0.0, %v1598
            %v1600 = vpop.f32.mrb[0].mxu0
            %v1601 = vadd.f32 0.0, %v1600
            %1602 = vmatprep.mubr.bf16.mxu0 0
            %1603 = vmatmul.mubr.bf16.gmra.mrb[0].mxu0 %v934
            %v1604 = vpop.f32.mrb[0].mxu0
            %v1605 = vadd.f32 0.0, %v1604
            %v1606 = vpop.f32.mrb[0].mxu0
            %v1607 = vadd.f32 0.0, %v1606
            %v1608 = vpop.f32.mrb[0].mxu0
            %v1609 = vadd.f32 0.0, %v1608
            %v1610 = vpop.f32.mrb[0].mxu0
            %v1611 = vadd.f32 0.0, %v1610
            %1612 = vmatprep.mubr.bf16.mxu0 0
            %1613 = vmatmul.mubr.bf16.gmra.mrb[0].mxu0 %v937
            %v1614 = vpop.f32.mrb[0].mxu0
            %v1615 = vadd.f32 0.0, %v1614
            %v1616 = vpop.f32.mrb[0].mxu0
            %v1617 = vadd.f32 0.0, %v1616
            %v1618 = vpop.f32.mrb[0].mxu0
            %v1619 = vadd.f32 0.0, %v1618
            %v1620 = vpop.f32.mrb[0].mxu0
            %v1621 = vadd.f32 0.0, %v1620
            %1622 = vmatprep.mubr.bf16.mxu0 0
            %1623 = vmatmul.mubr.bf16.gmra.mrb[0].mxu0 %v940
            %v1624 = vpop.f32.mrb[0].mxu0
            %v1625 = vadd.f32 0.0, %v1624
            %v1626 = vpop.f32.mrb[0].mxu0
            %v1627 = vadd.f32 0.0, %v1626
            %v1628 = vpop.f32.mrb[0].mxu0
            %v1629 = vadd.f32 0.0, %v1628
            %v1630 = vpop.f32.mrb[0].mxu0
            %v1631 = vadd.f32 0.0, %v1630
            %1632 = vmatprep.mubr.bf16.mxu0 0
            %1633 = vmatmul.mubr.bf16.gmra.mrb[0].mxu0 %v943
            %v1634 = vpop.f32.mrb[0].mxu0
            %v1635 = vadd.f32 0.0, %v1634
            %v1636 = vpop.f32.mrb[0].mxu0
            %v1637 = vadd.f32 0.0, %v1636
            %v1638 = vpop.f32.mrb[0].mxu0
            %v1639 = vadd.f32 0.0, %v1638
            %v1640 = vpop.f32.mrb[0].mxu0
            %v1641 = vadd.f32 0.0, %v1640
            %1642 = vmatprep.mubr.bf16.mxu0 0
            %1643 = vmatmul.mubr.bf16.gmra.mrb[0].mxu0 %v946
            %v1644 = vpop.f32.mrb[0].mxu0
            %v1645 = vadd.f32 0.0, %v1644
            %v1646 = vpop.f32.mrb[0].mxu0
            %v1647 = vadd.f32 0.0, %v1646
            %v1648 = vpop.f32.mrb[0].mxu0
            %v1649 = vadd.f32 0.0, %v1648
            %v1650 = vpop.f32.mrb[0].mxu0
            %v1651 = vadd.f32 0.0, %v1650
            %1652 = vmatprep.mubr.bf16.mxu0 0
            %1653 = vmatmul.mubr.bf16.gmra.mrb[0].mxu0 %v949
            %v1654 = vpop.f32.mrb[0].mxu0
            %v1655 = vadd.f32 0.0, %v1654
            %v1656 = vpop.f32.mrb[0].mxu0
            %v1657 = vadd.f32 0.0, %v1656
            %v1658 = vpop.f32.mrb[0].mxu0
            %v1659 = vadd.f32 0.0, %v1658
            %v1660 = vpop.f32.mrb[0].mxu0
            %v1661 = vadd.f32 0.0, %v1660
            %1662 = vmatprep.mubr.bf16.mxu0 0
            %1663 = vmatmul.mubr.bf16.gmra.mrb[0].mxu0 %v952
            %v1664 = vpop.f32.mrb[0].mxu0
            %v1665 = vadd.f32 0.0, %v1664
            %v1666 = vpop.f32.mrb[0].mxu0
            %v1667 = vadd.f32 0.0, %v1666
            %v1668 = vpop.f32.mrb[0].mxu0
            %v1669 = vadd.f32 0.0, %v1668
            %v1670 = vpop.f32.mrb[0].mxu0
            %v1671 = vadd.f32 0.0, %v1670
            %1672 = vdwg.mxu0
            %v1673 = vmax.f32 %v1002, %v1006
            %v1674 = vmax.f32 %v1673, %v1012
            %v1675 = vmax.f32 %v1674, %v1016
            %v1676 = vmax.f32 %v1675, %v1022
            %v1677 = vmax.f32 %v1676, %v1026
            %v1678 = vmax.f32 %v1677, %v1032
            %v1679 = vmax.f32 %v1678, %v1036
            %v1680 = vmax.f32 %v1679, %v1042
            %v1681 = vmax.f32 %v1680, %v1046
            %v1682 = vmax.f32 %v1681, %v1052
            %v1683 = vmax.f32 %v1682, %v1056
            %v1684 = vmax.f32 %v1683, %v1062
            %v1685 = vmax.f32 %v1684, %v1066
            %v1686 = vmax.f32 %v1685, %v1072
            %v1687 = vmax.f32 %v1686, %v1076
            %v1688 = vmax.f32 %v1687, %v1082
            %v1689 = vmax.f32 %v1688, %v1086
            %v1690 = vmax.f32 %v1689, %v1092
            %v1691 = vmax.f32 %v1690, %v1096
            %v1692 = vmax.f32 %v1691, %v1102
            %v1693 = vmax.f32 %v1692, %v1106
            %v1694 = vmax.f32 %v1693, %v1112
            %v1695 = vmax.f32 %v1694, %v1116
            %v1696 = vmax.f32 %v1695, %v1122
            %v1697 = vmax.f32 %v1696, %v1126
            %v1698 = vmax.f32 %v1697, %v1132
            %v1699 = vmax.f32 %v1698, %v1136
            %v1700 = vmax.f32 %v1699, %v1142
            %v1701 = vmax.f32 %v1700, %v1146
            %v1702 = vmax.f32 %v1701, %v1152
            %v1703 = vmax.f32 %v1702, %v1156
            %v1704 = vmax.f32 %v1703, %v1162
            %v1705 = vmax.f32 %v1704, %v1166
            %v1706 = vmax.f32 %v1705, %v1172
            %v1707 = vmax.f32 %v1706, %v1176
            %v1708 = vmax.f32 %v1707, %v1182
            %v1709 = vmax.f32 %v1708, %v1186
            %v1710 = vmax.f32 %v1709, %v1192
            %v1711 = vmax.f32 %v1710, %v1196
            %v1712 = vmax.f32 %v1711, %v1202
            %v1713 = vmax.f32 %v1712, %v1206
            %v1714 = vmax.f32 %v1713, %v1212
            %v1715 = vmax.f32 %v1714, %v1216
            %v1716 = vmax.f32 %v1715, %v1222
            %v1717 = vmax.f32 %v1716, %v1226
            %v1718 = vmax.f32 %v1717, %v1232
            %v1719 = vmax.f32 %v1718, %v1236
            %v1720 = vmax.f32 %v1719, %v1242
            %v1721 = vmax.f32 %v1720, %v1246
            %v1722 = vmax.f32 %v1721, %v1252
            %v1723 = vmax.f32 %v1722, %v1256
            %v1724 = vmax.f32 %v1723, %v1262
            %v1725 = vmax.f32 %v1724, %v1266
            %v1726 = vmax.f32 %v1725, %v1272
            %v1727 = vmax.f32 %v1726, %v1276
            %v1728 = vmax.f32 %v1727, %v1282
            %v1729 = vmax.f32 %v1728, %v1286
            %v1730 = vmax.f32 %v1729, %v1292
            %v1731 = vmax.f32 %v1730, %v1296
            %v1732 = vmax.f32 %v1731, %v1302
            %v1733 = vmax.f32 %v1732, %v1306
            %v1734 = vmax.f32 %v1733, %v1312
            %v1735 = vmax.f32 %v1734, %v1316
            %v1736 = vrot.slane %v1735, 4
            %v1737 = vmax.f32 %v1735, %v1736
            %v1738 = vrot.slane %v1737, 2
            %v1739 = vmax.f32 %v1737, %v1738
            %v1740 = vrot.slane %v1739, 1
            %v1741 = vmax.f32 %v1739, %v1740
            %v1742 = vmax.f32 %v1004, %v1008
            %v1743 = vmax.f32 %v1742, %v1014
            %v1744 = vmax.f32 %v1743, %v1018
            %v1745 = vmax.f32 %v1744, %v1024
            %v1746 = vmax.f32 %v1745, %v1028
            %v1747 = vmax.f32 %v1746, %v1034
            %v1748 = vmax.f32 %v1747, %v1038
            %v1749 = vmax.f32 %v1748, %v1044
            %v1750 = vmax.f32 %v1749, %v1048
            %v1751 = vmax.f32 %v1750, %v1054
            %v1752 = vmax.f32 %v1751, %v1058
            %v1753 = vmax.f32 %v1752, %v1064
            %v1754 = vmax.f32 %v1753, %v1068
            %v1755 = vmax.f32 %v1754, %v1074
            %v1756 = vmax.f32 %v1755, %v1078
            %v1757 = vmax.f32 %v1756, %v1084
            %v1758 = vmax.f32 %v1757, %v1088
            %v1759 = vmax.f32 %v1758, %v1094
            %v1760 = vmax.f32 %v1759, %v1098
            %v1761 = vmax.f32 %v1760, %v1104
            %v1762 = vmax.f32 %v1761, %v1108
            %v1763 = vmax.f32 %v1762, %v1114
            %v1764 = vmax.f32 %v1763, %v1118
            %v1765 = vmax.f32 %v1764, %v1124
            %v1766 = vmax.f32 %v1765, %v1128
            %v1767 = vmax.f32 %v1766, %v1134
            %v1768 = vmax.f32 %v1767, %v1138
            %v1769 = vmax.f32 %v1768, %v1144
            %v1770 = vmax.f32 %v1769, %v1148
            %v1771 = vmax.f32 %v1770, %v1154
            %v1772 = vmax.f32 %v1771, %v1158
            %v1773 = vmax.f32 %v1772, %v1164
            %v1774 = vmax.f32 %v1773, %v1168
            %v1775 = vmax.f32 %v1774, %v1174
            %v1776 = vmax.f32 %v1775, %v1178
            %v1777 = vmax.f32 %v1776, %v1184
            %v1778 = vmax.f32 %v1777, %v1188
            %v1779 = vmax.f32 %v1778, %v1194
            %v1780 = vmax.f32 %v1779, %v1198
            %v1781 = vmax.f32 %v1780, %v1204
            %v1782 = vmax.f32 %v1781, %v1208
            %v1783 = vmax.f32 %v1782, %v1214
            %v1784 = vmax.f32 %v1783, %v1218
            %v1785 = vmax.f32 %v1784, %v1224
            %v1786 = vmax.f32 %v1785, %v1228
            %v1787 = vmax.f32 %v1786, %v1234
            %v1788 = vmax.f32 %v1787, %v1238
            %v1789 = vmax.f32 %v1788, %v1244
            %v1790 = vmax.f32 %v1789, %v1248
            %v1791 = vmax.f32 %v1790, %v1254
            %v1792 = vmax.f32 %v1791, %v1258
            %v1793 = vmax.f32 %v1792, %v1264
            %v1794 = vmax.f32 %v1793, %v1268
            %v1795 = vmax.f32 %v1794, %v1274
            %v1796 = vmax.f32 %v1795, %v1278
            %v1797 = vmax.f32 %v1796, %v1284
            %v1798 = vmax.f32 %v1797, %v1288
            %v1799 = vmax.f32 %v1798, %v1294
            %v1800 = vmax.f32 %v1799, %v1298
            %v1801 = vmax.f32 %v1800, %v1304
            %v1802 = vmax.f32 %v1801, %v1308
            %v1803 = vmax.f32 %v1802, %v1314
            %v1804 = vmax.f32 %v1803, %v1318
            %v1805 = vrot.slane %v1804, 4
            %v1806 = vmax.f32 %v1804, %v1805
            %v1807 = vrot.slane %v1806, 2
            %v1808 = vmax.f32 %v1806, %v1807
            %v1809 = vrot.slane %v1808, 1
            %v1810 = vmax.f32 %v1808, %v1809
            %v1811 = vmax.f32 %v1355, %v1359
            %v1812 = vmax.f32 %v1811, %v1365
            %v1813 = vmax.f32 %v1812, %v1369
            %v1814 = vmax.f32 %v1813, %v1375
            %v1815 = vmax.f32 %v1814, %v1379
            %v1816 = vmax.f32 %v1815, %v1385
            %v1817 = vmax.f32 %v1816, %v1389
            %v1818 = vmax.f32 %v1817, %v1395
            %v1819 = vmax.f32 %v1818, %v1399
            %v1820 = vmax.f32 %v1819, %v1405
            %v1821 = vmax.f32 %v1820, %v1409
            %v1822 = vmax.f32 %v1821, %v1415
            %v1823 = vmax.f32 %v1822, %v1419
            %v1824 = vmax.f32 %v1823, %v1425
            %v1825 = vmax.f32 %v1824, %v1429
            %v1826 = vmax.f32 %v1825, %v1435
            %v1827 = vmax.f32 %v1826, %v1439
            %v1828 = vmax.f32 %v1827, %v1445
            %v1829 = vmax.f32 %v1828, %v1449
            %v1830 = vmax.f32 %v1829, %v1455
            %v1831 = vmax.f32 %v1830, %v1459
            %v1832 = vmax.f32 %v1831, %v1465
            %v1833 = vmax.f32 %v1832, %v1469
            %v1834 = vmax.f32 %v1833, %v1475
            %v1835 = vmax.f32 %v1834, %v1479
            %v1836 = vmax.f32 %v1835, %v1485
            %v1837 = vmax.f32 %v1836, %v1489
            %v1838 = vmax.f32 %v1837, %v1495
            %v1839 = vmax.f32 %v1838, %v1499
            %v1840 = vmax.f32 %v1839, %v1505
            %v1841 = vmax.f32 %v1840, %v1509
            %v1842 = vmax.f32 %v1841, %v1515
            %v1843 = vmax.f32 %v1842, %v1519
            %v1844 = vmax.f32 %v1843, %v1525
            %v1845 = vmax.f32 %v1844, %v1529
            %v1846 = vmax.f32 %v1845, %v1535
            %v1847 = vmax.f32 %v1846, %v1539
            %v1848 = vmax.f32 %v1847, %v1545
            %v1849 = vmax.f32 %v1848, %v1549
            %v1850 = vmax.f32 %v1849, %v1555
            %v1851 = vmax.f32 %v1850, %v1559
            %v1852 = vmax.f32 %v1851, %v1565
            %v1853 = vmax.f32 %v1852, %v1569
            %v1854 = vmax.f32 %v1853, %v1575
            %v1855 = vmax.f32 %v1854, %v1579
            %v1856 = vmax.f32 %v1855, %v1585
            %v1857 = vmax.f32 %v1856, %v1589
            %v1858 = vmax.f32 %v1857, %v1595
            %v1859 = vmax.f32 %v1858, %v1599
            %v1860 = vmax.f32 %v1859, %v1605
            %v1861 = vmax.f32 %v1860, %v1609
            %v1862 = vmax.f32 %v1861, %v1615
            %v1863 = vmax.f32 %v1862, %v1619
            %v1864 = vmax.f32 %v1863, %v1625
            %v1865 = vmax.f32 %v1864, %v1629
            %v1866 = vmax.f32 %v1865, %v1635
            %v1867 = vmax.f32 %v1866, %v1639
            %v1868 = vmax.f32 %v1867, %v1645
            %v1869 = vmax.f32 %v1868, %v1649
            %v1870 = vmax.f32 %v1869, %v1655
            %v1871 = vmax.f32 %v1870, %v1659
            %v1872 = vmax.f32 %v1871, %v1665
            %v1873 = vmax.f32 %v1872, %v1669
            %v1874 = vrot.slane %v1873, 4
            %v1875 = vmax.f32 %v1873, %v1874
            %v1876 = vrot.slane %v1875, 2
            %v1877 = vmax.f32 %v1875, %v1876
            %v1878 = vrot.slane %v1877, 1
            %v1879 = vmax.f32 %v1877, %v1878
            %v1880 = vmax.f32 %v1357, %v1361
            %v1881 = vmax.f32 %v1880, %v1367
            %v1882 = vmax.f32 %v1881, %v1371
            %v1883 = vmax.f32 %v1882, %v1377
            %v1884 = vmax.f32 %v1883, %v1381
            %v1885 = vmax.f32 %v1884, %v1387
            %v1886 = vmax.f32 %v1885, %v1391
            %v1887 = vmax.f32 %v1886, %v1397
            %v1888 = vmax.f32 %v1887, %v1401
            %v1889 = vmax.f32 %v1888, %v1407
            %v1890 = vmax.f32 %v1889, %v1411
            %v1891 = vmax.f32 %v1890, %v1417
            %v1892 = vmax.f32 %v1891, %v1421
            %v1893 = vmax.f32 %v1892, %v1427
            %v1894 = vmax.f32 %v1893, %v1431
            %v1895 = vmax.f32 %v1894, %v1437
            %v1896 = vmax.f32 %v1895, %v1441
            %v1897 = vmax.f32 %v1896, %v1447
            %v1898 = vmax.f32 %v1897, %v1451
            %v1899 = vmax.f32 %v1898, %v1457
            %v1900 = vmax.f32 %v1899, %v1461
            %v1901 = vmax.f32 %v1900, %v1467
            %v1902 = vmax.f32 %v1901, %v1471
            %v1903 = vmax.f32 %v1902, %v1477
            %v1904 = vmax.f32 %v1903, %v1481
            %v1905 = vmax.f32 %v1904, %v1487
            %v1906 = vmax.f32 %v1905, %v1491
            %v1907 = vmax.f32 %v1906, %v1497
            %v1908 = vmax.f32 %v1907, %v1501
            %v1909 = vmax.f32 %v1908, %v1507
            %v1910 = vmax.f32 %v1909, %v1511
            %v1911 = vmax.f32 %v1910, %v1517
            %v1912 = vmax.f32 %v1911, %v1521
            %v1913 = vmax.f32 %v1912, %v1527
            %v1914 = vmax.f32 %v1913, %v1531
            %v1915 = vmax.f32 %v1914, %v1537
            %v1916 = vmax.f32 %v1915, %v1541
            %v1917 = vmax.f32 %v1916, %v1547
            %v1918 = vmax.f32 %v1917, %v1551
            %v1919 = vmax.f32 %v1918, %v1557
            %v1920 = vmax.f32 %v1919, %v1561
            %v1921 = vmax.f32 %v1920, %v1567
            %v1922 = vmax.f32 %v1921, %v1571
            %v1923 = vmax.f32 %v1922, %v1577
            %v1924 = vmax.f32 %v1923, %v1581
            %v1925 = vmax.f32 %v1924, %v1587
            %v1926 = vmax.f32 %v1925, %v1591
            %v1927 = vmax.f32 %v1926, %v1597
            %v1928 = vmax.f32 %v1927, %v1601
            %v1929 = vmax.f32 %v1928, %v1607
            %v1930 = vmax.f32 %v1929, %v1611
            %v1931 = vmax.f32 %v1930, %v1617
            %v1932 = vmax.f32 %v1931, %v1621
            %v1933 = vmax.f32 %v1932, %v1627
            %v1934 = vmax.f32 %v1933, %v1631
            %v1935 = vmax.f32 %v1934, %v1637
            %v1936 = vmax.f32 %v1935, %v1641
            %v1937 = vmax.f32 %v1936, %v1647
            %v1938 = vmax.f32 %v1937, %v1651
            %v1939 = vmax.f32 %v1938, %v1657
            %v1940 = vmax.f32 %v1939, %v1661
            %v1941 = vmax.f32 %v1940, %v1667
            %v1942 = vmax.f32 %v1941, %v1671
            %v1943 = vrot.slane %v1942, 4
            %v1944 = vmax.f32 %v1942, %v1943
            %v1945 = vrot.slane %v1944, 2
            %v1946 = vmax.f32 %v1944, %v1945
            %v1947 = vrot.slane %v1946, 1
            %v1948 = vmax.f32 %v1946, %v1947
            %v1949 = vsub.f32 %v1002, %v1741
            %v1950 = vsub.f32 %v1004, %v1810
            %v1951 = vsub.f32 %v1355, %v1879
            %v1952 = vsub.f32 %v1357, %v1948
            %v1953 = vsub.f32 %v1006, %v1741
            %v1954 = vsub.f32 %v1008, %v1810
            %v1955 = vsub.f32 %v1359, %v1879
            %v1956 = vsub.f32 %v1361, %v1948
            %v1957 = vsub.f32 %v1012, %v1741
            %v1958 = vsub.f32 %v1014, %v1810
            %v1959 = vsub.f32 %v1365, %v1879
            %v1960 = vsub.f32 %v1367, %v1948
            %v1961 = vsub.f32 %v1016, %v1741
            %v1962 = vsub.f32 %v1018, %v1810
            %v1963 = vsub.f32 %v1369, %v1879
            %v1964 = vsub.f32 %v1371, %v1948
            %v1965 = vsub.f32 %v1022, %v1741
            %v1966 = vsub.f32 %v1024, %v1810
            %v1967 = vsub.f32 %v1375, %v1879
            %v1968 = vsub.f32 %v1377, %v1948
            %v1969 = vsub.f32 %v1026, %v1741
            %v1970 = vsub.f32 %v1028, %v1810
            %v1971 = vsub.f32 %v1379, %v1879
            %v1972 = vsub.f32 %v1381, %v1948
            %v1973 = vsub.f32 %v1032, %v1741
            %v1974 = vsub.f32 %v1034, %v1810
            %v1975 = vsub.f32 %v1385, %v1879
            %v1976 = vsub.f32 %v1387, %v1948
            %v1977 = vsub.f32 %v1036, %v1741
            %v1978 = vsub.f32 %v1038, %v1810
            %v1979 = vsub.f32 %v1389, %v1879
            %v1980 = vsub.f32 %v1391, %v1948
            %v1981 = vsub.f32 %v1042, %v1741
            %v1982 = vsub.f32 %v1044, %v1810
            %v1983 = vsub.f32 %v1395, %v1879
            %v1984 = vsub.f32 %v1397, %v1948
            %v1985 = vsub.f32 %v1046, %v1741
            %v1986 = vsub.f32 %v1048, %v1810
            %v1987 = vsub.f32 %v1399, %v1879
            %v1988 = vsub.f32 %v1401, %v1948
            %v1989 = vsub.f32 %v1052, %v1741
            %v1990 = vsub.f32 %v1054, %v1810
            %v1991 = vsub.f32 %v1405, %v1879
            %v1992 = vsub.f32 %v1407, %v1948
            %v1993 = vsub.f32 %v1056, %v1741
            %v1994 = vsub.f32 %v1058, %v1810
            %v1995 = vsub.f32 %v1409, %v1879
            %v1996 = vsub.f32 %v1411, %v1948
            %v1997 = vsub.f32 %v1062, %v1741
            %v1998 = vsub.f32 %v1064, %v1810
            %v1999 = vsub.f32 %v1415, %v1879
            %v2000 = vsub.f32 %v1417, %v1948
            %v2001 = vsub.f32 %v1066, %v1741
            %v2002 = vsub.f32 %v1068, %v1810
            %v2003 = vsub.f32 %v1419, %v1879
            %v2004 = vsub.f32 %v1421, %v1948
            %v2005 = vsub.f32 %v1072, %v1741
            %v2006 = vsub.f32 %v1074, %v1810
            %v2007 = vsub.f32 %v1425, %v1879
            %v2008 = vsub.f32 %v1427, %v1948
            %v2009 = vsub.f32 %v1076, %v1741
            %v2010 = vsub.f32 %v1078, %v1810
            %v2011 = vsub.f32 %v1429, %v1879
            %v2012 = vsub.f32 %v1431, %v1948
            %v2013 = vsub.f32 %v1082, %v1741
            %v2014 = vsub.f32 %v1084, %v1810
            %v2015 = vsub.f32 %v1435, %v1879
            %v2016 = vsub.f32 %v1437, %v1948
            %v2017 = vsub.f32 %v1086, %v1741
            %v2018 = vsub.f32 %v1088, %v1810
            %v2019 = vsub.f32 %v1439, %v1879
            %v2020 = vsub.f32 %v1441, %v1948
            %v2021 = vsub.f32 %v1092, %v1741
            %v2022 = vsub.f32 %v1094, %v1810
            %v2023 = vsub.f32 %v1445, %v1879
            %v2024 = vsub.f32 %v1447, %v1948
            %v2025 = vsub.f32 %v1096, %v1741
            %v2026 = vsub.f32 %v1098, %v1810
            %v2027 = vsub.f32 %v1449, %v1879
            %v2028 = vsub.f32 %v1451, %v1948
            %v2029 = vsub.f32 %v1102, %v1741
            %v2030 = vsub.f32 %v1104, %v1810
            %v2031 = vsub.f32 %v1455, %v1879
            %v2032 = vsub.f32 %v1457, %v1948
            %v2033 = vsub.f32 %v1106, %v1741
            %v2034 = vsub.f32 %v1108, %v1810
            %v2035 = vsub.f32 %v1459, %v1879
            %v2036 = vsub.f32 %v1461, %v1948
            %v2037 = vsub.f32 %v1112, %v1741
            %v2038 = vsub.f32 %v1114, %v1810
            %v2039 = vsub.f32 %v1465, %v1879
            %v2040 = vsub.f32 %v1467, %v1948
            %v2041 = vsub.f32 %v1116, %v1741
            %v2042 = vsub.f32 %v1118, %v1810
            %v2043 = vsub.f32 %v1469, %v1879
            %v2044 = vsub.f32 %v1471, %v1948
            %v2045 = vsub.f32 %v1122, %v1741
            %v2046 = vsub.f32 %v1124, %v1810
            %v2047 = vsub.f32 %v1475, %v1879
            %v2048 = vsub.f32 %v1477, %v1948
            %v2049 = vsub.f32 %v1126, %v1741
            %v2050 = vsub.f32 %v1128, %v1810
            %v2051 = vsub.f32 %v1479, %v1879
            %v2052 = vsub.f32 %v1481, %v1948
            %v2053 = vsub.f32 %v1132, %v1741
            %v2054 = vsub.f32 %v1134, %v1810
            %v2055 = vsub.f32 %v1485, %v1879
            %v2056 = vsub.f32 %v1487, %v1948
            %v2057 = vsub.f32 %v1136, %v1741
            %v2058 = vsub.f32 %v1138, %v1810
            %v2059 = vsub.f32 %v1489, %v1879
            %v2060 = vsub.f32 %v1491, %v1948
            %v2061 = vsub.f32 %v1142, %v1741
            %v2062 = vsub.f32 %v1144, %v1810
            %v2063 = vsub.f32 %v1495, %v1879
            %v2064 = vsub.f32 %v1497, %v1948
            %v2065 = vsub.f32 %v1146, %v1741
            %v2066 = vsub.f32 %v1148, %v1810
            %v2067 = vsub.f32 %v1499, %v1879
            %v2068 = vsub.f32 %v1501, %v1948
            %v2069 = vsub.f32 %v1152, %v1741
            %v2070 = vsub.f32 %v1154, %v1810
            %v2071 = vsub.f32 %v1505, %v1879
            %v2072 = vsub.f32 %v1507, %v1948
            %v2073 = vsub.f32 %v1156, %v1741
            %v2074 = vsub.f32 %v1158, %v1810
            %v2075 = vsub.f32 %v1509, %v1879
            %v2076 = vsub.f32 %v1511, %v1948
            %v2077 = vsub.f32 %v1162, %v1741
            %v2078 = vsub.f32 %v1164, %v1810
            %v2079 = vsub.f32 %v1515, %v1879
            %v2080 = vsub.f32 %v1517, %v1948
            %v2081 = vsub.f32 %v1166, %v1741
            %v2082 = vsub.f32 %v1168, %v1810
            %v2083 = vsub.f32 %v1519, %v1879
            %v2084 = vsub.f32 %v1521, %v1948
            %v2085 = vsub.f32 %v1172, %v1741
            %v2086 = vsub.f32 %v1174, %v1810
            %v2087 = vsub.f32 %v1525, %v1879
            %v2088 = vsub.f32 %v1527, %v1948
            %v2089 = vsub.f32 %v1176, %v1741
            %v2090 = vsub.f32 %v1178, %v1810
            %v2091 = vsub.f32 %v1529, %v1879
            %v2092 = vsub.f32 %v1531, %v1948
            %v2093 = vsub.f32 %v1182, %v1741
            %v2094 = vsub.f32 %v1184, %v1810
            %v2095 = vsub.f32 %v1535, %v1879
            %v2096 = vsub.f32 %v1537, %v1948
            %v2097 = vsub.f32 %v1186, %v1741
            %v2098 = vsub.f32 %v1188, %v1810
            %v2099 = vsub.f32 %v1539, %v1879
            %v2100 = vsub.f32 %v1541, %v1948
            %v2101 = vsub.f32 %v1192, %v1741
            %v2102 = vsub.f32 %v1194, %v1810
            %v2103 = vsub.f32 %v1545, %v1879
            %v2104 = vsub.f32 %v1547, %v1948
            %v2105 = vsub.f32 %v1196, %v1741
            %v2106 = vsub.f32 %v1198, %v1810
            %v2107 = vsub.f32 %v1549, %v1879
            %v2108 = vsub.f32 %v1551, %v1948
            %v2109 = vsub.f32 %v1202, %v1741
            %v2110 = vsub.f32 %v1204, %v1810
            %v2111 = vsub.f32 %v1555, %v1879
            %v2112 = vsub.f32 %v1557, %v1948
            %v2113 = vsub.f32 %v1206, %v1741
            %v2114 = vsub.f32 %v1208, %v1810
            %v2115 = vsub.f32 %v1559, %v1879
            %v2116 = vsub.f32 %v1561, %v1948
            %v2117 = vsub.f32 %v1212, %v1741
            %v2118 = vsub.f32 %v1214, %v1810
            %v2119 = vsub.f32 %v1565, %v1879
            %v2120 = vsub.f32 %v1567, %v1948
            %v2121 = vsub.f32 %v1216, %v1741
            %v2122 = vsub.f32 %v1218, %v1810
            %v2123 = vsub.f32 %v1569, %v1879
            %v2124 = vsub.f32 %v1571, %v1948
            %v2125 = vsub.f32 %v1222, %v1741
            %v2126 = vsub.f32 %v1224, %v1810
            %v2127 = vsub.f32 %v1575, %v1879
            %v2128 = vsub.f32 %v1577, %v1948
            %v2129 = vsub.f32 %v1226, %v1741
            %v2130 = vsub.f32 %v1228, %v1810
            %v2131 = vsub.f32 %v1579, %v1879
            %v2132 = vsub.f32 %v1581, %v1948
            %v2133 = vsub.f32 %v1232, %v1741
            %v2134 = vsub.f32 %v1234, %v1810
            %v2135 = vsub.f32 %v1585, %v1879
            %v2136 = vsub.f32 %v1587, %v1948
            %v2137 = vsub.f32 %v1236, %v1741
            %v2138 = vsub.f32 %v1238, %v1810
            %v2139 = vsub.f32 %v1589, %v1879
            %v2140 = vsub.f32 %v1591, %v1948
            %v2141 = vsub.f32 %v1242, %v1741
            %v2142 = vsub.f32 %v1244, %v1810
            %v2143 = vsub.f32 %v1595, %v1879
            %v2144 = vsub.f32 %v1597, %v1948
            %v2145 = vsub.f32 %v1246, %v1741
            %v2146 = vsub.f32 %v1248, %v1810
            %v2147 = vsub.f32 %v1599, %v1879
            %v2148 = vsub.f32 %v1601, %v1948
            %v2149 = vsub.f32 %v1252, %v1741
            %v2150 = vsub.f32 %v1254, %v1810
            %v2151 = vsub.f32 %v1605, %v1879
            %v2152 = vsub.f32 %v1607, %v1948
            %v2153 = vsub.f32 %v1256, %v1741
            %v2154 = vsub.f32 %v1258, %v1810
            %v2155 = vsub.f32 %v1609, %v1879
            %v2156 = vsub.f32 %v1611, %v1948
            %v2157 = vsub.f32 %v1262, %v1741
            %v2158 = vsub.f32 %v1264, %v1810
            %v2159 = vsub.f32 %v1615, %v1879
            %v2160 = vsub.f32 %v1617, %v1948
            %v2161 = vsub.f32 %v1266, %v1741
            %v2162 = vsub.f32 %v1268, %v1810
            %v2163 = vsub.f32 %v1619, %v1879
            %v2164 = vsub.f32 %v1621, %v1948
            %v2165 = vsub.f32 %v1272, %v1741
            %v2166 = vsub.f32 %v1274, %v1810
            %v2167 = vsub.f32 %v1625, %v1879
            %v2168 = vsub.f32 %v1627, %v1948
            %v2169 = vsub.f32 %v1276, %v1741
            %v2170 = vsub.f32 %v1278, %v1810
            %v2171 = vsub.f32 %v1629, %v1879
            %v2172 = vsub.f32 %v1631, %v1948
            %v2173 = vsub.f32 %v1282, %v1741
            %v2174 = vsub.f32 %v1284, %v1810
            %v2175 = vsub.f32 %v1635, %v1879
            %v2176 = vsub.f32 %v1637, %v1948
            %v2177 = vsub.f32 %v1286, %v1741
            %v2178 = vsub.f32 %v1288, %v1810
            %v2179 = vsub.f32 %v1639, %v1879
            %v2180 = vsub.f32 %v1641, %v1948
            %v2181 = vsub.f32 %v1292, %v1741
            %v2182 = vsub.f32 %v1294, %v1810
            %v2183 = vsub.f32 %v1645, %v1879
            %v2184 = vsub.f32 %v1647, %v1948
            %v2185 = vsub.f32 %v1296, %v1741
            %v2186 = vsub.f32 %v1298, %v1810
            %v2187 = vsub.f32 %v1649, %v1879
            %v2188 = vsub.f32 %v1651, %v1948
            %v2189 = vsub.f32 %v1302, %v1741
            %v2190 = vsub.f32 %v1304, %v1810
            %v2191 = vsub.f32 %v1655, %v1879
            %v2192 = vsub.f32 %v1657, %v1948
            %v2193 = vsub.f32 %v1306, %v1741
            %v2194 = vsub.f32 %v1308, %v1810
            %v2195 = vsub.f32 %v1659, %v1879
            %v2196 = vsub.f32 %v1661, %v1948
            %v2197 = vsub.f32 %v1312, %v1741
            %v2198 = vsub.f32 %v1314, %v1810
            %v2199 = vsub.f32 %v1665, %v1879
            %v2200 = vsub.f32 %v1667, %v1948
            %v2201 = vsub.f32 %v1316, %v1741
            %v2202 = vsub.f32 %v1318, %v1810
            %v2203 = vsub.f32 %v1669, %v1879
            %v2204 = vsub.f32 %v1671, %v1948
            %v2205 = vmul.f32 %v1949, 1.442695
            %v2206 = vpow.pop %v2205
            %v2207 = vmul.f32 %v1950, 1.442695
            %v2208 = vpow.pop %v2207
            %v2209 = vmul.f32 %v1951, 1.442695
            %v2210 = vpow.pop %v2209
            %v2211 = vmul.f32 %v1952, 1.442695
            %v2212 = vpow.pop %v2211
            %v2213 = vmul.f32 %v1953, 1.442695
            %v2214 = vpow.pop %v2213
            %v2215 = vmul.f32 %v1954, 1.442695
            %v2216 = vpow.pop %v2215
            %v2217 = vmul.f32 %v1955, 1.442695
            %v2218 = vpow.pop %v2217
            %v2219 = vmul.f32 %v1956, 1.442695
            %v2220 = vpow.pop %v2219
            %v2221 = vmul.f32 %v1957, 1.442695
            %v2222 = vpow.pop %v2221
            %v2223 = vmul.f32 %v1958, 1.442695
            %v2224 = vpow.pop %v2223
            %v2225 = vmul.f32 %v1959, 1.442695
            %v2226 = vpow.pop %v2225
            %v2227 = vmul.f32 %v1960, 1.442695
            %v2228 = vpow.pop %v2227
            %v2229 = vmul.f32 %v1961, 1.442695
            %v2230 = vpow.pop %v2229
            %v2231 = vmul.f32 %v1962, 1.442695
            %v2232 = vpow.pop %v2231
            %v2233 = vmul.f32 %v1963, 1.442695
            %v2234 = vpow.pop %v2233
            %v2235 = vmul.f32 %v1964, 1.442695
            %v2236 = vpow.pop %v2235
            %v2237 = vmul.f32 %v1965, 1.442695
            %v2238 = vpow.pop %v2237
            %v2239 = vmul.f32 %v1966, 1.442695
            %v2240 = vpow.pop %v2239
            %v2241 = vmul.f32 %v1967, 1.442695
            %v2242 = vpow.pop %v2241
            %v2243 = vmul.f32 %v1968, 1.442695
            %v2244 = vpow.pop %v2243
            %v2245 = vmul.f32 %v1969, 1.442695
            %v2246 = vpow.pop %v2245
            %v2247 = vmul.f32 %v1970, 1.442695
            %v2248 = vpow.pop %v2247
            %v2249 = vmul.f32 %v1971, 1.442695
            %v2250 = vpow.pop %v2249
            %v2251 = vmul.f32 %v1972, 1.442695
            %v2252 = vpow.pop %v2251
            %v2253 = vmul.f32 %v1973, 1.442695
            %v2254 = vpow.pop %v2253
            %v2255 = vmul.f32 %v1974, 1.442695
            %v2256 = vpow.pop %v2255
            %v2257 = vmul.f32 %v1975, 1.442695
            %v2258 = vpow.pop %v2257
            %v2259 = vmul.f32 %v1976, 1.442695
            %v2260 = vpow.pop %v2259
            %v2261 = vmul.f32 %v1977, 1.442695
            %v2262 = vpow.pop %v2261
            %v2263 = vmul.f32 %v1978, 1.442695
            %v2264 = vpow.pop %v2263
            %v2265 = vmul.f32 %v1979, 1.442695
            %v2266 = vpow.pop %v2265
            %v2267 = vmul.f32 %v1980, 1.442695
            %v2268 = vpow.pop %v2267
            %v2269 = vmul.f32 %v1981, 1.442695
            %v2270 = vpow.pop %v2269
            %v2271 = vmul.f32 %v1982, 1.442695
            %v2272 = vpow.pop %v2271
            %v2273 = vmul.f32 %v1983, 1.442695
            %v2274 = vpow.pop %v2273
            %v2275 = vmul.f32 %v1984, 1.442695
            %v2276 = vpow.pop %v2275
            %v2277 = vmul.f32 %v1985, 1.442695
            %v2278 = vpow.pop %v2277
            %v2279 = vmul.f32 %v1986, 1.442695
            %v2280 = vpow.pop %v2279
            %v2281 = vmul.f32 %v1987, 1.442695
            %v2282 = vpow.pop %v2281
            %v2283 = vmul.f32 %v1988, 1.442695
            %v2284 = vpow.pop %v2283
            %v2285 = vmul.f32 %v1989, 1.442695
            %v2286 = vpow.pop %v2285
            %v2287 = vmul.f32 %v1990, 1.442695
            %v2288 = vpow.pop %v2287
            %v2289 = vmul.f32 %v1991, 1.442695
            %v2290 = vpow.pop %v2289
            %v2291 = vmul.f32 %v1992, 1.442695
            %v2292 = vpow.pop %v2291
            %v2293 = vmul.f32 %v1993, 1.442695
            %v2294 = vpow.pop %v2293
            %v2295 = vmul.f32 %v1994, 1.442695
            %v2296 = vpow.pop %v2295
            %v2297 = vmul.f32 %v1995, 1.442695
            %v2298 = vpow.pop %v2297
            %v2299 = vmul.f32 %v1996, 1.442695
            %v2300 = vpow.pop %v2299
            %v2301 = vmul.f32 %v1997, 1.442695
            %v2302 = vpow.pop %v2301
            %v2303 = vmul.f32 %v1998, 1.442695
            %v2304 = vpow.pop %v2303
            %v2305 = vmul.f32 %v1999, 1.442695
            %v2306 = vpow.pop %v2305
            %v2307 = vmul.f32 %v2000, 1.442695
            %v2308 = vpow.pop %v2307
            %v2309 = vmul.f32 %v2001, 1.442695
            %v2310 = vpow.pop %v2309
            %v2311 = vmul.f32 %v2002, 1.442695
            %v2312 = vpow.pop %v2311
            %v2313 = vmul.f32 %v2003, 1.442695
            %v2314 = vpow.pop %v2313
            %v2315 = vmul.f32 %v2004, 1.442695
            %v2316 = vpow.pop %v2315
            %v2317 = vmul.f32 %v2005, 1.442695
            %v2318 = vpow.pop %v2317
            %v2319 = vmul.f32 %v2006, 1.442695
            %v2320 = vpow.pop %v2319
            %v2321 = vmul.f32 %v2007, 1.442695
            %v2322 = vpow.pop %v2321
            %v2323 = vmul.f32 %v2008, 1.442695
            %v2324 = vpow.pop %v2323
            %v2325 = vmul.f32 %v2009, 1.442695
            %v2326 = vpow.pop %v2325
            %v2327 = vmul.f32 %v2010, 1.442695
            %v2328 = vpow.pop %v2327
            %v2329 = vmul.f32 %v2011, 1.442695
            %v2330 = vpow.pop %v2329
            %v2331 = vmul.f32 %v2012, 1.442695
            %v2332 = vpow.pop %v2331
            %v2333 = vmul.f32 %v2013, 1.442695
            %v2334 = vpow.pop %v2333
            %v2335 = vmul.f32 %v2014, 1.442695
            %v2336 = vpow.pop %v2335
            %v2337 = vmul.f32 %v2015, 1.442695
            %v2338 = vpow.pop %v2337
            %v2339 = vmul.f32 %v2016, 1.442695
            %v2340 = vpow.pop %v2339
            %v2341 = vmul.f32 %v2017, 1.442695
            %v2342 = vpow.pop %v2341
            %v2343 = vmul.f32 %v2018, 1.442695
            %v2344 = vpow.pop %v2343
            %v2345 = vmul.f32 %v2019, 1.442695
            %v2346 = vpow.pop %v2345
            %v2347 = vmul.f32 %v2020, 1.442695
            %v2348 = vpow.pop %v2347
            %v2349 = vmul.f32 %v2021, 1.442695
            %v2350 = vpow.pop %v2349
            %v2351 = vmul.f32 %v2022, 1.442695
            %v2352 = vpow.pop %v2351
            %v2353 = vmul.f32 %v2023, 1.442695
            %v2354 = vpow.pop %v2353
            %v2355 = vmul.f32 %v2024, 1.442695
            %v2356 = vpow.pop %v2355
            %v2357 = vmul.f32 %v2025, 1.442695
            %v2358 = vpow.pop %v2357
            %v2359 = vmul.f32 %v2026, 1.442695
            %v2360 = vpow.pop %v2359
            %v2361 = vmul.f32 %v2027, 1.442695
            %v2362 = vpow.pop %v2361
            %v2363 = vmul.f32 %v2028, 1.442695
            %v2364 = vpow.pop %v2363
            %v2365 = vmul.f32 %v2029, 1.442695
            %v2366 = vpow.pop %v2365
            %v2367 = vmul.f32 %v2030, 1.442695
            %v2368 = vpow.pop %v2367
            %v2369 = vmul.f32 %v2031, 1.442695
            %v2370 = vpow.pop %v2369
            %v2371 = vmul.f32 %v2032, 1.442695
            %v2372 = vpow.pop %v2371
            %v2373 = vmul.f32 %v2033, 1.442695
            %v2374 = vpow.pop %v2373
            %v2375 = vmul.f32 %v2034, 1.442695
            %v2376 = vpow.pop %v2375
            %v2377 = vmul.f32 %v2035, 1.442695
            %v2378 = vpow.pop %v2377
            %v2379 = vmul.f32 %v2036, 1.442695
            %v2380 = vpow.pop %v2379
            %v2381 = vmul.f32 %v2037, 1.442695
            %v2382 = vpow.pop %v2381
            %v2383 = vmul.f32 %v2038, 1.442695
            %v2384 = vpow.pop %v2383
            %v2385 = vmul.f32 %v2039, 1.442695
            %v2386 = vpow.pop %v2385
            %v2387 = vmul.f32 %v2040, 1.442695
            %v2388 = vpow.pop %v2387
            %v2389 = vmul.f32 %v2041, 1.442695
            %v2390 = vpow.pop %v2389
            %v2391 = vmul.f32 %v2042, 1.442695
            %v2392 = vpow.pop %v2391
            %v2393 = vmul.f32 %v2043, 1.442695
            %v2394 = vpow.pop %v2393
            %v2395 = vmul.f32 %v2044, 1.442695
            %v2396 = vpow.pop %v2395
            %v2397 = vmul.f32 %v2045, 1.442695
            %v2398 = vpow.pop %v2397
            %v2399 = vmul.f32 %v2046, 1.442695
            %v2400 = vpow.pop %v2399
            %v2401 = vmul.f32 %v2047, 1.442695
            %v2402 = vpow.pop %v2401
            %v2403 = vmul.f32 %v2048, 1.442695
            %v2404 = vpow.pop %v2403
            %v2405 = vmul.f32 %v2049, 1.442695
            %v2406 = vpow.pop %v2405
            %v2407 = vmul.f32 %v2050, 1.442695
            %v2408 = vpow.pop %v2407
            %v2409 = vmul.f32 %v2051, 1.442695
            %v2410 = vpow.pop %v2409
            %v2411 = vmul.f32 %v2052, 1.442695
            %v2412 = vpow.pop %v2411
            %v2413 = vmul.f32 %v2053, 1.442695
            %v2414 = vpow.pop %v2413
            %v2415 = vmul.f32 %v2054, 1.442695
            %v2416 = vpow.pop %v2415
            %v2417 = vmul.f32 %v2055, 1.442695
            %v2418 = vpow.pop %v2417
            %v2419 = vmul.f32 %v2056, 1.442695
            %v2420 = vpow.pop %v2419
            %v2421 = vmul.f32 %v2057, 1.442695
            %v2422 = vpow.pop %v2421
            %v2423 = vmul.f32 %v2058, 1.442695
            %v2424 = vpow.pop %v2423
            %v2425 = vmul.f32 %v2059, 1.442695
            %v2426 = vpow.pop %v2425
            %v2427 = vmul.f32 %v2060, 1.442695
            %v2428 = vpow.pop %v2427
            %v2429 = vmul.f32 %v2061, 1.442695
            %v2430 = vpow.pop %v2429
            %v2431 = vmul.f32 %v2062, 1.442695
            %v2432 = vpow.pop %v2431
            %v2433 = vmul.f32 %v2063, 1.442695
            %v2434 = vpow.pop %v2433
            %v2435 = vmul.f32 %v2064, 1.442695
            %v2436 = vpow.pop %v2435
            %v2437 = vmul.f32 %v2065, 1.442695
            %v2438 = vpow.pop %v2437
            %v2439 = vmul.f32 %v2066, 1.442695
            %v2440 = vpow.pop %v2439
            %v2441 = vmul.f32 %v2067, 1.442695
            %v2442 = vpow.pop %v2441
            %v2443 = vmul.f32 %v2068, 1.442695
            %v2444 = vpow.pop %v2443
            %v2445 = vmul.f32 %v2069, 1.442695
            %v2446 = vpow.pop %v2445
            %v2447 = vmul.f32 %v2070, 1.442695
            %v2448 = vpow.pop %v2447
            %v2449 = vmul.f32 %v2071, 1.442695
            %v2450 = vpow.pop %v2449
            %v2451 = vmul.f32 %v2072, 1.442695
            %v2452 = vpow.pop %v2451
            %v2453 = vmul.f32 %v2073, 1.442695
            %v2454 = vpow.pop %v2453
            %v2455 = vmul.f32 %v2074, 1.442695
            %v2456 = vpow.pop %v2455
            %v2457 = vmul.f32 %v2075, 1.442695
            %v2458 = vpow.pop %v2457
            %v2459 = vmul.f32 %v2076, 1.442695
            %v2460 = vpow.pop %v2459
            %v2461 = vmul.f32 %v2077, 1.442695
            %v2462 = vpow.pop %v2461
            %v2463 = vmul.f32 %v2078, 1.442695
            %v2464 = vpow.pop %v2463
            %v2465 = vmul.f32 %v2079, 1.442695
            %v2466 = vpow.pop %v2465
            %v2467 = vmul.f32 %v2080, 1.442695
            %v2468 = vpow.pop %v2467
            %v2469 = vmul.f32 %v2081, 1.442695
            %v2470 = vpow.pop %v2469
            %v2471 = vmul.f32 %v2082, 1.442695
            %v2472 = vpow.pop %v2471
            %v2473 = vmul.f32 %v2083, 1.442695
            %v2474 = vpow.pop %v2473
            %v2475 = vmul.f32 %v2084, 1.442695
            %v2476 = vpow.pop %v2475
            %v2477 = vmul.f32 %v2085, 1.442695
            %v2478 = vpow.pop %v2477
            %v2479 = vmul.f32 %v2086, 1.442695
            %v2480 = vpow.pop %v2479
            %v2481 = vmul.f32 %v2087, 1.442695
            %v2482 = vpow.pop %v2481
            %v2483 = vmul.f32 %v2088, 1.442695
            %v2484 = vpow.pop %v2483
            %v2485 = vmul.f32 %v2089, 1.442695
            %v2486 = vpow.pop %v2485
            %v2487 = vmul.f32 %v2090, 1.442695
            %v2488 = vpow.pop %v2487
            %v2489 = vmul.f32 %v2091, 1.442695
            %v2490 = vpow.pop %v2489
            %v2491 = vmul.f32 %v2092, 1.442695
            %v2492 = vpow.pop %v2491
            %v2493 = vmul.f32 %v2093, 1.442695
            %v2494 = vpow.pop %v2493
            %v2495 = vmul.f32 %v2094, 1.442695
            %v2496 = vpow.pop %v2495
            %v2497 = vmul.f32 %v2095, 1.442695
            %v2498 = vpow.pop %v2497
            %v2499 = vmul.f32 %v2096, 1.442695
            %v2500 = vpow.pop %v2499
            %v2501 = vmul.f32 %v2097, 1.442695
            %v2502 = vpow.pop %v2501
            %v2503 = vmul.f32 %v2098, 1.442695
            %v2504 = vpow.pop %v2503
            %v2505 = vmul.f32 %v2099, 1.442695
            %v2506 = vpow.pop %v2505
            %v2507 = vmul.f32 %v2100, 1.442695
            %v2508 = vpow.pop %v2507
            %v2509 = vmul.f32 %v2101, 1.442695
            %v2510 = vpow.pop %v2509
            %v2511 = vmul.f32 %v2102, 1.442695
            %v2512 = vpow.pop %v2511
            %v2513 = vmul.f32 %v2103, 1.442695
            %v2514 = vpow.pop %v2513
            %v2515 = vmul.f32 %v2104, 1.442695
            %v2516 = vpow.pop %v2515
            %v2517 = vmul.f32 %v2105, 1.442695
            %v2518 = vpow.pop %v2517
            %v2519 = vmul.f32 %v2106, 1.442695
            %v2520 = vpow.pop %v2519
            %v2521 = vmul.f32 %v2107, 1.442695
            %v2522 = vpow.pop %v2521
            %v2523 = vmul.f32 %v2108, 1.442695
            %v2524 = vpow.pop %v2523
            %v2525 = vmul.f32 %v2109, 1.442695
            %v2526 = vpow.pop %v2525
            %v2527 = vmul.f32 %v2110, 1.442695
            %v2528 = vpow.pop %v2527
            %v2529 = vmul.f32 %v2111, 1.442695
            %v2530 = vpow.pop %v2529
            %v2531 = vmul.f32 %v2112, 1.442695
            %v2532 = vpow.pop %v2531
            %v2533 = vmul.f32 %v2113, 1.442695
            %v2534 = vpow.pop %v2533
            %v2535 = vmul.f32 %v2114, 1.442695
            %v2536 = vpow.pop %v2535
            %v2537 = vmul.f32 %v2115, 1.442695
            %v2538 = vpow.pop %v2537
            %v2539 = vmul.f32 %v2116, 1.442695
            %v2540 = vpow.pop %v2539
            %v2541 = vmul.f32 %v2117, 1.442695
            %v2542 = vpow.pop %v2541
            %v2543 = vmul.f32 %v2118, 1.442695
            %v2544 = vpow.pop %v2543
            %v2545 = vmul.f32 %v2119, 1.442695
            %v2546 = vpow.pop %v2545
            %v2547 = vmul.f32 %v2120, 1.442695
            %v2548 = vpow.pop %v2547
            %v2549 = vmul.f32 %v2121, 1.442695
            %v2550 = vpow.pop %v2549
            %v2551 = vmul.f32 %v2122, 1.442695
            %v2552 = vpow.pop %v2551
            %v2553 = vmul.f32 %v2123, 1.442695
            %v2554 = vpow.pop %v2553
            %v2555 = vmul.f32 %v2124, 1.442695
            %v2556 = vpow.pop %v2555
            %v2557 = vmul.f32 %v2125, 1.442695
            %v2558 = vpow.pop %v2557
            %v2559 = vmul.f32 %v2126, 1.442695
            %v2560 = vpow.pop %v2559
            %v2561 = vmul.f32 %v2127, 1.442695
            %v2562 = vpow.pop %v2561
            %v2563 = vmul.f32 %v2128, 1.442695
            %v2564 = vpow.pop %v2563
            %v2565 = vmul.f32 %v2129, 1.442695
            %v2566 = vpow.pop %v2565
            %v2567 = vmul.f32 %v2130, 1.442695
            %v2568 = vpow.pop %v2567
            %v2569 = vmul.f32 %v2131, 1.442695
            %v2570 = vpow.pop %v2569
            %v2571 = vmul.f32 %v2132, 1.442695
            %v2572 = vpow.pop %v2571
            %v2573 = vmul.f32 %v2133, 1.442695
            %v2574 = vpow.pop %v2573
            %v2575 = vmul.f32 %v2134, 1.442695
            %v2576 = vpow.pop %v2575
            %v2577 = vmul.f32 %v2135, 1.442695
            %v2578 = vpow.pop %v2577
            %v2579 = vmul.f32 %v2136, 1.442695
            %v2580 = vpow.pop %v2579
            %v2581 = vmul.f32 %v2137, 1.442695
            %v2582 = vpow.pop %v2581
            %v2583 = vmul.f32 %v2138, 1.442695
            %v2584 = vpow.pop %v2583
            %v2585 = vmul.f32 %v2139, 1.442695
            %v2586 = vpow.pop %v2585
            %v2587 = vmul.f32 %v2140, 1.442695
            %v2588 = vpow.pop %v2587
            %v2589 = vmul.f32 %v2141, 1.442695
            %v2590 = vpow.pop %v2589
            %v2591 = vmul.f32 %v2142, 1.442695
            %v2592 = vpow.pop %v2591
            %v2593 = vmul.f32 %v2143, 1.442695
            %v2594 = vpow.pop %v2593
            %v2595 = vmul.f32 %v2144, 1.442695
            %v2596 = vpow.pop %v2595
            %v2597 = vmul.f32 %v2145, 1.442695
            %v2598 = vpow.pop %v2597
            %v2599 = vmul.f32 %v2146, 1.442695
            %v2600 = vpow.pop %v2599
            %v2601 = vmul.f32 %v2147, 1.442695
            %v2602 = vpow.pop %v2601
            %v2603 = vmul.f32 %v2148, 1.442695
            %v2604 = vpow.pop %v2603
            %v2605 = vmul.f32 %v2149, 1.442695
            %v2606 = vpow.pop %v2605
            %v2607 = vmul.f32 %v2150, 1.442695
            %v2608 = vpow.pop %v2607
            %v2609 = vmul.f32 %v2151, 1.442695
            %v2610 = vpow.pop %v2609
            %v2611 = vmul.f32 %v2152, 1.442695
            %v2612 = vpow.pop %v2611
            %v2613 = vmul.f32 %v2153, 1.442695
            %v2614 = vpow.pop %v2613
            %v2615 = vmul.f32 %v2154, 1.442695
            %v2616 = vpow.pop %v2615
            %v2617 = vmul.f32 %v2155, 1.442695
            %v2618 = vpow.pop %v2617
            %v2619 = vmul.f32 %v2156, 1.442695
            %v2620 = vpow.pop %v2619
            %v2621 = vmul.f32 %v2157, 1.442695
            %v2622 = vpow.pop %v2621
            %v2623 = vmul.f32 %v2158, 1.442695
            %v2624 = vpow.pop %v2623
            %v2625 = vmul.f32 %v2159, 1.442695
            %v2626 = vpow.pop %v2625
            %v2627 = vmul.f32 %v2160, 1.442695
            %v2628 = vpow.pop %v2627
            %v2629 = vmul.f32 %v2161, 1.442695
            %v2630 = vpow.pop %v2629
            %v2631 = vmul.f32 %v2162, 1.442695
            %v2632 = vpow.pop %v2631
            %v2633 = vmul.f32 %v2163, 1.442695
            %v2634 = vpow.pop %v2633
            %v2635 = vmul.f32 %v2164, 1.442695
            %v2636 = vpow.pop %v2635
            %v2637 = vmul.f32 %v2165, 1.442695
            %v2638 = vpow.pop %v2637
            %v2639 = vmul.f32 %v2166, 1.442695
            %v2640 = vpow.pop %v2639
            %v2641 = vmul.f32 %v2167, 1.442695
            %v2642 = vpow.pop %v2641
            %v2643 = vmul.f32 %v2168, 1.442695
            %v2644 = vpow.pop %v2643
            %v2645 = vmul.f32 %v2169, 1.442695
            %v2646 = vpow.pop %v2645
            %v2647 = vmul.f32 %v2170, 1.442695
            %v2648 = vpow.pop %v2647
            %v2649 = vmul.f32 %v2171, 1.442695
            %v2650 = vpow.pop %v2649
            %v2651 = vmul.f32 %v2172, 1.442695
            %v2652 = vpow.pop %v2651
            %v2653 = vmul.f32 %v2173, 1.442695
            %v2654 = vpow.pop %v2653
            %v2655 = vmul.f32 %v2174, 1.442695
            %v2656 = vpow.pop %v2655
            %v2657 = vmul.f32 %v2175, 1.442695
            %v2658 = vpow.pop %v2657
            %v2659 = vmul.f32 %v2176, 1.442695
            %v2660 = vpow.pop %v2659
            %v2661 = vmul.f32 %v2177, 1.442695
            %v2662 = vpow.pop %v2661
            %v2663 = vmul.f32 %v2178, 1.442695
            %v2664 = vpow.pop %v2663
            %v2665 = vmul.f32 %v2179, 1.442695
            %v2666 = vpow.pop %v2665
            %v2667 = vmul.f32 %v2180, 1.442695
            %v2668 = vpow.pop %v2667
            %v2669 = vmul.f32 %v2181, 1.442695
            %v2670 = vpow.pop %v2669
            %v2671 = vmul.f32 %v2182, 1.442695
            %v2672 = vpow.pop %v2671
            %v2673 = vmul.f32 %v2183, 1.442695
            %v2674 = vpow.pop %v2673
            %v2675 = vmul.f32 %v2184, 1.442695
            %v2676 = vpow.pop %v2675
            %v2677 = vmul.f32 %v2185, 1.442695
            %v2678 = vpow.pop %v2677
            %v2679 = vmul.f32 %v2186, 1.442695
            %v2680 = vpow.pop %v2679
            %v2681 = vmul.f32 %v2187, 1.442695
            %v2682 = vpow.pop %v2681
            %v2683 = vmul.f32 %v2188, 1.442695
            %v2684 = vpow.pop %v2683
            %v2685 = vmul.f32 %v2189, 1.442695
            %v2686 = vpow.pop %v2685
            %v2687 = vmul.f32 %v2190, 1.442695
            %v2688 = vpow.pop %v2687
            %v2689 = vmul.f32 %v2191, 1.442695
            %v2690 = vpow.pop %v2689
            %v2691 = vmul.f32 %v2192, 1.442695
            %v2692 = vpow.pop %v2691
            %v2693 = vmul.f32 %v2193, 1.442695
            %v2694 = vpow.pop %v2693
            %v2695 = vmul.f32 %v2194, 1.442695
            %v2696 = vpow.pop %v2695
            %v2697 = vmul.f32 %v2195, 1.442695
            %v2698 = vpow.pop %v2697
            %v2699 = vmul.f32 %v2196, 1.442695
            %v2700 = vpow.pop %v2699
            %v2701 = vmul.f32 %v2197, 1.442695
            %v2702 = vpow.pop %v2701
            %v2703 = vmul.f32 %v2198, 1.442695
            %v2704 = vpow.pop %v2703
            %v2705 = vmul.f32 %v2199, 1.442695
            %v2706 = vpow.pop %v2705
            %v2707 = vmul.f32 %v2200, 1.442695
            %v2708 = vpow.pop %v2707
            %v2709 = vmul.f32 %v2201, 1.442695
            %v2710 = vpow.pop %v2709
            %v2711 = vmul.f32 %v2202, 1.442695
            %v2712 = vpow.pop %v2711
            %v2713 = vmul.f32 %v2203, 1.442695
            %v2714 = vpow.pop %v2713
            %v2715 = vmul.f32 %v2204, 1.442695
            %v2716 = vpow.pop %v2715
            %v2717 = vadd.f32 %v2206, %v2214
            %v2718 = vadd.f32 %v2717, %v2222
            %v2719 = vadd.f32 %v2718, %v2230
            %v2720 = vadd.f32 %v2719, %v2238
            %v2721 = vadd.f32 %v2720, %v2246
            %v2722 = vadd.f32 %v2721, %v2254
            %v2723 = vadd.f32 %v2722, %v2262
            %v2724 = vadd.f32 %v2723, %v2270
            %v2725 = vadd.f32 %v2724, %v2278
            %v2726 = vadd.f32 %v2725, %v2286
            %v2727 = vadd.f32 %v2726, %v2294
            %v2728 = vadd.f32 %v2727, %v2302
            %v2729 = vadd.f32 %v2728, %v2310
            %v2730 = vadd.f32 %v2729, %v2318
            %v2731 = vadd.f32 %v2730, %v2326
            %v2732 = vadd.f32 %v2731, %v2334
            %v2733 = vadd.f32 %v2732, %v2342
            %v2734 = vadd.f32 %v2733, %v2350
            %v2735 = vadd.f32 %v2734, %v2358
            %v2736 = vadd.f32 %v2735, %v2366
            %v2737 = vadd.f32 %v2736, %v2374
            %v2738 = vadd.f32 %v2737, %v2382
            %v2739 = vadd.f32 %v2738, %v2390
            %v2740 = vadd.f32 %v2739, %v2398
            %v2741 = vadd.f32 %v2740, %v2406
            %v2742 = vadd.f32 %v2741, %v2414
            %v2743 = vadd.f32 %v2742, %v2422
            %v2744 = vadd.f32 %v2743, %v2430
            %v2745 = vadd.f32 %v2744, %v2438
            %v2746 = vadd.f32 %v2745, %v2446
            %v2747 = vadd.f32 %v2746, %v2454
            %v2748 = vadd.f32 %v2747, %v2462
            %v2749 = vadd.f32 %v2748, %v2470
            %v2750 = vadd.f32 %v2749, %v2478
            %v2751 = vadd.f32 %v2750, %v2486
            %v2752 = vadd.f32 %v2751, %v2494
            %v2753 = vadd.f32 %v2752, %v2502
            %v2754 = vadd.f32 %v2753, %v2510
            %v2755 = vadd.f32 %v2754, %v2518
            %v2756 = vadd.f32 %v2755, %v2526
            %v2757 = vadd.f32 %v2756, %v2534
            %v2758 = vadd.f32 %v2757, %v2542
            %v2759 = vadd.f32 %v2758, %v2550
            %v2760 = vadd.f32 %v2759, %v2558
            %v2761 = vadd.f32 %v2760, %v2566
            %v2762 = vadd.f32 %v2761, %v2574
            %v2763 = vadd.f32 %v2762, %v2582
            %v2764 = vadd.f32 %v2763, %v2590
            %v2765 = vadd.f32 %v2764, %v2598
            %v2766 = vadd.f32 %v2765, %v2606
            %v2767 = vadd.f32 %v2766, %v2614
            %v2768 = vadd.f32 %v2767, %v2622
            %v2769 = vadd.f32 %v2768, %v2630
            %v2770 = vadd.f32 %v2769, %v2638
            %v2771 = vadd.f32 %v2770, %v2646
            %v2772 = vadd.f32 %v2771, %v2654
            %v2773 = vadd.f32 %v2772, %v2662
            %v2774 = vadd.f32 %v2773, %v2670
            %v2775 = vadd.f32 %v2774, %v2678
            %v2776 = vadd.f32 %v2775, %v2686
            %v2777 = vadd.f32 %v2776, %v2694
            %v2778 = vadd.f32 %v2777, %v2702
            %v2779 = vadd.f32 %v2778, %v2710
            %v2780 = vrot.slane %v2779, 4
            %v2781 = vadd.f32 %v2779, %v2780
            %v2782 = vrot.slane %v2781, 2
            %v2783 = vadd.f32 %v2781, %v2782
            %v2784 = vrot.slane %v2783, 1
            %v2785 = vadd.f32 %v2783, %v2784
            %v2786 = vadd.f32 %v2208, %v2216
            %v2787 = vadd.f32 %v2786, %v2224
            %v2788 = vadd.f32 %v2787, %v2232
            %v2789 = vadd.f32 %v2788, %v2240
            %v2790 = vadd.f32 %v2789, %v2248
            %v2791 = vadd.f32 %v2790, %v2256
            %v2792 = vadd.f32 %v2791, %v2264
            %v2793 = vadd.f32 %v2792, %v2272
            %v2794 = vadd.f32 %v2793, %v2280
            %v2795 = vadd.f32 %v2794, %v2288
            %v2796 = vadd.f32 %v2795, %v2296
            %v2797 = vadd.f32 %v2796, %v2304
            %v2798 = vadd.f32 %v2797, %v2312
            %v2799 = vadd.f32 %v2798, %v2320
            %v2800 = vadd.f32 %v2799, %v2328
            %v2801 = vadd.f32 %v2800, %v2336
            %v2802 = vadd.f32 %v2801, %v2344
            %v2803 = vadd.f32 %v2802, %v2352
            %v2804 = vadd.f32 %v2803, %v2360
            %v2805 = vadd.f32 %v2804, %v2368
            %v2806 = vadd.f32 %v2805, %v2376
            %v2807 = vadd.f32 %v2806, %v2384
            %v2808 = vadd.f32 %v2807, %v2392
            %v2809 = vadd.f32 %v2808, %v2400
            %v2810 = vadd.f32 %v2809, %v2408
            %v2811 = vadd.f32 %v2810, %v2416
            %v2812 = vadd.f32 %v2811, %v2424
            %v2813 = vadd.f32 %v2812, %v2432
            %v2814 = vadd.f32 %v2813, %v2440
            %v2815 = vadd.f32 %v2814, %v2448
            %v2816 = vadd.f32 %v2815, %v2456
            %v2817 = vadd.f32 %v2816, %v2464
            %v2818 = vadd.f32 %v2817, %v2472
            %v2819 = vadd.f32 %v2818, %v2480
            %v2820 = vadd.f32 %v2819, %v2488
            %v2821 = vadd.f32 %v2820, %v2496
            %v2822 = vadd.f32 %v2821, %v2504
            %v2823 = vadd.f32 %v2822, %v2512
            %v2824 = vadd.f32 %v2823, %v2520
            %v2825 = vadd.f32 %v2824, %v2528
            %v2826 = vadd.f32 %v2825, %v2536
            %v2827 = vadd.f32 %v2826, %v2544
            %v2828 = vadd.f32 %v2827, %v2552
            %v2829 = vadd.f32 %v2828, %v2560
            %v2830 = vadd.f32 %v2829, %v2568
            %v2831 = vadd.f32 %v2830, %v2576
            %v2832 = vadd.f32 %v2831, %v2584
            %v2833 = vadd.f32 %v2832, %v2592
            %v2834 = vadd.f32 %v2833, %v2600
            %v2835 = vadd.f32 %v2834, %v2608
            %v2836 = vadd.f32 %v2835, %v2616
            %v2837 = vadd.f32 %v2836, %v2624
            %v2838 = vadd.f32 %v2837, %v2632
            %v2839 = vadd.f32 %v2838, %v2640
            %v2840 = vadd.f32 %v2839, %v2648
            %v2841 = vadd.f32 %v2840, %v2656
            %v2842 = vadd.f32 %v2841, %v2664
            %v2843 = vadd.f32 %v2842, %v2672
            %v2844 = vadd.f32 %v2843, %v2680
            %v2845 = vadd.f32 %v2844, %v2688
            %v2846 = vadd.f32 %v2845, %v2696
            %v2847 = vadd.f32 %v2846, %v2704
            %v2848 = vadd.f32 %v2847, %v2712
            %v2849 = vrot.slane %v2848, 4
            %v2850 = vadd.f32 %v2848, %v2849
            %v2851 = vrot.slane %v2850, 2
            %v2852 = vadd.f32 %v2850, %v2851
            %v2853 = vrot.slane %v2852, 1
            %v2854 = vadd.f32 %v2852, %v2853
            %v2855 = vadd.f32 %v2210, %v2218
            %v2856 = vadd.f32 %v2855, %v2226
            %v2857 = vadd.f32 %v2856, %v2234
            %v2858 = vadd.f32 %v2857, %v2242
            %v2859 = vadd.f32 %v2858, %v2250
            %v2860 = vadd.f32 %v2859, %v2258
            %v2861 = vadd.f32 %v2860, %v2266
            %v2862 = vadd.f32 %v2861, %v2274
            %v2863 = vadd.f32 %v2862, %v2282
            %v2864 = vadd.f32 %v2863, %v2290
            %v2865 = vadd.f32 %v2864, %v2298
            %v2866 = vadd.f32 %v2865, %v2306
            %v2867 = vadd.f32 %v2866, %v2314
            %v2868 = vadd.f32 %v2867, %v2322
            %v2869 = vadd.f32 %v2868, %v2330
            %v2870 = vadd.f32 %v2869, %v2338
            %v2871 = vadd.f32 %v2870, %v2346
            %v2872 = vadd.f32 %v2871, %v2354
            %v2873 = vadd.f32 %v2872, %v2362
            %v2874 = vadd.f32 %v2873, %v2370
            %v2875 = vadd.f32 %v2874, %v2378
            %v2876 = vadd.f32 %v2875, %v2386
            %v2877 = vadd.f32 %v2876, %v2394
            %v2878 = vadd.f32 %v2877, %v2402
            %v2879 = vadd.f32 %v2878, %v2410
            %v2880 = vadd.f32 %v2879, %v2418
            %v2881 = vadd.f32 %v2880, %v2426
            %v2882 = vadd.f32 %v2881, %v2434
            %v2883 = vadd.f32 %v2882, %v2442
            %v2884 = vadd.f32 %v2883, %v2450
            %v2885 = vadd.f32 %v2884, %v2458
            %v2886 = vadd.f32 %v2885, %v2466
            %v2887 = vadd.f32 %v2886, %v2474
            %v2888 = vadd.f32 %v2887, %v2482
            %v2889 = vadd.f32 %v2888, %v2490
            %v2890 = vadd.f32 %v2889, %v2498
            %v2891 = vadd.f32 %v2890, %v2506
            %v2892 = vadd.f32 %v2891, %v2514
            %v2893 = vadd.f32 %v2892, %v2522
            %v2894 = vadd.f32 %v2893, %v2530
            %v2895 = vadd.f32 %v2894, %v2538
            %v2896 = vadd.f32 %v2895, %v2546
            %v2897 = vadd.f32 %v2896, %v2554
            %v2898 = vadd.f32 %v2897, %v2562
            %v2899 = vadd.f32 %v2898, %v2570
            %v2900 = vadd.f32 %v2899, %v2578
            %v2901 = vadd.f32 %v2900, %v2586
            %v2902 = vadd.f32 %v2901, %v2594
            %v2903 = vadd.f32 %v2902, %v2602
            %v2904 = vadd.f32 %v2903, %v2610
            %v2905 = vadd.f32 %v2904, %v2618
            %v2906 = vadd.f32 %v2905, %v2626
            %v2907 = vadd.f32 %v2906, %v2634
            %v2908 = vadd.f32 %v2907, %v2642
            %v2909 = vadd.f32 %v2908, %v2650
            %v2910 = vadd.f32 %v2909, %v2658
            %v2911 = vadd.f32 %v2910, %v2666
            %v2912 = vadd.f32 %v2911, %v2674
            %v2913 = vadd.f32 %v2912, %v2682
            %v2914 = vadd.f32 %v2913, %v2690
            %v2915 = vadd.f32 %v2914, %v2698
            %v2916 = vadd.f32 %v2915, %v2706
            %v2917 = vadd.f32 %v2916, %v2714
            %v2918 = vrot.slane %v2917, 4
            %v2919 = vadd.f32 %v2917, %v2918
            %v2920 = vrot.slane %v2919, 2
            %v2921 = vadd.f32 %v2919, %v2920
            %v2922 = vrot.slane %v2921, 1
            %v2923 = vadd.f32 %v2921, %v2922
            %v2924 = vadd.f32 %v2212, %v2220
            %v2925 = vadd.f32 %v2924, %v2228
            %v2926 = vadd.f32 %v2925, %v2236
            %v2927 = vadd.f32 %v2926, %v2244
            %v2928 = vadd.f32 %v2927, %v2252
            %v2929 = vadd.f32 %v2928, %v2260
            %v2930 = vadd.f32 %v2929, %v2268
            %v2931 = vadd.f32 %v2930, %v2276
            %v2932 = vadd.f32 %v2931, %v2284
            %v2933 = vadd.f32 %v2932, %v2292
            %v2934 = vadd.f32 %v2933, %v2300
            %v2935 = vadd.f32 %v2934, %v2308
            %v2936 = vadd.f32 %v2935, %v2316
            %v2937 = vadd.f32 %v2936, %v2324
            %v2938 = vadd.f32 %v2937, %v2332
            %v2939 = vadd.f32 %v2938, %v2340
            %v2940 = vadd.f32 %v2939, %v2348
            %v2941 = vadd.f32 %v2940, %v2356
            %v2942 = vadd.f32 %v2941, %v2364
            %v2943 = vadd.f32 %v2942, %v2372
            %v2944 = vadd.f32 %v2943, %v2380
            %v2945 = vadd.f32 %v2944, %v2388
            %v2946 = vadd.f32 %v2945, %v2396
            %v2947 = vadd.f32 %v2946, %v2404
            %v2948 = vadd.f32 %v2947, %v2412
            %v2949 = vadd.f32 %v2948, %v2420
            %v2950 = vadd.f32 %v2949, %v2428
            %v2951 = vadd.f32 %v2950, %v2436
            %v2952 = vadd.f32 %v2951, %v2444
            %v2953 = vadd.f32 %v2952, %v2452
            %v2954 = vadd.f32 %v2953, %v2460
            %v2955 = vadd.f32 %v2954, %v2468
            %v2956 = vadd.f32 %v2955, %v2476
            %v2957 = vadd.f32 %v2956, %v2484
            %v2958 = vadd.f32 %v2957, %v2492
            %v2959 = vadd.f32 %v2958, %v2500
            %v2960 = vadd.f32 %v2959, %v2508
            %v2961 = vadd.f32 %v2960, %v2516
            %v2962 = vadd.f32 %v2961, %v2524
            %v2963 = vadd.f32 %v2962, %v2532
            %v2964 = vadd.f32 %v2963, %v2540
            %v2965 = vadd.f32 %v2964, %v2548
            %v2966 = vadd.f32 %v2965, %v2556
            %v2967 = vadd.f32 %v2966, %v2564
            %v2968 = vadd.f32 %v2967, %v2572
            %v2969 = vadd.f32 %v2968, %v2580
            %v2970 = vadd.f32 %v2969, %v2588
            %v2971 = vadd.f32 %v2970, %v2596
            %v2972 = vadd.f32 %v2971, %v2604
            %v2973 = vadd.f32 %v2972, %v2612
            %v2974 = vadd.f32 %v2973, %v2620
            %v2975 = vadd.f32 %v2974, %v2628
            %v2976 = vadd.f32 %v2975, %v2636
            %v2977 = vadd.f32 %v2976, %v2644
            %v2978 = vadd.f32 %v2977, %v2652
            %v2979 = vadd.f32 %v2978, %v2660
            %v2980 = vadd.f32 %v2979, %v2668
            %v2981 = vadd.f32 %v2980, %v2676
            %v2982 = vadd.f32 %v2981, %v2684
            %v2983 = vadd.f32 %v2982, %v2692
            %v2984 = vadd.f32 %v2983, %v2700
            %v2985 = vadd.f32 %v2984, %v2708
            %v2986 = vadd.f32 %v2985, %v2716
            %v2987 = vrot.slane %v2986, 4
            %v2988 = vadd.f32 %v2986, %v2987
            %v2989 = vrot.slane %v2988, 2
            %v2990 = vadd.f32 %v2988, %v2989
            %v2991 = vrot.slane %v2990, 1
            %v2992 = vadd.f32 %v2990, %v2991
            %v2993 = vpack.c.bf16 %v2214, %v2206
            %v2994 = vpack.c.bf16 %v2216, %v2208
            %v2995 = vpack.c.bf16 %v2218, %v2210
            %v2996 = vpack.c.bf16 %v2220, %v2212
            %v2997 = vpack.c.bf16 %v2230, %v2222
            %v2998 = vpack.c.bf16 %v2232, %v2224
            %v2999 = vpack.c.bf16 %v2234, %v2226
            %v3000 = vpack.c.bf16 %v2236, %v2228
            %v3001 = vpack.c.bf16 %v2246, %v2238
            %v3002 = vpack.c.bf16 %v2248, %v2240
            %v3003 = vpack.c.bf16 %v2250, %v2242
            %v3004 = vpack.c.bf16 %v2252, %v2244
            %v3005 = vpack.c.bf16 %v2262, %v2254
            %v3006 = vpack.c.bf16 %v2264, %v2256
            %v3007 = vpack.c.bf16 %v2266, %v2258
            %v3008 = vpack.c.bf16 %v2268, %v2260
            %v3009 = vpack.c.bf16 %v2278, %v2270
            %v3010 = vpack.c.bf16 %v2280, %v2272
            %v3011 = vpack.c.bf16 %v2282, %v2274
            %v3012 = vpack.c.bf16 %v2284, %v2276
            %v3013 = vpack.c.bf16 %v2294, %v2286
            %v3014 = vpack.c.bf16 %v2296, %v2288
            %v3015 = vpack.c.bf16 %v2298, %v2290
            %v3016 = vpack.c.bf16 %v2300, %v2292
            %v3017 = vpack.c.bf16 %v2310, %v2302
            %v3018 = vpack.c.bf16 %v2312, %v2304
            %v3019 = vpack.c.bf16 %v2314, %v2306
            %v3020 = vpack.c.bf16 %v2316, %v2308
            %v3021 = vpack.c.bf16 %v2326, %v2318
            %v3022 = vpack.c.bf16 %v2328, %v2320
            %v3023 = vpack.c.bf16 %v2330, %v2322
            %v3024 = vpack.c.bf16 %v2332, %v2324
            %v3025 = vpack.c.bf16 %v2342, %v2334
            %v3026 = vpack.c.bf16 %v2344, %v2336
            %v3027 = vpack.c.bf16 %v2346, %v2338
            %v3028 = vpack.c.bf16 %v2348, %v2340
            %v3029 = vpack.c.bf16 %v2358, %v2350
            %v3030 = vpack.c.bf16 %v2360, %v2352
            %v3031 = vpack.c.bf16 %v2362, %v2354
            %v3032 = vpack.c.bf16 %v2364, %v2356
            %v3033 = vpack.c.bf16 %v2374, %v2366
            %v3034 = vpack.c.bf16 %v2376, %v2368
            %v3035 = vpack.c.bf16 %v2378, %v2370
            %v3036 = vpack.c.bf16 %v2380, %v2372
            %v3037 = vpack.c.bf16 %v2390, %v2382
            %v3038 = vpack.c.bf16 %v2392, %v2384
            %v3039 = vpack.c.bf16 %v2394, %v2386
            %v3040 = vpack.c.bf16 %v2396, %v2388
            %v3041 = vpack.c.bf16 %v2406, %v2398
            %v3042 = vpack.c.bf16 %v2408, %v2400
            %v3043 = vpack.c.bf16 %v2410, %v2402
            %v3044 = vpack.c.bf16 %v2412, %v2404
            %v3045 = vpack.c.bf16 %v2422, %v2414
            %v3046 = vpack.c.bf16 %v2424, %v2416
            %v3047 = vpack.c.bf16 %v2426, %v2418
            %v3048 = vpack.c.bf16 %v2428, %v2420
            %v3049 = vpack.c.bf16 %v2438, %v2430
            %v3050 = vpack.c.bf16 %v2440, %v2432
            %v3051 = vpack.c.bf16 %v2442, %v2434
            %v3052 = vpack.c.bf16 %v2444, %v2436
            %v3053 = vpack.c.bf16 %v2454, %v2446
            %v3054 = vpack.c.bf16 %v2456, %v2448
            %v3055 = vpack.c.bf16 %v2458, %v2450
            %v3056 = vpack.c.bf16 %v2460, %v2452
            %v3057 = vpack.c.bf16 %v2470, %v2462
            %v3058 = vpack.c.bf16 %v2472, %v2464
            %v3059 = vpack.c.bf16 %v2474, %v2466
            %v3060 = vpack.c.bf16 %v2476, %v2468
            %v3061 = vpack.c.bf16 %v2486, %v2478
            %v3062 = vpack.c.bf16 %v2488, %v2480
            %v3063 = vpack.c.bf16 %v2490, %v2482
            %v3064 = vpack.c.bf16 %v2492, %v2484
            %v3065 = vpack.c.bf16 %v2502, %v2494
            %v3066 = vpack.c.bf16 %v2504, %v2496
            %v3067 = vpack.c.bf16 %v2506, %v2498
            %v3068 = vpack.c.bf16 %v2508, %v2500
            %v3069 = vpack.c.bf16 %v2518, %v2510
            %v3070 = vpack.c.bf16 %v2520, %v2512
            %v3071 = vpack.c.bf16 %v2522, %v2514
            %v3072 = vpack.c.bf16 %v2524, %v2516
            %v3073 = vpack.c.bf16 %v2534, %v2526
            %v3074 = vpack.c.bf16 %v2536, %v2528
            %v3075 = vpack.c.bf16 %v2538, %v2530
            %v3076 = vpack.c.bf16 %v2540, %v2532
            %v3077 = vpack.c.bf16 %v2550, %v2542
            %v3078 = vpack.c.bf16 %v2552, %v2544
            %v3079 = vpack.c.bf16 %v2554, %v2546
            %v3080 = vpack.c.bf16 %v2556, %v2548
            %v3081 = vpack.c.bf16 %v2566, %v2558
            %v3082 = vpack.c.bf16 %v2568, %v2560
            %v3083 = vpack.c.bf16 %v2570, %v2562
            %v3084 = vpack.c.bf16 %v2572, %v2564
            %v3085 = vpack.c.bf16 %v2582, %v2574
            %v3086 = vpack.c.bf16 %v2584, %v2576
            %v3087 = vpack.c.bf16 %v2586, %v2578
            %v3088 = vpack.c.bf16 %v2588, %v2580
            %v3089 = vpack.c.bf16 %v2598, %v2590
            %v3090 = vpack.c.bf16 %v2600, %v2592
            %v3091 = vpack.c.bf16 %v2602, %v2594
            %v3092 = vpack.c.bf16 %v2604, %v2596
            %v3093 = vpack.c.bf16 %v2614, %v2606
            %v3094 = vpack.c.bf16 %v2616, %v2608
            %v3095 = vpack.c.bf16 %v2618, %v2610
            %v3096 = vpack.c.bf16 %v2620, %v2612
            %v3097 = vpack.c.bf16 %v2630, %v2622
            %v3098 = vpack.c.bf16 %v2632, %v2624
            %v3099 = vpack.c.bf16 %v2634, %v2626
            %v3100 = vpack.c.bf16 %v2636, %v2628
            %v3101 = vpack.c.bf16 %v2646, %v2638
            %v3102 = vpack.c.bf16 %v2648, %v2640
            %v3103 = vpack.c.bf16 %v2650, %v2642
            %v3104 = vpack.c.bf16 %v2652, %v2644
            %v3105 = vpack.c.bf16 %v2662, %v2654
            %v3106 = vpack.c.bf16 %v2664, %v2656
            %v3107 = vpack.c.bf16 %v2666, %v2658
            %v3108 = vpack.c.bf16 %v2668, %v2660
            %v3109 = vpack.c.bf16 %v2678, %v2670
            %v3110 = vpack.c.bf16 %v2680, %v2672
            %v3111 = vpack.c.bf16 %v2682, %v2674
            %v3112 = vpack.c.bf16 %v2684, %v2676
            %v3113 = vpack.c.bf16 %v2694, %v2686
            %v3114 = vpack.c.bf16 %v2696, %v2688
            %v3115 = vpack.c.bf16 %v2698, %v2690
            %v3116 = vpack.c.bf16 %v2700, %v2692
            %v3117 = vpack.c.bf16 %v2710, %v2702
            %v3118 = vpack.c.bf16 %v2712, %v2704
            %v3119 = vpack.c.bf16 %v2714, %v2706
            %v3120 = vpack.c.bf16 %v2716, %v2708
            %3121 = vmatprep.subr.bf16.mxu0 %v2994
            %3122 = vmatpush1.bf16.msra.mxu0 %v2993
            %3123 = vmatprep.subr.bf16.mxu0 %v2998
            %3124 = vmatpush1.bf16.msra.mxu0 %v2997
            %3125 = vmatprep.subr.bf16.mxu0 %v3002
            %3126 = vmatpush1.bf16.msra.mxu0 %v3001
            %3127 = vmatprep.subr.bf16.mxu0 %v3006
            %3128 = vmatpush1.bf16.msra.mxu0 %v3005
            %3129 = vmatprep.subr.bf16.mxu0 %v3010
            %3130 = vmatpush1.bf16.msra.mxu0 %v3009
            %3131 = vmatprep.subr.bf16.mxu0 %v3014
            %3132 = vmatpush1.bf16.msra.mxu0 %v3013
            %3133 = vmatprep.subr.bf16.mxu0 %v3018
            %3134 = vmatpush1.bf16.msra.mxu0 %v3017
            %3135 = vmatprep.subr.bf16.mxu0 %v3022
            %3136 = vmatpush1.bf16.msra.mxu0 %v3021
            %3137 = vmatprep.subr.bf16.mxu0 %v3026
            %3138 = vmatpush1.bf16.msra.mxu0 %v3025
            %3139 = vmatprep.subr.bf16.mxu0 %v3030
            %3140 = vmatpush1.bf16.msra.mxu0 %v3029
            %3141 = vmatprep.subr.bf16.mxu0 %v3034
            %3142 = vmatpush1.bf16.msra.mxu0 %v3033
            %3143 = vmatprep.subr.bf16.mxu0 %v3038
            %3144 = vmatpush1.bf16.msra.mxu0 %v3037
            %3145 = vmatprep.subr.bf16.mxu0 %v3042
            %3146 = vmatpush1.bf16.msra.mxu0 %v3041
            %3147 = vmatprep.subr.bf16.mxu0 %v3046
            %3148 = vmatpush1.bf16.msra.mxu0 %v3045
            %3149 = vmatprep.subr.bf16.mxu0 %v3050
            %3150 = vmatpush1.bf16.msra.mxu0 %v3049
            %3151 = vmatprep.subr.bf16.mxu0 %v3054
            %3152 = vmatpush1.bf16.msra.mxu0 %v3053
            %3153 = vmatprep.mubr.bf16.mxu0 %v790
            %3154 = vmatmul.mubr.bf16.gmra.mrb[0].mxu0 %v789
            %v3155 = vpop.f32.mrb[0].mxu0
            %v3156 = vadd.f32 0.0, %v3155
            %v3157 = vpop.f32.mrb[0].mxu0
            %v3158 = vadd.f32 0.0, %v3157
            %v3159 = vpop.f32.mrb[0].mxu0
            %v3160 = vpop.f32.mrb[0].mxu0
            %3161 = vdwg.mxu0
            %3162 = vmatprep.subr.bf16.mxu0 %v3058
            %3163 = vmatpush1.bf16.msra.mxu0 %v3057
            %3164 = vmatprep.subr.bf16.mxu0 %v3062
            %3165 = vmatpush1.bf16.msra.mxu0 %v3061
            %3166 = vmatprep.subr.bf16.mxu0 %v3066
            %3167 = vmatpush1.bf16.msra.mxu0 %v3065
            %3168 = vmatprep.subr.bf16.mxu0 %v3070
            %3169 = vmatpush1.bf16.msra.mxu0 %v3069
            %3170 = vmatprep.subr.bf16.mxu0 %v3074
            %3171 = vmatpush1.bf16.msra.mxu0 %v3073
            %3172 = vmatprep.subr.bf16.mxu0 %v3078
            %3173 = vmatpush1.bf16.msra.mxu0 %v3077
            %3174 = vmatprep.subr.bf16.mxu0 %v3082
            %3175 = vmatpush1.bf16.msra.mxu0 %v3081
            %3176 = vmatprep.subr.bf16.mxu0 %v3086
            %3177 = vmatpush1.bf16.msra.mxu0 %v3085
            %3178 = vmatprep.subr.bf16.mxu0 %v3090
            %3179 = vmatpush1.bf16.msra.mxu0 %v3089
            %3180 = vmatprep.subr.bf16.mxu0 %v3094
            %3181 = vmatpush1.bf16.msra.mxu0 %v3093
            %3182 = vmatprep.subr.bf16.mxu0 %v3098
            %3183 = vmatpush1.bf16.msra.mxu0 %v3097
            %3184 = vmatprep.subr.bf16.mxu0 %v3102
            %3185 = vmatpush1.bf16.msra.mxu0 %v3101
            %3186 = vmatprep.subr.bf16.mxu0 %v3106
            %3187 = vmatpush1.bf16.msra.mxu0 %v3105
            %3188 = vmatprep.subr.bf16.mxu0 %v3110
            %3189 = vmatpush1.bf16.msra.mxu0 %v3109
            %3190 = vmatprep.subr.bf16.mxu0 %v3114
            %3191 = vmatpush1.bf16.msra.mxu0 %v3113
            %3192 = vmatprep.subr.bf16.mxu0 %v3118
            %3193 = vmatpush1.bf16.msra.mxu0 %v3117
            %3194 = vmatprep.mubr.bf16.mxu0 %v792
            %3195 = vmatmul.mubr.bf16.gmra.mrb[0].mxu0 %v791
            %v3196 = vpop.f32.mrb[0].mxu0
            %v3197 = vadd.f32 %v3156, %v3196
            %v3198 = vpop.f32.mrb[0].mxu0
            %v3199 = vadd.f32 %v3158, %v3198
            %v3200 = vpop.f32.mrb[0].mxu0
            %v3201 = vpop.f32.mrb[0].mxu0
            %3202 = vdwg.mxu0
            %3203 = vmatprep.subr.bf16.mxu0 %v2996
            %3204 = vmatpush1.bf16.msra.mxu0 %v2995
            %3205 = vmatprep.subr.bf16.mxu0 %v3000
            %3206 = vmatpush1.bf16.msra.mxu0 %v2999
            %3207 = vmatprep.subr.bf16.mxu0 %v3004
            %3208 = vmatpush1.bf16.msra.mxu0 %v3003
            %3209 = vmatprep.subr.bf16.mxu0 %v3008
            %3210 = vmatpush1.bf16.msra.mxu0 %v3007
            %3211 = vmatprep.subr.bf16.mxu0 %v3012
            %3212 = vmatpush1.bf16.msra.mxu0 %v3011
            %3213 = vmatprep.subr.bf16.mxu0 %v3016
            %3214 = vmatpush1.bf16.msra.mxu0 %v3015
            %3215 = vmatprep.subr.bf16.mxu0 %v3020
            %3216 = vmatpush1.bf16.msra.mxu0 %v3019
            %3217 = vmatprep.subr.bf16.mxu0 %v3024
            %3218 = vmatpush1.bf16.msra.mxu0 %v3023
            %3219 = vmatprep.subr.bf16.mxu0 %v3028
            %3220 = vmatpush1.bf16.msra.mxu0 %v3027
            %3221 = vmatprep.subr.bf16.mxu0 %v3032
            %3222 = vmatpush1.bf16.msra.mxu0 %v3031
            %3223 = vmatprep.subr.bf16.mxu0 %v3036
            %3224 = vmatpush1.bf16.msra.mxu0 %v3035
            %3225 = vmatprep.subr.bf16.mxu0 %v3040
            %3226 = vmatpush1.bf16.msra.mxu0 %v3039
            %3227 = vmatprep.subr.bf16.mxu0 %v3044
            %3228 = vmatpush1.bf16.msra.mxu0 %v3043
            %3229 = vmatprep.subr.bf16.mxu0 %v3048
            %3230 = vmatpush1.bf16.msra.mxu0 %v3047
            %3231 = vmatprep.subr.bf16.mxu0 %v3052
            %3232 = vmatpush1.bf16.msra.mxu0 %v3051
            %3233 = vmatprep.subr.bf16.mxu0 %v3056
            %3234 = vmatpush1.bf16.msra.mxu0 %v3055
            %3235 = vmatprep.mubr.bf16.mxu0 %v790
            %3236 = vmatmul.mubr.bf16.gmra.mrb[0].mxu0 %v789
            %v3237 = vpop.f32.mrb[0].mxu0
            %v3238 = vadd.f32 0.0, %v3237
            %v3239 = vpop.f32.mrb[0].mxu0
            %v3240 = vadd.f32 0.0, %v3239
            %v3241 = vpop.f32.mrb[0].mxu0
            %v3242 = vpop.f32.mrb[0].mxu0
            %3243 = vdwg.mxu0
            %3244 = vmatprep.subr.bf16.mxu0 %v3060
            %3245 = vmatpush1.bf16.msra.mxu0 %v3059
            %3246 = vmatprep.subr.bf16.mxu0 %v3064
            %3247 = vmatpush1.bf16.msra.mxu0 %v3063
            %3248 = vmatprep.subr.bf16.mxu0 %v3068
            %3249 = vmatpush1.bf16.msra.mxu0 %v3067
            %3250 = vmatprep.subr.bf16.mxu0 %v3072
            %3251 = vmatpush1.bf16.msra.mxu0 %v3071
            %3252 = vmatprep.subr.bf16.mxu0 %v3076
            %3253 = vmatpush1.bf16.msra.mxu0 %v3075
            %3254 = vmatprep.subr.bf16.mxu0 %v3080
            %3255 = vmatpush1.bf16.msra.mxu0 %v3079
            %3256 = vmatprep.subr.bf16.mxu0 %v3084
            %3257 = vmatpush1.bf16.msra.mxu0 %v3083
            %3258 = vmatprep.subr.bf16.mxu0 %v3088
            %3259 = vmatpush1.bf16.msra.mxu0 %v3087
            %3260 = vmatprep.subr.bf16.mxu0 %v3092
            %3261 = vmatpush1.bf16.msra.mxu0 %v3091
            %3262 = vmatprep.subr.bf16.mxu0 %v3096
            %3263 = vmatpush1.bf16.msra.mxu0 %v3095
            %3264 = vmatprep.subr.bf16.mxu0 %v3100
            %3265 = vmatpush1.bf16.msra.mxu0 %v3099
            %3266 = vmatprep.subr.bf16.mxu0 %v3104
            %3267 = vmatpush1.bf16.msra.mxu0 %v3103
            %3268 = vmatprep.subr.bf16.mxu0 %v3108
            %3269 = vmatpush1.bf16.msra.mxu0 %v3107
            %3270 = vmatprep.subr.bf16.mxu0 %v3112
            %3271 = vmatpush1.bf16.msra.mxu0 %v3111
            %3272 = vmatprep.subr.bf16.mxu0 %v3116
            %3273 = vmatpush1.bf16.msra.mxu0 %v3115
            %3274 = vmatprep.subr.bf16.mxu0 %v3120
            %3275 = vmatpush1.bf16.msra.mxu0 %v3119
            %3276 = vmatprep.mubr.bf16.mxu0 %v792
            %3277 = vmatmul.mubr.bf16.gmra.mrb[0].mxu0 %v791
            %v3278 = vpop.f32.mrb[0].mxu0
            %v3279 = vadd.f32 %v3238, %v3278
            %v3280 = vpop.f32.mrb[0].mxu0
            %v3281 = vadd.f32 %v3240, %v3280
            %v3282 = vpop.f32.mrb[0].mxu0
            %v3283 = vpop.f32.mrb[0].mxu0
            %3284 = vdwg.mxu0
            %v3285 = vrcp.pop %v2785
            %v3286 = vrcp.pop %v2854
            %v3287 = vrcp.pop %v2923
            %v3288 = vrcp.pop %v2992
            %v3289 = vmul.f32 %v3197, %v3285
            %v3290 = vmul.f32 %v3199, %v3286
            %v3291 = vmul.f32 %v3279, %v3287
            %v3292 = vmul.f32 %v3281, %v3288
            %s3293 = smul.u32 %s637, 4
            %s3294 = smul.addr %s3293, 4
            %s3295 = scalar_lea.vmem %s5, %s3294
            %v3296 = vld [vmem:[%s3295] sm:$0xf]
            %v3297 = vld [vmem:[%s3295 + $0x4] sm:$0xf]
            %v3298 = vld [vmem:[%s3295 + $0x8] sm:$0xf]
            %v3299 = vld [vmem:[%s3295 + $0xc] sm:$0xf]
            %v3300 = vpack.c.bf16 %v3289, %v3289
            %v3301 = vpack.c.bf16 %v3290, %v3290
            %v3302 = vpack.c.bf16 %v3291, %v3291
            %v3303 = vpack.c.bf16 %v3292, %v3292
            %v3308 = vunpack.c.l.b16 %v3296
            %v3309 = vunpack.c.l.b16 %v3297
            %v3310 = vunpack.c.l.b16 %v3298
            %v3311 = vunpack.c.l.b16 %v3299
            %v3312 = vpack.c.b16 %v3309, %v3308
            %v3313 = vpack.c.b16 %v3311, %v3310
            %v3315 = vsel %vm857, %v3312, 0
            %v3318 = vsel %vm857, %v3313, 0
            %v3321 = vsel %vm954, %v3300, 0
            %v3324 = vsel %vm954, %v3301, 0
            %v3327 = vsel %vm954, %v3302, 0
            %v3330 = vsel %vm954, %v3303, 0
            %3332 = vmatprep.subr.bf16.mxu0 %v3324
            %3333 = vmatpush1.bf16.msra.mxu0 %v3321
            %3334 = vmatprep.subr.bf16.mxu0 0
            %3335 = vmatpush1.bf16.msra.mxu0 0
            %3336 = vmatprep.subr.bf16.mxu0 0
            %3337 = vmatpush1.bf16.msra.mxu0 0
            %3338 = vmatprep.subr.bf16.mxu0 0
            %3339 = vmatpush1.bf16.msra.mxu0 0
            %3340 = vmatprep.subr.bf16.mxu0 0
            %3341 = vmatpush1.bf16.msra.mxu0 0
            %3342 = vmatprep.subr.bf16.mxu0 0
            %3343 = vmatpush1.bf16.msra.mxu0 0
            %3344 = vmatprep.subr.bf16.mxu0 0
            %3345 = vmatpush1.bf16.msra.mxu0 0
            %3346 = vmatprep.subr.bf16.mxu0 0
            %3347 = vmatpush1.bf16.msra.mxu0 0
            %3348 = vmatprep.subr.bf16.mxu0 0
            %3349 = vmatpush1.bf16.msra.mxu0 0
            %3350 = vmatprep.subr.bf16.mxu0 0
            %3351 = vmatpush1.bf16.msra.mxu0 0
            %3352 = vmatprep.subr.bf16.mxu0 0
            %3353 = vmatpush1.bf16.msra.mxu0 0
            %3354 = vmatprep.subr.bf16.mxu0 0
            %3355 = vmatpush1.bf16.msra.mxu0 0
            %3356 = vmatprep.subr.bf16.mxu0 0
            %3357 = vmatpush1.bf16.msra.mxu0 0
            %3358 = vmatprep.subr.bf16.mxu0 0
            %3359 = vmatpush1.bf16.msra.mxu0 0
            %3360 = vmatprep.subr.bf16.mxu0 0
            %3361 = vmatpush1.bf16.msra.mxu0 0
            %3362 = vmatprep.subr.bf16.mxu0 0
            %3363 = vmatpush1.bf16.msra.mxu0 0
            %3364 = vmatprep.mubr.bf16.mxu0 0
            %3365 = vmatmul.mubr.bf16.gmra.mrb[0].mxu0 %v3315
            %v3366 = vpop.f32.mrb[0].mxu0
            %v3367 = vadd.f32 0.0, %v3366
            %v3368 = vpop.f32.mrb[0].mxu0
            %v3369 = vadd.f32 0.0, %v3368
            %v3370 = vpop.f32.mrb[0].mxu0
            %v3371 = vadd.f32 0.0, %v3370
            %v3372 = vpop.f32.mrb[0].mxu0
            %v3373 = vadd.f32 0.0, %v3372
            %3374 = vmatprep.mubr.bf16.mxu0 0
            %3375 = vmatmul.mubr.bf16.gmra.mrb[0].mxu0 %v3318
            %v3376 = vpop.f32.mrb[0].mxu0
            %v3377 = vadd.f32 0.0, %v3376
            %v3378 = vpop.f32.mrb[0].mxu0
            %v3379 = vadd.f32 0.0, %v3378
            %v3380 = vpop.f32.mrb[0].mxu0
            %v3381 = vadd.f32 0.0, %v3380
            %v3382 = vpop.f32.mrb[0].mxu0
            %v3383 = vadd.f32 0.0, %v3382
            %3384 = vdwg.mxu0
            %3385 = vmatprep.subr.bf16.mxu0 %v3330
            %3386 = vmatpush1.bf16.msra.mxu0 %v3327
            %3387 = vmatprep.subr.bf16.mxu0 0
            %3388 = vmatpush1.bf16.msra.mxu0 0
            %3389 = vmatprep.subr.bf16.mxu0 0
            %3390 = vmatpush1.bf16.msra.mxu0 0
            %3391 = vmatprep.subr.bf16.mxu0 0
            %3392 = vmatpush1.bf16.msra.mxu0 0
            %3393 = vmatprep.subr.bf16.mxu0 0
            %3394 = vmatpush1.bf16.msra.mxu0 0
            %3395 = vmatprep.subr.bf16.mxu0 0
            %3396 = vmatpush1.bf16.msra.mxu0 0
            %3397 = vmatprep.subr.bf16.mxu0 0
            %3398 = vmatpush1.bf16.msra.mxu0 0
            %3399 = vmatprep.subr.bf16.mxu0 0
            %3400 = vmatpush1.bf16.msra.mxu0 0
            %3401 = vmatprep.subr.bf16.mxu0 0
            %3402 = vmatpush1.bf16.msra.mxu0 0
            %3403 = vmatprep.subr.bf16.mxu0 0
            %3404 = vmatpush1.bf16.msra.mxu0 0
            %3405 = vmatprep.subr.bf16.mxu0 0
            %3406 = vmatpush1.bf16.msra.mxu0 0
            %3407 = vmatprep.subr.bf16.mxu0 0
            %3408 = vmatpush1.bf16.msra.mxu0 0
            %3409 = vmatprep.subr.bf16.mxu0 0
            %3410 = vmatpush1.bf16.msra.mxu0 0
            %3411 = vmatprep.subr.bf16.mxu0 0
            %3412 = vmatpush1.bf16.msra.mxu0 0
            %3413 = vmatprep.subr.bf16.mxu0 0
            %3414 = vmatpush1.bf16.msra.mxu0 0
            %3415 = vmatprep.subr.bf16.mxu0 0
            %3416 = vmatpush1.bf16.msra.mxu0 0
            %3417 = vmatprep.mubr.bf16.mxu0 0
            %3418 = vmatmul.mubr.bf16.gmra.mrb[0].mxu0 %v3315
            %v3419 = vpop.f32.mrb[0].mxu0
            %v3420 = vadd.f32 0.0, %v3419
            %v3421 = vpop.f32.mrb[0].mxu0
            %v3422 = vadd.f32 0.0, %v3421
            %v3423 = vpop.f32.mrb[0].mxu0
            %v3424 = vadd.f32 0.0, %v3423
            %v3425 = vpop.f32.mrb[0].mxu0
            %v3426 = vadd.f32 0.0, %v3425
            %3427 = vmatprep.mubr.bf16.mxu0 0
            %3428 = vmatmul.mubr.bf16.gmra.mrb[0].mxu0 %v3318
            %v3429 = vpop.f32.mrb[0].mxu0
            %v3430 = vadd.f32 0.0, %v3429
            %v3431 = vpop.f32.mrb[0].mxu0
            %v3432 = vadd.f32 0.0, %v3431
            %v3433 = vpop.f32.mrb[0].mxu0
            %v3434 = vadd.f32 0.0, %v3433
            %v3435 = vpop.f32.mrb[0].mxu0
            %v3436 = vadd.f32 0.0, %v3435
            %3437 = vdwg.mxu0
            %v3438 = vadd.f32 %v620, %v3367
            %v3439 = vadd.f32 %v621, %v3369
            %v3440 = vadd.f32 %v622, %v3420
            %v3441 = vadd.f32 %v623, %v3422
            %v3442 = vadd.f32 %v624, %v3371
            %v3443 = vadd.f32 %v625, %v3373
            %v3444 = vadd.f32 %v626, %v3424
            %v3445 = vadd.f32 %v627, %v3426
            %v3446 = vadd.f32 %v628, %v3377
            %v3447 = vadd.f32 %v629, %v3379
            %v3448 = vadd.f32 %v630, %v3430
            %v3449 = vadd.f32 %v631, %v3432
            %v3450 = vadd.f32 %v632, %v3381
            %v3451 = vadd.f32 %v633, %v3383
            %v3452 = vadd.f32 %v634, %v3434
            %v3453 = vadd.f32 %v635, %v3436
          $region84: #{classifier_forward.1} parent=76 // loop_footer
            %s619 = sadd.s32 1, %s615
          $region85: #{classifier_forward.1} parent=76 // loop_footer_branch
            %614 = sbr.rel target = $region81
          $region86: #{classifier_forward.1} parent=76 // loop_exit
            _
          %v3454 = vadd.f32 %v548, %v620
          %v3455 = vadd.f32 %v549, %v621
          %v3456 = vadd.f32 %v550, %v622
          %v3457 = vadd.f32 %v551, %v623
          %v3458 = vadd.f32 %v552, %v624
          %v3459 = vadd.f32 %v553, %v625
          %v3460 = vadd.f32 %v554, %v626
          %v3461 = vadd.f32 %v555, %v627
          %v3462 = vadd.f32 %v556, %v628
          %v3463 = vadd.f32 %v557, %v629
          %v3464 = vadd.f32 %v558, %v630
          %v3465 = vadd.f32 %v559, %v631
          %v3466 = vadd.f32 %v560, %v632
          %v3467 = vadd.f32 %v561, %v633
          %v3468 = vadd.f32 %v562, %v634
          %v3469 = vadd.f32 %v563, %v635
          %3471 = vset.pattern.permute.xlu0 0
          %3472 = vperm.xlu0 %3471, %v582
          %v3473 = vpop.permute.xlu0 %3472
          %3476 = vset.pattern.permute.xlu0 0
          %3477 = vperm.xlu0 %3476, %v583
          %v3478 = vpop.permute.xlu0 %3477
          %3481 = vset.pattern.permute.xlu0 0
          %3482 = vperm.xlu0 %3481, %v584
          %v3483 = vpop.permute.xlu0 %3482
          %3486 = vset.pattern.permute.xlu0 0
          %3487 = vperm.xlu0 %3486, %v585
          %v3488 = vpop.permute.xlu0 %3487
          %v3490 = vadd.f32 %v3454, %v3473
          %v3491 = vadd.f32 %v3455, %v3473
          %v3492 = vadd.f32 %v3456, %v3473
          %v3493 = vadd.f32 %v3457, %v3473
          %v3494 = vadd.f32 %v3458, %v3478
          %v3495 = vadd.f32 %v3459, %v3478
          %v3496 = vadd.f32 %v3460, %v3478
          %v3497 = vadd.f32 %v3461, %v3478
          %v3498 = vadd.f32 %v3462, %v3483
          %v3499 = vadd.f32 %v3463, %v3483
          %v3500 = vadd.f32 %v3464, %v3483
          %v3501 = vadd.f32 %v3465, %v3483
          %v3502 = vadd.f32 %v3466, %v3488
          %v3503 = vadd.f32 %v3467, %v3488
          %v3504 = vadd.f32 %v3468, %v3488
          %v3505 = vadd.f32 %v3469, %v3488
          %v3506 = vadd.f32 %v3490, %v3494
          %v3507 = vadd.f32 %v3506, %v3498
          %v3508 = vadd.f32 %v3507, %v3502
          %v3509 = vrot.slane %v3508, 4
          %v3510 = vadd.f32 %v3508, %v3509
          %v3511 = vrot.slane %v3510, 2
          %v3512 = vadd.f32 %v3510, %v3511
          %v3513 = vrot.slane %v3512, 1
          %v3514 = vadd.f32 %v3512, %v3513
          %v3515 = vadd.f32 %v3491, %v3495
          %v3516 = vadd.f32 %v3515, %v3499
          %v3517 = vadd.f32 %v3516, %v3503
          %v3518 = vrot.slane %v3517, 4
          %v3519 = vadd.f32 %v3517, %v3518
          %v3520 = vrot.slane %v3519, 2
          %v3521 = vadd.f32 %v3519, %v3520
          %v3522 = vrot.slane %v3521, 1
          %v3523 = vadd.f32 %v3521, %v3522
          %v3524 = vadd.f32 %v3492, %v3496
          %v3525 = vadd.f32 %v3524, %v3500
          %v3526 = vadd.f32 %v3525, %v3504
          %v3527 = vrot.slane %v3526, 4
          %v3528 = vadd.f32 %v3526, %v3527
          %v3529 = vrot.slane %v3528, 2
          %v3530 = vadd.f32 %v3528, %v3529
          %v3531 = vrot.slane %v3530, 1
          %v3532 = vadd.f32 %v3530, %v3531
          %v3533 = vadd.f32 %v3493, %v3497
          %v3534 = vadd.f32 %v3533, %v3501
          %v3535 = vadd.f32 %v3534, %v3505
          %v3536 = vrot.slane %v3535, 4
          %v3537 = vadd.f32 %v3535, %v3536
          %v3538 = vrot.slane %v3537, 2
          %v3539 = vadd.f32 %v3537, %v3538
          %v3540 = vrot.slane %v3539, 1
          %v3541 = vadd.f32 %v3539, %v3540
          %v3542 = vrcp.pop 32.0
          %v3543 = vmul.f32 %v3514, %v3542
          %v3544 = vmul.f32 %v3523, %v3542
          %v3545 = vmul.f32 %v3532, %v3542
          %v3546 = vmul.f32 %v3541, %v3542
          %v3547 = vsub.f32 %v3490, %v3543
          %v3548 = vsub.f32 %v3491, %v3544
          %v3549 = vsub.f32 %v3492, %v3545
          %v3550 = vsub.f32 %v3493, %v3546
          %v3551 = vsub.f32 %v3494, %v3543
          %v3552 = vsub.f32 %v3495, %v3544
          %v3553 = vsub.f32 %v3496, %v3545
          %v3554 = vsub.f32 %v3497, %v3546
          %v3555 = vsub.f32 %v3498, %v3543
          %v3556 = vsub.f32 %v3499, %v3544
          %v3557 = vsub.f32 %v3500, %v3545
          %v3558 = vsub.f32 %v3501, %v3546
          %v3559 = vsub.f32 %v3502, %v3543
          %v3560 = vsub.f32 %v3503, %v3544
          %v3561 = vsub.f32 %v3504, %v3545
          %v3562 = vsub.f32 %v3505, %v3546
          %v3563 = vmul.f32 %v3547, %v3547
          %v3564 = vmul.f32 %v3548, %v3548
          %v3565 = vmul.f32 %v3549, %v3549
          %v3566 = vmul.f32 %v3550, %v3550
          %v3567 = vmul.f32 %v3551, %v3551
          %v3568 = vmul.f32 %v3552, %v3552
          %v3569 = vmul.f32 %v3553, %v3553
          %v3570 = vmul.f32 %v3554, %v3554
          %v3571 = vmul.f32 %v3555, %v3555
          %v3572 = vmul.f32 %v3556, %v3556
          %v3573 = vmul.f32 %v3557, %v3557
          %v3574 = vmul.f32 %v3558, %v3558
          %v3575 = vmul.f32 %v3559, %v3559
          %v3576 = vmul.f32 %v3560, %v3560
          %v3577 = vmul.f32 %v3561, %v3561
          %v3578 = vmul.f32 %v3562, %v3562
          %v3579 = vadd.f32 %v3563, %v3567
          %v3580 = vadd.f32 %v3579, %v3571
          %v3581 = vadd.f32 %v3580, %v3575
          %v3582 = vrot.slane %v3581, 4
          %v3583 = vadd.f32 %v3581, %v3582
          %v3584 = vrot.slane %v3583, 2
          %v3585 = vadd.f32 %v3583, %v3584
          %v3586 = vrot.slane %v3585, 1
          %v3587 = vadd.f32 %v3585, %v3586
          %v3588 = vadd.f32 %v3564, %v3568
          %v3589 = vadd.f32 %v3588, %v3572
          %v3590 = vadd.f32 %v3589, %v3576
          %v3591 = vrot.slane %v3590, 4
          %v3592 = vadd.f32 %v3590, %v3591
          %v3593 = vrot.slane %v3592, 2
          %v3594 = vadd.f32 %v3592, %v3593
          %v3595 = vrot.slane %v3594, 1
          %v3596 = vadd.f32 %v3594, %v3595
          %v3597 = vadd.f32 %v3565, %v3569
          %v3598 = vadd.f32 %v3597, %v3573
          %v3599 = vadd.f32 %v3598, %v3577
          %v3600 = vrot.slane %v3599, 4
          %v3601 = vadd.f32 %v3599, %v3600
          %v3602 = vrot.slane %v3601, 2
          %v3603 = vadd.f32 %v3601, %v3602
          %v3604 = vrot.slane %v3603, 1
          %v3605 = vadd.f32 %v3603, %v3604
          %v3606 = vadd.f32 %v3566, %v3570
          %v3607 = vadd.f32 %v3606, %v3574
          %v3608 = vadd.f32 %v3607, %v3578
          %v3609 = vrot.slane %v3608, 4
          %v3610 = vadd.f32 %v3608, %v3609
          %v3611 = vrot.slane %v3610, 2
          %v3612 = vadd.f32 %v3610, %v3611
          %v3613 = vrot.slane %v3612, 1
          %v3614 = vadd.f32 %v3612, %v3613
          %v3615 = vmul.f32 %v3587, %v3542
          %v3616 = vmul.f32 %v3596, %v3542
          %v3617 = vmul.f32 %v3605, %v3542
          %v3618 = vmul.f32 %v3614, %v3542
          %v3619 = vadd.f32 %v3615, 1e-05
          %v3620 = vadd.f32 %v3616, 1e-05
          %v3621 = vadd.f32 %v3617, 1e-05
          %v3622 = vadd.f32 %v3618, 1e-05
          %v3623 = vrsqrt.pop %v3619
          %v3624 = vrsqrt.pop %v3620
          %v3625 = vrsqrt.pop %v3621
          %v3626 = vrsqrt.pop %v3622
          %v3627 = vmul.f32 %v3547, %v3623
          %v3628 = vmul.f32 %v3548, %v3624
          %v3629 = vmul.f32 %v3549, %v3625
          %v3630 = vmul.f32 %v3550, %v3626
          %v3631 = vmul.f32 %v3551, %v3623
          %v3632 = vmul.f32 %v3552, %v3624
          %v3633 = vmul.f32 %v3553, %v3625
          %v3634 = vmul.f32 %v3554, %v3626
          %v3635 = vmul.f32 %v3555, %v3623
          %v3636 = vmul.f32 %v3556, %v3624
          %v3637 = vmul.f32 %v3557, %v3625
          %v3638 = vmul.f32 %v3558, %v3626
          %v3639 = vmul.f32 %v3559, %v3623
          %v3640 = vmul.f32 %v3560, %v3624
          %v3641 = vmul.f32 %v3561, %v3625
          %v3642 = vmul.f32 %v3562, %v3626
          %3644 = vset.pattern.permute.xlu0 0
          %3645 = vperm.xlu0 %3644, %v586
          %v3646 = vpop.permute.xlu0 %3645
          %3649 = vset.pattern.permute.xlu0 0
          %3650 = vperm.xlu0 %3649, %v587
          %v3651 = vpop.permute.xlu0 %3650
          %3654 = vset.pattern.permute.xlu0 0
          %3655 = vperm.xlu0 %3654, %v588
          %v3656 = vpop.permute.xlu0 %3655
          %3659 = vset.pattern.permute.xlu0 0
          %3660 = vperm.xlu0 %3659, %v589
          %v3661 = vpop.permute.xlu0 %3660
          %v3663 = vmul.f32 %v3627, %v3646
          %v3664 = vmul.f32 %v3628, %v3646
          %v3665 = vmul.f32 %v3629, %v3646
          %v3666 = vmul.f32 %v3630, %v3646
          %v3667 = vmul.f32 %v3631, %v3651
          %v3668 = vmul.f32 %v3632, %v3651
          %v3669 = vmul.f32 %v3633, %v3651
          %v3670 = vmul.f32 %v3634, %v3651
          %v3671 = vmul.f32 %v3635, %v3656
          %v3672 = vmul.f32 %v3636, %v3656
          %v3673 = vmul.f32 %v3637, %v3656
          %v3674 = vmul.f32 %v3638, %v3656
          %v3675 = vmul.f32 %v3639, %v3661
          %v3676 = vmul.f32 %v3640, %v3661
          %v3677 = vmul.f32 %v3641, %v3661
          %v3678 = vmul.f32 %v3642, %v3661
          %3680 = vset.pattern.permute.xlu0 0
          %3681 = vperm.xlu0 %3680, %v590
          %v3682 = vpop.permute.xlu0 %3681
          %3685 = vset.pattern.permute.xlu0 0
          %3686 = vperm.xlu0 %3685, %v591
          %v3687 = vpop.permute.xlu0 %3686
          %3690 = vset.pattern.permute.xlu0 0
          %3691 = vperm.xlu0 %3690, %v592
          %v3692 = vpop.permute.xlu0 %3691
          %3695 = vset.pattern.permute.xlu0 0
          %3696 = vperm.xlu0 %3695, %v593
          %v3697 = vpop.permute.xlu0 %3696
          %v3699 = vadd.f32 %v3663, %v3682
          %v3700 = vadd.f32 %v3664, %v3682
          %v3701 = vadd.f32 %v3665, %v3682
          %v3702 = vadd.f32 %v3666, %v3682
          %v3703 = vadd.f32 %v3667, %v3687
          %v3704 = vadd.f32 %v3668, %v3687
          %v3705 = vadd.f32 %v3669, %v3687
          %v3706 = vadd.f32 %v3670, %v3687
          %v3707 = vadd.f32 %v3671, %v3692
          %v3708 = vadd.f32 %v3672, %v3692
          %v3709 = vadd.f32 %v3673, %v3692
          %v3710 = vadd.f32 %v3674, %v3692
          %v3711 = vadd.f32 %v3675, %v3697
          %v3712 = vadd.f32 %v3676, %v3697
          %v3713 = vadd.f32 %v3677, %v3697
          %v3714 = vadd.f32 %v3678, %v3697
          %v3715 = vpack.c.bf16 %v3703, %v3699
          %v3716 = vpack.c.bf16 %v3704, %v3700
          %v3717 = vpack.c.bf16 %v3705, %v3701
          %v3718 = vpack.c.bf16 %v3706, %v3702
          %v3719 = vpack.c.bf16 %v3711, %v3707
          %v3720 = vpack.c.bf16 %v3712, %v3708
          %v3721 = vpack.c.bf16 %v3713, %v3709
          %v3722 = vpack.c.bf16 %v3714, %v3710
          %s3723 = smul.u32 %s543, 16
          %s3724 = smul.addr %s3723, 4
          %s3725 = scalar_lea.vmem %s6, %s3724
          %v3726 = vld [vmem:[%s3725] sm:$0xf]
          %v3727 = vld [vmem:[%s3725 + $0x4] sm:$0xf]
          %v3728 = vld [vmem:[%s3725 + $0x8] sm:$0xf]
          %v3729 = vld [vmem:[%s3725 + $0xc] sm:$0xf]
          %v3730 = vld [vmem:[%s3725 + $0x10] sm:$0xf]
          %v3731 = vld [vmem:[%s3725 + $0x14] sm:$0xf]
          %v3732 = vld [vmem:[%s3725 + $0x18] sm:$0xf]
          %v3733 = vld [vmem:[%s3725 + $0x1c] sm:$0xf]
          %v3734 = vld [vmem:[%s3725 + $0x20] sm:$0xf]
          %v3735 = vld [vmem:[%s3725 + $0x24] sm:$0xf]
          %v3736 = vld [vmem:[%s3725 + $0x28] sm:$0xf]
          %v3737 = vld [vmem:[%s3725 + $0x2c] sm:$0xf]
          %v3738 = vld [vmem:[%s3725 + $0x30] sm:$0xf]
          %v3739 = vld [vmem:[%s3725 + $0x34] sm:$0xf]
          %v3740 = vld [vmem:[%s3725 + $0x38] sm:$0xf]
          %v3741 = vld [vmem:[%s3725 + $0x3c] sm:$0xf]
          %3743 = vset.pattern.permute.xlu0 0
          %3744 = vperm.xlu0 %3743, %v566
          %v3745 = vpop.permute.xlu0 %3744
          %3748 = vset.pattern.permute.xlu0 0
          %3749 = vperm.xlu0 %3748, %v567
          %v3750 = vpop.permute.xlu0 %3749
          %3753 = vset.pattern.permute.xlu0 0
          %3754 = vperm.xlu0 %3753, %v568
          %v3755 = vpop.permute.xlu0 %3754
          %3758 = vset.pattern.permute.xlu0 0
          %3759 = vperm.xlu0 %3758, %v569
          %v3760 = vpop.permute.xlu0 %3759
          %3763 = vset.pattern.permute.xlu0 0
          %3764 = vperm.xlu0 %3763, %v570
          %v3765 = vpop.permute.xlu0 %3764
          %3768 = vset.pattern.permute.xlu0 0
          %3769 = vperm.xlu0 %3768, %v571
          %v3770 = vpop.permute.xlu0 %3769
          %3773 = vset.pattern.permute.xlu0 0
          %3774 = vperm.xlu0 %3773, %v572
          %v3775 = vpop.permute.xlu0 %3774
          %3778 = vset.pattern.permute.xlu0 0
          %3779 = vperm.xlu0 %3778, %v573
          %v3780 = vpop.permute.xlu0 %3779
          %3783 = vset.pattern.permute.xlu0 0
          %3784 = vperm.xlu0 %3783, %v574
          %v3785 = vpop.permute.xlu0 %3784
          %3788 = vset.pattern.permute.xlu0 0
          %3789 = vperm.xlu0 %3788, %v575
          %v3790 = vpop.permute.xlu0 %3789
          %3793 = vset.pattern.permute.xlu0 0
          %3794 = vperm.xlu0 %3793, %v576
          %v3795 = vpop.permute.xlu0 %3794
          %3798 = vset.pattern.permute.xlu0 0
          %3799 = vperm.xlu0 %3798, %v577
          %v3800 = vpop.permute.xlu0 %3799
          %3803 = vset.pattern.permute.xlu0 0
          %3804 = vperm.xlu0 %3803, %v578
          %v3805 = vpop.permute.xlu0 %3804
          %3808 = vset.pattern.permute.xlu0 0
          %3809 = vperm.xlu0 %3808, %v579
          %v3810 = vpop.permute.xlu0 %3809
          %3813 = vset.pattern.permute.xlu0 0
          %3814 = vperm.xlu0 %3813, %v580
          %v3815 = vpop.permute.xlu0 %3814
          %3818 = vset.pattern.permute.xlu0 0
          %3819 = vperm.xlu0 %3818, %v581
          %v3820 = vpop.permute.xlu0 %3819
          %v3838 = vunpack.c.l.b16 %v3726
          %v3839 = vunpack.c.l.b16 %v3727
          %v3840 = vunpack.c.l.b16 %v3728
          %v3841 = vunpack.c.l.b16 %v3729
          %v3842 = vunpack.c.l.b16 %v3730
          %v3843 = vunpack.c.l.b16 %v3731
          %v3844 = vunpack.c.l.b16 %v3732
          %v3845 = vunpack.c.l.b16 %v3733
          %v3846 = vunpack.c.l.b16 %v3734
          %v3847 = vunpack.c.l.b16 %v3735
          %v3848 = vunpack.c.l.b16 %v3736
          %v3849 = vunpack.c.l.b16 %v3737
          %v3850 = vunpack.c.l.b16 %v3738
          %v3851 = vunpack.c.l.b16 %v3739
          %v3852 = vunpack.c.l.b16 %v3740
          %v3853 = vunpack.c.l.b16 %v3741
          %v3854 = vpack.c.b16 %v3839, %v3838
          %v3855 = vpack.c.b16 %v3841, %v3840
          %v3856 = vpack.c.b16 %v3843, %v3842
          %v3857 = vpack.c.b16 %v3845, %v3844
          %v3858 = vpack.c.b16 %v3847, %v3846
          %v3859 = vpack.c.b16 %v3849, %v3848
          %v3860 = vpack.c.b16 %v3851, %v3850
          %v3861 = vpack.c.b16 %v3853, %v3852
          %vm3862 = vcmask 261120
          %v3864 = vsel %vm3862, %v3854, 0
          %v3867 = vsel %vm3862, %v3855, 0
          %v3870 = vsel %vm3862, %v3856, 0
          %v3873 = vsel %vm3862, %v3857, 0
          %v3876 = vsel %vm3862, %v3858, 0
          %v3879 = vsel %vm3862, %v3859, 0
          %v3882 = vsel %vm3862, %v3860, 0
          %v3885 = vsel %vm3862, %v3861, 0
          %3887 = vmatprep.subr.bf16.mxu0 %v3716
          %3888 = vmatpush1.bf16.msra.mxu0 %v3715
          %3889 = vmatprep.subr.bf16.mxu0 %v3720
          %3890 = vmatpush1.bf16.msra.mxu0 %v3719
          %3891 = vmatprep.subr.bf16.mxu0 0
          %3892 = vmatpush1.bf16.msra.mxu0 0
          %3893 = vmatprep.subr.bf16.mxu0 0
          %3894 = vmatpush1.bf16.msra.mxu0 0
          %3895 = vmatprep.subr.bf16.mxu0 0
          %3896 = vmatpush1.bf16.msra.mxu0 0
          %3897 = vmatprep.subr.bf16.mxu0 0
          %3898 = vmatpush1.bf16.msra.mxu0 0
          %3899 = vmatprep.subr.bf16.mxu0 0
          %3900 = vmatpush1.bf16.msra.mxu0 0
          %3901 = vmatprep.subr.bf16.mxu0 0
          %3902 = vmatpush1.bf16.msra.mxu0 0
          %3903 = vmatprep.subr.bf16.mxu0 0
          %3904 = vmatpush1.bf16.msra.mxu0 0
          %3905 = vmatprep.subr.bf16.mxu0 0
          %3906 = vmatpush1.bf16.msra.mxu0 0
          %3907 = vmatprep.subr.bf16.mxu0 0
          %3908 = vmatpush1.bf16.msra.mxu0 0
          %3909 = vmatprep.subr.bf16.mxu0 0
          %3910 = vmatpush1.bf16.msra.mxu0 0
          %3911 = vmatprep.subr.bf16.mxu0 0
          %3912 = vmatpush1.bf16.msra.mxu0 0
          %3913 = vmatprep.subr.bf16.mxu0 0
          %3914 = vmatpush1.bf16.msra.mxu0 0
          %3915 = vmatprep.subr.bf16.mxu0 0
          %3916 = vmatpush1.bf16.msra.mxu0 0
          %3917 = vmatprep.subr.bf16.mxu0 0
          %3918 = vmatpush1.bf16.msra.mxu0 0
          %3919 = vmatprep.mubr.bf16.mxu0 0
          %3920 = vmatmul.mubr.bf16.gmra.mrb[0].mxu0 %v3864
          %v3921 = vpop.f32.mrb[0].mxu0
          %v3922 = vadd.f32 %v3745, %v3921
          %v3923 = vpop.f32.mrb[0].mxu0
          %v3924 = vadd.f32 %v3745, %v3923
          %v3925 = vpop.f32.mrb[0].mxu0
          %v3926 = vadd.f32 %v3750, %v3925
          %v3927 = vpop.f32.mrb[0].mxu0
          %v3928 = vadd.f32 %v3750, %v3927
          %3929 = vmatprep.mubr.bf16.mxu0 0
          %3930 = vmatmul.mubr.bf16.gmra.mrb[0].mxu0 %v3867
          %v3931 = vpop.f32.mrb[0].mxu0
          %v3932 = vadd.f32 %v3755, %v3931
          %v3933 = vpop.f32.mrb[0].mxu0
          %v3934 = vadd.f32 %v3755, %v3933
          %v3935 = vpop.f32.mrb[0].mxu0
          %v3936 = vadd.f32 %v3760, %v3935
          %v3937 = vpop.f32.mrb[0].mxu0
          %v3938 = vadd.f32 %v3760, %v3937
          %3939 = vmatprep.mubr.bf16.mxu0 0
          %3940 = vmatmul.mubr.bf16.gmra.mrb[0].mxu0 %v3870
          %v3941 = vpop.f32.mrb[0].mxu0
          %v3942 = vadd.f32 %v3765, %v3941
          %v3943 = vpop.f32.mrb[0].mxu0
          %v3944 = vadd.f32 %v3765, %v3943
          %v3945 = vpop.f32.mrb[0].mxu0
          %v3946 = vadd.f32 %v3770, %v3945
          %v3947 = vpop.f32.mrb[0].mxu0
          %v3948 = vadd.f32 %v3770, %v3947
          %3949 = vmatprep.mubr.bf16.mxu0 0
          %3950 = vmatmul.mubr.bf16.gmra.mrb[0].mxu0 %v3873
          %v3951 = vpop.f32.mrb[0].mxu0
          %v3952 = vadd.f32 %v3775, %v3951
          %v3953 = vpop.f32.mrb[0].mxu0
          %v3954 = vadd.f32 %v3775, %v3953
          %v3955 = vpop.f32.mrb[0].mxu0
          %v3956 = vadd.f32 %v3780, %v3955
          %v3957 = vpop.f32.mrb[0].mxu0
          %v3958 = vadd.f32 %v3780, %v3957
          %3959 = vmatprep.mubr.bf16.mxu0 0
          %3960 = vmatmul.mubr.bf16.gmra.mrb[0].mxu0 %v3876
          %v3961 = vpop.f32.mrb[0].mxu0
          %v3962 = vadd.f32 %v3785, %v3961
          %v3963 = vpop.f32.mrb[0].mxu0
          %v3964 = vadd.f32 %v3785, %v3963
          %v3965 = vpop.f32.mrb[0].mxu0
          %v3966 = vadd.f32 %v3790, %v3965
          %v3967 = vpop.f32.mrb[0].mxu0
          %v3968 = vadd.f32 %v3790, %v3967
          %3969 = vmatprep.mubr.bf16.mxu0 0
          %3970 = vmatmul.mubr.bf16.gmra.mrb[0].mxu0 %v3879
          %v3971 = vpop.f32.mrb[0].mxu0
          %v3972 = vadd.f32 %v3795, %v3971
          %v3973 = vpop.f32.mrb[0].mxu0
          %v3974 = vadd.f32 %v3795, %v3973
          %v3975 = vpop.f32.mrb[0].mxu0
          %v3976 = vadd.f32 %v3800, %v3975
          %v3977 = vpop.f32.mrb[0].mxu0
          %v3978 = vadd.f32 %v3800, %v3977
          %3979 = vmatprep.mubr.bf16.mxu0 0
          %3980 = vmatmul.mubr.bf16.gmra.mrb[0].mxu0 %v3882
          %v3981 = vpop.f32.mrb[0].mxu0
          %v3982 = vadd.f32 %v3805, %v3981
          %v3983 = vpop.f32.mrb[0].mxu0
          %v3984 = vadd.f32 %v3805, %v3983
          %v3985 = vpop.f32.mrb[0].mxu0
          %v3986 = vadd.f32 %v3810, %v3985
          %v3987 = vpop.f32.mrb[0].mxu0
          %v3988 = vadd.f32 %v3810, %v3987
          %3989 = vmatprep.mubr.bf16.mxu0 0
          %3990 = vmatmul.mubr.bf16.gmra.mrb[0].mxu0 %v3885
          %v3991 = vpop.f32.mrb[0].mxu0
          %v3992 = vadd.f32 %v3815, %v3991
          %v3993 = vpop.f32.mrb[0].mxu0
          %v3994 = vadd.f32 %v3815, %v3993
          %v3995 = vpop.f32.mrb[0].mxu0
          %v3996 = vadd.f32 %v3820, %v3995
          %v3997 = vpop.f32.mrb[0].mxu0
          %v3998 = vadd.f32 %v3820, %v3997
          %3999 = vdwg.mxu0
          %4000 = vmatprep.subr.bf16.mxu0 %v3718
          %4001 = vmatpush1.bf16.msra.mxu0 %v3717
          %4002 = vmatprep.subr.bf16.mxu0 %v3722
          %4003 = vmatpush1.bf16.msra.mxu0 %v3721
          %4004 = vmatprep.subr.bf16.mxu0 0
          %4005 = vmatpush1.bf16.msra.mxu0 0
          %4006 = vmatprep.subr.bf16.mxu0 0
          %4007 = vmatpush1.bf16.msra.mxu0 0
          %4008 = vmatprep.subr.bf16.mxu0 0
          %4009 = vmatpush1.bf16.msra.mxu0 0
          %4010 = vmatprep.subr.bf16.mxu0 0
          %4011 = vmatpush1.bf16.msra.mxu0 0
          %4012 = vmatprep.subr.bf16.mxu0 0
          %4013 = vmatpush1.bf16.msra.mxu0 0
          %4014 = vmatprep.subr.bf16.mxu0 0
          %4015 = vmatpush1.bf16.msra.mxu0 0
          %4016 = vmatprep.subr.bf16.mxu0 0
          %4017 = vmatpush1.bf16.msra.mxu0 0
          %4018 = vmatprep.subr.bf16.mxu0 0
          %4019 = vmatpush1.bf16.msra.mxu0 0
          %4020 = vmatprep.subr.bf16.mxu0 0
          %4021 = vmatpush1.bf16.msra.mxu0 0
          %4022 = vmatprep.subr.bf16.mxu0 0
          %4023 = vmatpush1.bf16.msra.mxu0 0
          %4024 = vmatprep.subr.bf16.mxu0 0
          %4025 = vmatpush1.bf16.msra.mxu0 0
          %4026 = vmatprep.subr.bf16.mxu0 0
          %4027 = vmatpush1.bf16.msra.mxu0 0
          %4028 = vmatprep.subr.bf16.mxu0 0
          %4029 = vmatpush1.bf16.msra.mxu0 0
          %4030 = vmatprep.subr.bf16.mxu0 0
          %4031 = vmatpush1.bf16.msra.mxu0 0
          %4032 = vmatprep.mubr.bf16.mxu0 0
          %4033 = vmatmul.mubr.bf16.gmra.mrb[0].mxu0 %v3864
          %v4034 = vpop.f32.mrb[0].mxu0
          %v4035 = vadd.f32 %v3745, %v4034
          %v4036 = vpop.f32.mrb[0].mxu0
          %v4037 = vadd.f32 %v3745, %v4036
          %v4038 = vpop.f32.mrb[0].mxu0
          %v4039 = vadd.f32 %v3750, %v4038
          %v4040 = vpop.f32.mrb[0].mxu0
          %v4041 = vadd.f32 %v3750, %v4040
          %4042 = vmatprep.mubr.bf16.mxu0 0
          %4043 = vmatmul.mubr.bf16.gmra.mrb[0].mxu0 %v3867
          %v4044 = vpop.f32.mrb[0].mxu0
          %v4045 = vadd.f32 %v3755, %v4044
          %v4046 = vpop.f32.mrb[0].mxu0
          %v4047 = vadd.f32 %v3755, %v4046
          %v4048 = vpop.f32.mrb[0].mxu0
          %v4049 = vadd.f32 %v3760, %v4048
          %v4050 = vpop.f32.mrb[0].mxu0
          %v4051 = vadd.f32 %v3760, %v4050
          %4052 = vmatprep.mubr.bf16.mxu0 0
          %4053 = vmatmul.mubr.bf16.gmra.mrb[0].mxu0 %v3870
          %v4054 = vpop.f32.mrb[0].mxu0
          %v4055 = vadd.f32 %v3765, %v4054
          %v4056 = vpop.f32.mrb[0].mxu0
          %v4057 = vadd.f32 %v3765, %v4056
          %v4058 = vpop.f32.mrb[0].mxu0
          %v4059 = vadd.f32 %v3770, %v4058
          %v4060 = vpop.f32.mrb[0].mxu0
          %v4061 = vadd.f32 %v3770, %v4060
          %4062 = vmatprep.mubr.bf16.mxu0 0
          %4063 = vmatmul.mubr.bf16.gmra.mrb[0].mxu0 %v3873
          %v4064 = vpop.f32.mrb[0].mxu0
          %v4065 = vadd.f32 %v3775, %v4064
          %v4066 = vpop.f32.mrb[0].mxu0
          %v4067 = vadd.f32 %v3775, %v4066
          %v4068 = vpop.f32.mrb[0].mxu0
          %v4069 = vadd.f32 %v3780, %v4068
          %v4070 = vpop.f32.mrb[0].mxu0
          %v4071 = vadd.f32 %v3780, %v4070
          %4072 = vmatprep.mubr.bf16.mxu0 0
          %4073 = vmatmul.mubr.bf16.gmra.mrb[0].mxu0 %v3876
          %v4074 = vpop.f32.mrb[0].mxu0
          %v4075 = vadd.f32 %v3785, %v4074
          %v4076 = vpop.f32.mrb[0].mxu0
          %v4077 = vadd.f32 %v3785, %v4076
          %v4078 = vpop.f32.mrb[0].mxu0
          %v4079 = vadd.f32 %v3790, %v4078
          %v4080 = vpop.f32.mrb[0].mxu0
          %v4081 = vadd.f32 %v3790, %v4080
          %4082 = vmatprep.mubr.bf16.mxu0 0
          %4083 = vmatmul.mubr.bf16.gmra.mrb[0].mxu0 %v3879
          %v4084 = vpop.f32.mrb[0].mxu0
          %v4085 = vadd.f32 %v3795, %v4084
          %v4086 = vpop.f32.mrb[0].mxu0
          %v4087 = vadd.f32 %v3795, %v4086
          %v4088 = vpop.f32.mrb[0].mxu0
          %v4089 = vadd.f32 %v3800, %v4088
          %v4090 = vpop.f32.mrb[0].mxu0
          %v4091 = vadd.f32 %v3800, %v4090
          %4092 = vmatprep.mubr.bf16.mxu0 0
          %4093 = vmatmul.mubr.bf16.gmra.mrb[0].mxu0 %v3882
          %v4094 = vpop.f32.mrb[0].mxu0
          %v4095 = vadd.f32 %v3805, %v4094
          %v4096 = vpop.f32.mrb[0].mxu0
          %v4097 = vadd.f32 %v3805, %v4096
          %v4098 = vpop.f32.mrb[0].mxu0
          %v4099 = vadd.f32 %v3810, %v4098
          %v4100 = vpop.f32.mrb[0].mxu0
          %v4101 = vadd.f32 %v3810, %v4100
          %4102 = vmatprep.mubr.bf16.mxu0 0
          %4103 = vmatmul.mubr.bf16.gmra.mrb[0].mxu0 %v3885
          %v4104 = vpop.f32.mrb[0].mxu0
          %v4105 = vadd.f32 %v3815, %v4104
          %v4106 = vpop.f32.mrb[0].mxu0
          %v4107 = vadd.f32 %v3815, %v4106
          %v4108 = vpop.f32.mrb[0].mxu0
          %v4109 = vadd.f32 %v3820, %v4108
          %v4110 = vpop.f32.mrb[0].mxu0
          %v4111 = vadd.f32 %v3820, %v4110
          %4112 = vdwg.mxu0
          %v4113 = vmul.f32 %v3922, 0.5
          %v4114 = vmul.f32 %v3924, 0.5
          %v4115 = vmul.f32 %v4035, 0.5
          %v4116 = vmul.f32 %v4037, 0.5
          %v4117 = vmul.f32 %v3926, 0.5
          %v4118 = vmul.f32 %v3928, 0.5
          %v4119 = vmul.f32 %v4039, 0.5
          %v4120 = vmul.f32 %v4041, 0.5
          %v4121 = vmul.f32 %v3932, 0.5
          %v4122 = vmul.f32 %v3934, 0.5
          %v4123 = vmul.f32 %v4045, 0.5
          %v4124 = vmul.f32 %v4047, 0.5
          %v4125 = vmul.f32 %v3936, 0.5
          %v4126 = vmul.f32 %v3938, 0.5
          %v4127 = vmul.f32 %v4049, 0.5
          %v4128 = vmul.f32 %v4051, 0.5
          %v4129 = vmul.f32 %v3942, 0.5
          %v4130 = vmul.f32 %v3944, 0.5
          %v4131 = vmul.f32 %v4055, 0.5
          %v4132 = vmul.f32 %v4057, 0.5
          %v4133 = vmul.f32 %v3946, 0.5
          %v4134 = vmul.f32 %v3948, 0.5
          %v4135 = vmul.f32 %v4059, 0.5
          %v4136 = vmul.f32 %v4061, 0.5
          %v4137 = vmul.f32 %v3952, 0.5
          %v4138 = vmul.f32 %v3954, 0.5
          %v4139 = vmul.f32 %v4065, 0.5
          %v4140 = vmul.f32 %v4067, 0.5
          %v4141 = vmul.f32 %v3956, 0.5
          %v4142 = vmul.f32 %v3958, 0.5
          %v4143 = vmul.f32 %v4069, 0.5
          %v4144 = vmul.f32 %v4071, 0.5
          %v4145 = vmul.f32 %v3962, 0.5
          %v4146 = vmul.f32 %v3964, 0.5
          %v4147 = vmul.f32 %v4075, 0.5
          %v4148 = vmul.f32 %v4077, 0.5
          %v4149 = vmul.f32 %v3966, 0.5
          %v4150 = vmul.f32 %v3968, 0.5
          %v4151 = vmul.f32 %v4079, 0.5
          %v4152 = vmul.f32 %v4081, 0.5
          %v4153 = vmul.f32 %v3972, 0.5
          %v4154 = vmul.f32 %v3974, 0.5
          %v4155 = vmul.f32 %v4085, 0.5
          %v4156 = vmul.f32 %v4087, 0.5
          %v4157 = vmul.f32 %v3976, 0.5
          %v4158 = vmul.f32 %v3978, 0.5
          %v4159 = vmul.f32 %v4089, 0.5
          %v4160 = vmul.f32 %v4091, 0.5
          %v4161 = vmul.f32 %v3982, 0.5
          %v4162 = vmul.f32 %v3984, 0.5
          %v4163 = vmul.f32 %v4095, 0.5
          %v4164 = vmul.f32 %v4097, 0.5
          %v4165 = vmul.f32 %v3986, 0.5
          %v4166 = vmul.f32 %v3988, 0.5
          %v4167 = vmul.f32 %v4099, 0.5
          %v4168 = vmul.f32 %v4101, 0.5
          %v4169 = vmul.f32 %v3992, 0.5
          %v4170 = vmul.f32 %v3994, 0.5
          %v4171 = vmul.f32 %v4105, 0.5
          %v4172 = vmul.f32 %v4107, 0.5
          %v4173 = vmul.f32 %v3996, 0.5
          %v4174 = vmul.f32 %v3998, 0.5
          %v4175 = vmul.f32 %v4109, 0.5
          %v4176 = vmul.f32 %v4111, 0.5
          %v4177 = vmul.f32 %v3922, 0.044715
          %v4178 = vmul.f32 %v3924, 0.044715
          %v4179 = vmul.f32 %v4035, 0.044715
          %v4180 = vmul.f32 %v4037, 0.044715
          %v4181 = vmul.f32 %v3926, 0.044715
          %v4182 = vmul.f32 %v3928, 0.044715
          %v4183 = vmul.f32 %v4039, 0.044715
          %v4184 = vmul.f32 %v4041, 0.044715
          %v4185 = vmul.f32 %v3932, 0.044715
          %v4186 = vmul.f32 %v3934, 0.044715
          %v4187 = vmul.f32 %v4045, 0.044715
          %v4188 = vmul.f32 %v4047, 0.044715
          %v4189 = vmul.f32 %v3936, 0.044715
          %v4190 = vmul.f32 %v3938, 0.044715
          %v4191 = vmul.f32 %v4049, 0.044715
          %v4192 = vmul.f32 %v4051, 0.044715
          %v4193 = vmul.f32 %v3942, 0.044715
          %v4194 = vmul.f32 %v3944, 0.044715
          %v4195 = vmul.f32 %v4055, 0.044715
          %v4196 = vmul.f32 %v4057, 0.044715
          %v4197 = vmul.f32 %v3946, 0.044715
          %v4198 = vmul.f32 %v3948, 0.044715
          %v4199 = vmul.f32 %v4059, 0.044715
          %v4200 = vmul.f32 %v4061, 0.044715
          %v4201 = vmul.f32 %v3952, 0.044715
          %v4202 = vmul.f32 %v3954, 0.044715
          %v4203 = vmul.f32 %v4065, 0.044715
          %v4204 = vmul.f32 %v4067, 0.044715
          %v4205 = vmul.f32 %v3956, 0.044715
          %v4206 = vmul.f32 %v3958, 0.044715
          %v4207 = vmul.f32 %v4069, 0.044715
          %v4208 = vmul.f32 %v4071, 0.044715
          %v4209 = vmul.f32 %v3962, 0.044715
          %v4210 = vmul.f32 %v3964, 0.044715
          %v4211 = vmul.f32 %v4075, 0.044715
          %v4212 = vmul.f32 %v4077, 0.044715
          %v4213 = vmul.f32 %v3966, 0.044715
          %v4214 = vmul.f32 %v3968, 0.044715
          %v4215 = vmul.f32 %v4079, 0.044715
          %v4216 = vmul.f32 %v4081, 0.044715
          %v4217 = vmul.f32 %v3972, 0.044715
          %v4218 = vmul.f32 %v3974, 0.044715
          %v4219 = vmul.f32 %v4085, 0.044715
          %v4220 = vmul.f32 %v4087, 0.044715
          %v4221 = vmul.f32 %v3976, 0.044715
          %v4222 = vmul.f32 %v3978, 0.044715
          %v4223 = vmul.f32 %v4089, 0.044715
          %v4224 = vmul.f32 %v4091, 0.044715
          %v4225 = vmul.f32 %v3982, 0.044715
          %v4226 = vmul.f32 %v3984, 0.044715
          %v4227 = vmul.f32 %v4095, 0.044715
          %v4228 = vmul.f32 %v4097, 0.044715
          %v4229 = vmul.f32 %v3986, 0.044715
          %v4230 = vmul.f32 %v3988, 0.044715
          %v4231 = vmul.f32 %v4099, 0.044715
          %v4232 = vmul.f32 %v4101, 0.044715
          %v4233 = vmul.f32 %v3992, 0.044715
          %v4234 = vmul.f32 %v3994, 0.044715
          %v4235 = vmul.f32 %v4105, 0.044715
          %v4236 = vmul.f32 %v4107, 0.044715
          %v4237 = vmul.f32 %v3996, 0.044715
          %v4238 = vmul.f32 %v3998, 0.044715
          %v4239 = vmul.f32 %v4109, 0.044715
          %v4240 = vmul.f32 %v4111, 0.044715
          %v4241 = vmul.f32 %v4177, %v3922
          %v4242 = vmul.f32 %v4178, %v3924
          %v4243 = vmul.f32 %v4179, %v4035
          %v4244 = vmul.f32 %v4180, %v4037
          %v4245 = vmul.f32 %v4181, %v3926
          %v4246 = vmul.f32 %v4182, %v3928
          %v4247 = vmul.f32 %v4183, %v4039
          %v4248 = vmul.f32 %v4184, %v4041
          %v4249 = vmul.f32 %v4185, %v3932
          %v4250 = vmul.f32 %v4186, %v3934
          %v4251 = vmul.f32 %v4187, %v4045
          %v4252 = vmul.f32 %v4188, %v4047
          %v4253 = vmul.f32 %v4189, %v3936
          %v4254 = vmul.f32 %v4190, %v3938
          %v4255 = vmul.f32 %v4191, %v4049
          %v4256 = vmul.f32 %v4192, %v4051
          %v4257 = vmul.f32 %v4193, %v3942
          %v4258 = vmul.f32 %v4194, %v3944
          %v4259 = vmul.f32 %v4195, %v4055
          %v4260 = vmul.f32 %v4196, %v4057
          %v4261 = vmul.f32 %v4197, %v3946
          %v4262 = vmul.f32 %v4198, %v3948
          %v4263 = vmul.f32 %v4199, %v4059
          %v4264 = vmul.f32 %v4200, %v4061
          %v4265 = vmul.f32 %v4201, %v3952
          %v4266 = vmul.f32 %v4202, %v3954
          %v4267 = vmul.f32 %v4203, %v4065
          %v4268 = vmul.f32 %v4204, %v4067
          %v4269 = vmul.f32 %v4205, %v3956
          %v4270 = vmul.f32 %v4206, %v3958
          %v4271 = vmul.f32 %v4207, %v4069
          %v4272 = vmul.f32 %v4208, %v4071
          %v4273 = vmul.f32 %v4209, %v3962
          %v4274 = vmul.f32 %v4210, %v3964
          %v4275 = vmul.f32 %v4211, %v4075
          %v4276 = vmul.f32 %v4212, %v4077
          %v4277 = vmul.f32 %v4213, %v3966
          %v4278 = vmul.f32 %v4214, %v3968
          %v4279 = vmul.f32 %v4215, %v4079
          %v4280 = vmul.f32 %v4216, %v4081
          %v4281 = vmul.f32 %v4217, %v3972
          %v4282 = vmul.f32 %v4218, %v3974
          %v4283 = vmul.f32 %v4219, %v4085
          %v4284 = vmul.f32 %v4220, %v4087
          %v4285 = vmul.f32 %v4221, %v3976
          %v4286 = vmul.f32 %v4222, %v3978
          %v4287 = vmul.f32 %v4223, %v4089
          %v4288 = vmul.f32 %v4224, %v4091
          %v4289 = vmul.f32 %v4225, %v3982
          %v4290 = vmul.f32 %v4226, %v3984
          %v4291 = vmul.f32 %v4227, %v4095
          %v4292 = vmul.f32 %v4228, %v4097
          %v4293 = vmul.f32 %v4229, %v3986
          %v4294 = vmul.f32 %v4230, %v3988
          %v4295 = vmul.f32 %v4231, %v4099
          %v4296 = vmul.f32 %v4232, %v4101
          %v4297 = vmul.f32 %v4233, %v3992
          %v4298 = vmul.f32 %v4234, %v3994
          %v4299 = vmul.f32 %v4235, %v4105
          %v4300 = vmul.f32 %v4236, %v4107
          %v4301 = vmul.f32 %v4237, %v3996
          %v4302 = vmul.f32 %v4238, %v3998
          %v4303 = vmul.f32 %v4239, %v4109
          %v4304 = vmul.f32 %v4240, %v4111
          %v4305 = vmul.f32 %v4241, %v3922
          %v4306 = vmul.f32 %v4242, %v3924
          %v4307 = vmul.f32 %v4243, %v4035
          %v4308 = vmul.f32 %v4244, %v4037
          %v4309 = vmul.f32 %v4245, %v3926
          %v4310 = vmul.f32 %v4246, %v3928
          %v4311 = vmul.f32 %v4247, %v4039
          %v4312 = vmul.f32 %v4248, %v4041
          %v4313 = vmul.f32 %v4249, %v3932
          %v4314 = vmul.f32 %v4250, %v3934
          %v4315 = vmul.f32 %v4251, %v4045
          %v4316 = vmul.f32 %v4252, %v4047
          %v4317 = vmul.f32 %v4253, %v3936
          %v4318 = vmul.f32 %v4254, %v3938
          %v4319 = vmul.f32 %v4255, %v4049
          %v4320 = vmul.f32 %v4256, %v4051
          %v4321 = vmul.f32 %v4257, %v3942
          %v4322 = vmul.f32 %v4258, %v3944
          %v4323 = vmul.f32 %v4259, %v4055
          %v4324 = vmul.f32 %v4260, %v4057
          %v4325 = vmul.f32 %v4261, %v3946
          %v4326 = vmul.f32 %v4262, %v3948
          %v4327 = vmul.f32 %v4263, %v4059
          %v4328 = vmul.f32 %v4264, %v4061
          %v4329 = vmul.f32 %v4265, %v3952
          %v4330 = vmul.f32 %v4266, %v3954
          %v4331 = vmul.f32 %v4267, %v4065
          %v4332 = vmul.f32 %v4268, %v4067
          %v4333 = vmul.f32 %v4269, %v3956
          %v4334 = vmul.f32 %v4270, %v3958
          %v4335 = vmul.f32 %v4271, %v4069
          %v4336 = vmul.f32 %v4272, %v4071
          %v4337 = vmul.f32 %v4273, %v3962
          %v4338 = vmul.f32 %v4274, %v3964
          %v4339 = vmul.f32 %v4275, %v4075
          %v4340 = vmul.f32 %v4276, %v4077
          %v4341 = vmul.f32 %v4277, %v3966
          %v4342 = vmul.f32 %v4278, %v3968
          %v4343 = vmul.f32 %v4279, %v4079
          %v4344 = vmul.f32 %v4280, %v4081
          %v4345 = vmul.f32 %v4281, %v3972
          %v4346 = vmul.f32 %v4282, %v3974
          %v4347 = vmul.f32 %v4283, %v4085
          %v4348 = vmul.f32 %v4284, %v4087
          %v4349 = vmul.f32 %v4285, %v3976
          %v4350 = vmul.f32 %v4286, %v3978
          %v4351 = vmul.f32 %v4287, %v4089
          %v4352 = vmul.f32 %v4288, %v4091
          %v4353 = vmul.f32 %v4289, %v3982
          %v4354 = vmul.f32 %v4290, %v3984
          %v4355 = vmul.f32 %v4291, %v4095
          %v4356 = vmul.f32 %v4292, %v4097
          %v4357 = vmul.f32 %v4293, %v3986
          %v4358 = vmul.f32 %v4294, %v3988
          %v4359 = vmul.f32 %v4295, %v4099
          %v4360 = vmul.f32 %v4296, %v4101
          %v4361 = vmul.f32 %v4297, %v3992
          %v4362 = vmul.f32 %v4298, %v3994
          %v4363 = vmul.f32 %v4299, %v4105
          %v4364 = vmul.f32 %v4300, %v4107
          %v4365 = vmul.f32 %v4301, %v3996
          %v4366 = vmul.f32 %v4302, %v3998
          %v4367 = vmul.f32 %v4303, %v4109
          %v4368 = vmul.f32 %v4304, %v4111
          %v4369 = vadd.f32 %v3922, %v4305
          %v4370 = vadd.f32 %v3924, %v4306
          %v4371 = vadd.f32 %v4035, %v4307
          %v4372 = vadd.f32 %v4037, %v4308
          %v4373 = vadd.f32 %v3926, %v4309
          %v4374 = vadd.f32 %v3928, %v4310
          %v4375 = vadd.f32 %v4039, %v4311
          %v4376 = vadd.f32 %v4041, %v4312
          %v4377 = vadd.f32 %v3932, %v4313
          %v4378 = vadd.f32 %v3934, %v4314
          %v4379 = vadd.f32 %v4045, %v4315
          %v4380 = vadd.f32 %v4047, %v4316
          %v4381 = vadd.f32 %v3936, %v4317
          %v4382 = vadd.f32 %v3938, %v4318
          %v4383 = vadd.f32 %v4049, %v4319
          %v4384 = vadd.f32 %v4051, %v4320
          %v4385 = vadd.f32 %v3942, %v4321
          %v4386 = vadd.f32 %v3944, %v4322
          %v4387 = vadd.f32 %v4055, %v4323
          %v4388 = vadd.f32 %v4057, %v4324
          %v4389 = vadd.f32 %v3946, %v4325
          %v4390 = vadd.f32 %v3948, %v4326
          %v4391 = vadd.f32 %v4059, %v4327
          %v4392 = vadd.f32 %v4061, %v4328
          %v4393 = vadd.f32 %v3952, %v4329
          %v4394 = vadd.f32 %v3954, %v4330
          %v4395 = vadd.f32 %v4065, %v4331
          %v4396 = vadd.f32 %v4067, %v4332
          %v4397 = vadd.f32 %v3956, %v4333
          %v4398 = vadd.f32 %v3958, %v4334
          %v4399 = vadd.f32 %v4069, %v4335
          %v4400 = vadd.f32 %v4071, %v4336
          %v4401 = vadd.f32 %v3962, %v4337
          %v4402 = vadd.f32 %v3964, %v4338
          %v4403 = vadd.f32 %v4075, %v4339
          %v4404 = vadd.f32 %v4077, %v4340
          %v4405 = vadd.f32 %v3966, %v4341
          %v4406 = vadd.f32 %v3968, %v4342
          %v4407 = vadd.f32 %v4079, %v4343
          %v4408 = vadd.f32 %v4081, %v4344
          %v4409 = vadd.f32 %v3972, %v4345
          %v4410 = vadd.f32 %v3974, %v4346
          %v4411 = vadd.f32 %v4085, %v4347
          %v4412 = vadd.f32 %v4087, %v4348
          %v4413 = vadd.f32 %v3976, %v4349
          %v4414 = vadd.f32 %v3978, %v4350
          %v4415 = vadd.f32 %v4089, %v4351
          %v4416 = vadd.f32 %v4091, %v4352
          %v4417 = vadd.f32 %v3982, %v4353
          %v4418 = vadd.f32 %v3984, %v4354
          %v4419 = vadd.f32 %v4095, %v4355
          %v4420 = vadd.f32 %v4097, %v4356
          %v4421 = vadd.f32 %v3986, %v4357
          %v4422 = vadd.f32 %v3988, %v4358
          %v4423 = vadd.f32 %v4099, %v4359
          %v4424 = vadd.f32 %v4101, %v4360
          %v4425 = vadd.f32 %v3992, %v4361
          %v4426 = vadd.f32 %v3994, %v4362
          %v4427 = vadd.f32 %v4105, %v4363
          %v4428 = vadd.f32 %v4107, %v4364
          %v4429 = vadd.f32 %v3996, %v4365
          %v4430 = vadd.f32 %v3998, %v4366
          %v4431 = vadd.f32 %v4109, %v4367
          %v4432 = vadd.f32 %v4111, %v4368
          %v4433 = vmul.f32 %v4369, 0.7978846
          %v4434 = vmul.f32 %v4370, 0.7978846
          %v4435 = vmul.f32 %v4371, 0.7978846
          %v4436 = vmul.f32 %v4372, 0.7978846
          %v4437 = vmul.f32 %v4373, 0.7978846
          %v4438 = vmul.f32 %v4374, 0.7978846
          %v4439 = vmul.f32 %v4375, 0.7978846
          %v4440 = vmul.f32 %v4376, 0.7978846
          %v4441 = vmul.f32 %v4377, 0.7978846
          %v4442 = vmul.f32 %v4378, 0.7978846
          %v4443 = vmul.f32 %v4379, 0.7978846
          %v4444 = vmul.f32 %v4380, 0.7978846
          %v4445 = vmul.f32 %v4381, 0.7978846
          %v4446 = vmul.f32 %v4382, 0.7978846
          %v4447 = vmul.f32 %v4383, 0.7978846
          %v4448 = vmul.f32 %v4384, 0.7978846
          %v4449 = vmul.f32 %v4385, 0.7978846
          %v4450 = vmul.f32 %v4386, 0.7978846
          %v4451 = vmul.f32 %v4387, 0.7978846
          %v4452 = vmul.f32 %v4388, 0.7978846
          %v4453 = vmul.f32 %v4389, 0.7978846
          %v4454 = vmul.f32 %v4390, 0.7978846
          %v4455 = vmul.f32 %v4391, 0.7978846
          %v4456 = vmul.f32 %v4392, 0.7978846
          %v4457 = vmul.f32 %v4393, 0.7978846
          %v4458 = vmul.f32 %v4394, 0.7978846
          %v4459 = vmul.f32 %v4395, 0.7978846
          %v4460 = vmul.f32 %v4396, 0.7978846
          %v4461 = vmul.f32 %v4397, 0.7978846
          %v4462 = vmul.f32 %v4398, 0.7978846
          %v4463 = vmul.f32 %v4399, 0.7978846
          %v4464 = vmul.f32 %v4400, 0.7978846
          %v4465 = vmul.f32 %v4401, 0.7978846
          %v4466 = vmul.f32 %v4402, 0.7978846
          %v4467 = vmul.f32 %v4403, 0.7978846
          %v4468 = vmul.f32 %v4404, 0.7978846
          %v4469 = vmul.f32 %v4405, 0.7978846
          %v4470 = vmul.f32 %v4406, 0.7978846
          %v4471 = vmul.f32 %v4407, 0.7978846
          %v4472 = vmul.f32 %v4408, 0.7978846
          %v4473 = vmul.f32 %v4409, 0.7978846
          %v4474 = vmul.f32 %v4410, 0.7978846
          %v4475 = vmul.f32 %v4411, 0.7978846
          %v4476 = vmul.f32 %v4412, 0.7978846
          %v4477 = vmul.f32 %v4413, 0.7978846
          %v4478 = vmul.f32 %v4414, 0.7978846
          %v4479 = vmul.f32 %v4415, 0.7978846
          %v4480 = vmul.f32 %v4416, 0.7978846
          %v4481 = vmul.f32 %v4417, 0.7978846
          %v4482 = vmul.f32 %v4418, 0.7978846
          %v4483 = vmul.f32 %v4419, 0.7978846
          %v4484 = vmul.f32 %v4420, 0.7978846
          %v4485 = vmul.f32 %v4421, 0.7978846
          %v4486 = vmul.f32 %v4422, 0.7978846
          %v4487 = vmul.f32 %v4423, 0.7978846
          %v4488 = vmul.f32 %v4424, 0.7978846
          %v4489 = vmul.f32 %v4425, 0.7978846
          %v4490 = vmul.f32 %v4426, 0.7978846
          %v4491 = vmul.f32 %v4427, 0.7978846
          %v4492 = vmul.f32 %v4428, 0.7978846
          %v4493 = vmul.f32 %v4429, 0.7978846
          %v4494 = vmul.f32 %v4430, 0.7978846
          %v4495 = vmul.f32 %v4431, 0.7978846
          %v4496 = vmul.f32 %v4432, 0.7978846
          %v4497 = vtanh.pop %v4433
          %v4498 = vtanh.pop %v4434
          %v4499 = vtanh.pop %v4435
          %v4500 = vtanh.pop %v4436
          %v4501 = vtanh.pop %v4437
          %v4502 = vtanh.pop %v4438
          %v4503 = vtanh.pop %v4439
          %v4504 = vtanh.pop %v4440
          %v4505 = vtanh.pop %v4441
          %v4506 = vtanh.pop %v4442
          %v4507 = vtanh.pop %v4443
          %v4508 = vtanh.pop %v4444
          %v4509 = vtanh.pop %v4445
          %v4510 = vtanh.pop %v4446
          %v4511 = vtanh.pop %v4447
          %v4512 = vtanh.pop %v4448
          %v4513 = vtanh.pop %v4449
          %v4514 = vtanh.pop %v4450
          %v4515 = vtanh.pop %v4451
          %v4516 = vtanh.pop %v4452
          %v4517 = vtanh.pop %v4453
          %v4518 = vtanh.pop %v4454
          %v4519 = vtanh.pop %v4455
          %v4520 = vtanh.pop %v4456
          %v4521 = vtanh.pop %v4457
          %v4522 = vtanh.pop %v4458
          %v4523 = vtanh.pop %v4459
          %v4524 = vtanh.pop %v4460
          %v4525 = vtanh.pop %v4461
          %v4526 = vtanh.pop %v4462
          %v4527 = vtanh.pop %v4463
          %v4528 = vtanh.pop %v4464
          %v4529 = vtanh.pop %v4465
          %v4530 = vtanh.pop %v4466
          %v4531 = vtanh.pop %v4467
          %v4532 = vtanh.pop %v4468
          %v4533 = vtanh.pop %v4469
          %v4534 = vtanh.pop %v4470
          %v4535 = vtanh.pop %v4471
          %v4536 = vtanh.pop %v4472
          %v4537 = vtanh.pop %v4473
          %v4538 = vtanh.pop %v4474
          %v4539 = vtanh.pop %v4475
          %v4540 = vtanh.pop %v4476
          %v4541 = vtanh.pop %v4477
          %v4542 = vtanh.pop %v4478
          %v4543 = vtanh.pop %v4479
          %v4544 = vtanh.pop %v4480
          %v4545 = vtanh.pop %v4481
          %v4546 = vtanh.pop %v4482
          %v4547 = vtanh.pop %v4483
          %v4548 = vtanh.pop %v4484
          %v4549 = vtanh.pop %v4485
          %v4550 = vtanh.pop %v4486
          %v4551 = vtanh.pop %v4487
          %v4552 = vtanh.pop %v4488
          %v4553 = vtanh.pop %v4489
          %v4554 = vtanh.pop %v4490
          %v4555 = vtanh.pop %v4491
          %v4556 = vtanh.pop %v4492
          %v4557 = vtanh.pop %v4493
          %v4558 = vtanh.pop %v4494
          %v4559 = vtanh.pop %v4495
          %v4560 = vtanh.pop %v4496
          %v4561 = vadd.f32 %v4497, 1.0
          %v4562 = vadd.f32 %v4498, 1.0
          %v4563 = vadd.f32 %v4499, 1.0
          %v4564 = vadd.f32 %v4500, 1.0
          %v4565 = vadd.f32 %v4501, 1.0
          %v4566 = vadd.f32 %v4502, 1.0
          %v4567 = vadd.f32 %v4503, 1.0
          %v4568 = vadd.f32 %v4504, 1.0
          %v4569 = vadd.f32 %v4505, 1.0
          %v4570 = vadd.f32 %v4506, 1.0
          %v4571 = vadd.f32 %v4507, 1.0
          %v4572 = vadd.f32 %v4508, 1.0
          %v4573 = vadd.f32 %v4509, 1.0
          %v4574 = vadd.f32 %v4510, 1.0
          %v4575 = vadd.f32 %v4511, 1.0
          %v4576 = vadd.f32 %v4512, 1.0
          %v4577 = vadd.f32 %v4513, 1.0
          %v4578 = vadd.f32 %v4514, 1.0
          %v4579 = vadd.f32 %v4515, 1.0
          %v4580 = vadd.f32 %v4516, 1.0
          %v4581 = vadd.f32 %v4517, 1.0
          %v4582 = vadd.f32 %v4518, 1.0
          %v4583 = vadd.f32 %v4519, 1.0
          %v4584 = vadd.f32 %v4520, 1.0
          %v4585 = vadd.f32 %v4521, 1.0
          %v4586 = vadd.f32 %v4522, 1.0
          %v4587 = vadd.f32 %v4523, 1.0
          %v4588 = vadd.f32 %v4524, 1.0
          %v4589 = vadd.f32 %v4525, 1.0
          %v4590 = vadd.f32 %v4526, 1.0
          %v4591 = vadd.f32 %v4527, 1.0
          %v4592 = vadd.f32 %v4528, 1.0
          %v4593 = vadd.f32 %v4529, 1.0
          %v4594 = vadd.f32 %v4530, 1.0
          %v4595 = vadd.f32 %v4531, 1.0
          %v4596 = vadd.f32 %v4532, 1.0
          %v4597 = vadd.f32 %v4533, 1.0
          %v4598 = vadd.f32 %v4534, 1.0
          %v4599 = vadd.f32 %v4535, 1.0
          %v4600 = vadd.f32 %v4536, 1.0
          %v4601 = vadd.f32 %v4537, 1.0
          %v4602 = vadd.f32 %v4538, 1.0
          %v4603 = vadd.f32 %v4539, 1.0
          %v4604 = vadd.f32 %v4540, 1.0
          %v4605 = vadd.f32 %v4541, 1.0
          %v4606 = vadd.f32 %v4542, 1.0
          %v4607 = vadd.f32 %v4543, 1.0
          %v4608 = vadd.f32 %v4544, 1.0
          %v4609 = vadd.f32 %v4545, 1.0
          %v4610 = vadd.f32 %v4546, 1.0
          %v4611 = vadd.f32 %v4547, 1.0
          %v4612 = vadd.f32 %v4548, 1.0
          %v4613 = vadd.f32 %v4549, 1.0
          %v4614 = vadd.f32 %v4550, 1.0
          %v4615 = vadd.f32 %v4551, 1.0
          %v4616 = vadd.f32 %v4552, 1.0
          %v4617 = vadd.f32 %v4553, 1.0
          %v4618 = vadd.f32 %v4554, 1.0
          %v4619 = vadd.f32 %v4555, 1.0
          %v4620 = vadd.f32 %v4556, 1.0
          %v4621 = vadd.f32 %v4557, 1.0
          %v4622 = vadd.f32 %v4558, 1.0
          %v4623 = vadd.f32 %v4559, 1.0
          %v4624 = vadd.f32 %v4560, 1.0
          %v4625 = vmul.f32 %v4113, %v4561
          %v4626 = vmul.f32 %v4114, %v4562
          %v4627 = vmul.f32 %v4115, %v4563
          %v4628 = vmul.f32 %v4116, %v4564
          %v4629 = vmul.f32 %v4117, %v4565
          %v4630 = vmul.f32 %v4118, %v4566
          %v4631 = vmul.f32 %v4119, %v4567
          %v4632 = vmul.f32 %v4120, %v4568
          %v4633 = vmul.f32 %v4121, %v4569
          %v4634 = vmul.f32 %v4122, %v4570
          %v4635 = vmul.f32 %v4123, %v4571
          %v4636 = vmul.f32 %v4124, %v4572
          %v4637 = vmul.f32 %v4125, %v4573
          %v4638 = vmul.f32 %v4126, %v4574
          %v4639 = vmul.f32 %v4127, %v4575
          %v4640 = vmul.f32 %v4128, %v4576
          %v4641 = vmul.f32 %v4129, %v4577
          %v4642 = vmul.f32 %v4130, %v4578
          %v4643 = vmul.f32 %v4131, %v4579
          %v4644 = vmul.f32 %v4132, %v4580
          %v4645 = vmul.f32 %v4133, %v4581
          %v4646 = vmul.f32 %v4134, %v4582
          %v4647 = vmul.f32 %v4135, %v4583
          %v4648 = vmul.f32 %v4136, %v4584
          %v4649 = vmul.f32 %v4137, %v4585
          %v4650 = vmul.f32 %v4138, %v4586
          %v4651 = vmul.f32 %v4139, %v4587
          %v4652 = vmul.f32 %v4140, %v4588
          %v4653 = vmul.f32 %v4141, %v4589
          %v4654 = vmul.f32 %v4142, %v4590
          %v4655 = vmul.f32 %v4143, %v4591
          %v4656 = vmul.f32 %v4144, %v4592
          %v4657 = vmul.f32 %v4145, %v4593
          %v4658 = vmul.f32 %v4146, %v4594
          %v4659 = vmul.f32 %v4147, %v4595
          %v4660 = vmul.f32 %v4148, %v4596
          %v4661 = vmul.f32 %v4149, %v4597
          %v4662 = vmul.f32 %v4150, %v4598
          %v4663 = vmul.f32 %v4151, %v4599
          %v4664 = vmul.f32 %v4152, %v4600
          %v4665 = vmul.f32 %v4153, %v4601
          %v4666 = vmul.f32 %v4154, %v4602
          %v4667 = vmul.f32 %v4155, %v4603
          %v4668 = vmul.f32 %v4156, %v4604
          %v4669 = vmul.f32 %v4157, %v4605
          %v4670 = vmul.f32 %v4158, %v4606
          %v4671 = vmul.f32 %v4159, %v4607
          %v4672 = vmul.f32 %v4160, %v4608
          %v4673 = vmul.f32 %v4161, %v4609
          %v4674 = vmul.f32 %v4162, %v4610
          %v4675 = vmul.f32 %v4163, %v4611
          %v4676 = vmul.f32 %v4164, %v4612
          %v4677 = vmul.f32 %v4165, %v4613
          %v4678 = vmul.f32 %v4166, %v4614
          %v4679 = vmul.f32 %v4167, %v4615
          %v4680 = vmul.f32 %v4168, %v4616
          %v4681 = vmul.f32 %v4169, %v4617
          %v4682 = vmul.f32 %v4170, %v4618
          %v4683 = vmul.f32 %v4171, %v4619
          %v4684 = vmul.f32 %v4172, %v4620
          %v4685 = vmul.f32 %v4173, %v4621
          %v4686 = vmul.f32 %v4174, %v4622
          %v4687 = vmul.f32 %v4175, %v4623
          %v4688 = vmul.f32 %v4176, %v4624
          %s4689 = smul.u32 %s543, 4
          %s4690 = smul.addr %s4689, 4
          %s4691 = scalar_lea.vmem %s7, %s4690
          %v4692 = vld [vmem:[%s4691] sm:$0xf]
          %v4693 = vld [vmem:[%s4691 + $0x4] sm:$0xf]
          %v4694 = vld [vmem:[%s4691 + $0x8] sm:$0xf]
          %v4695 = vld [vmem:[%s4691 + $0xc] sm:$0xf]
          %v4696 = vpack.c.bf16 %v4629, %v4625
          %v4697 = vpack.c.bf16 %v4630, %v4626
          %v4698 = vpack.c.bf16 %v4631, %v4627
          %v4699 = vpack.c.bf16 %v4632, %v4628
          %v4700 = vpack.c.bf16 %v4637, %v4633
          %v4701 = vpack.c.bf16 %v4638, %v4634
          %v4702 = vpack.c.bf16 %v4639, %v4635
          %v4703 = vpack.c.bf16 %v4640, %v4636
          %v4704 = vpack.c.bf16 %v4645, %v4641
          %v4705 = vpack.c.bf16 %v4646, %v4642
          %v4706 = vpack.c.bf16 %v4647, %v4643
          %v4707 = vpack.c.bf16 %v4648, %v4644
          %v4708 = vpack.c.bf16 %v4653, %v4649
          %v4709 = vpack.c.bf16 %v4654, %v4650
          %v4710 = vpack.c.bf16 %v4655, %v4651
          %v4711 = vpack.c.bf16 %v4656, %v4652
          %v4712 = vpack.c.bf16 %v4661, %v4657
          %v4713 = vpack.c.bf16 %v4662, %v4658
          %v4714 = vpack.c.bf16 %v4663, %v4659
          %v4715 = vpack.c.bf16 %v4664, %v4660
          %v4716 = vpack.c.bf16 %v4669, %v4665
          %v4717 = vpack.c.bf16 %v4670, %v4666
          %v4718 = vpack.c.bf16 %v4671, %v4667
          %v4719 = vpack.c.bf16 %v4672, %v4668
          %v4720 = vpack.c.bf16 %v4677, %v4673
          %v4721 = vpack.c.bf16 %v4678, %v4674
          %v4722 = vpack.c.bf16 %v4679, %v4675
          %v4723 = vpack.c.bf16 %v4680, %v4676
          %v4724 = vpack.c.bf16 %v4685, %v4681
          %v4725 = vpack.c.bf16 %v4686, %v4682
          %v4726 = vpack.c.bf16 %v4687, %v4683
          %v4727 = vpack.c.bf16 %v4688, %v4684
          %4729 = vset.pattern.permute.xlu0 0
          %4730 = vperm.xlu0 %4729, %v602
          %v4731 = vpop.permute.xlu0 %4730
          %4734 = vset.pattern.permute.xlu0 0
          %4735 = vperm.xlu0 %4734, %v603
          %v4736 = vpop.permute.xlu0 %4735
          %4739 = vset.pattern.permute.xlu0 0
          %4740 = vperm.xlu0 %4739, %v604
          %v4741 = vpop.permute.xlu0 %4740
          %4744 = vset.pattern.permute.xlu0 0
          %4745 = vperm.xlu0 %4744, %v605
          %v4746 = vpop.permute.xlu0 %4745
          %v4752 = vunpack.c.l.b16 %v4692
          %v4753 = vunpack.c.l.b16 %v4693
          %v4754 = vunpack.c.l.b16 %v4694
          %v4755 = vunpack.c.l.b16 %v4695
          %v4756 = vpack.c.b16 %v4753, %v4752
          %v4757 = vpack.c.b16 %v4755, %v4754
          %4760 = vmatprep.subr.bf16.mxu0 %v4697
          %4761 = vmatpush1.bf16.msra.mxu0 %v4696
          %4762 = vmatprep.subr.bf16.mxu0 %v4701
          %4763 = vmatpush1.bf16.msra.mxu0 %v4700
          %4764 = vmatprep.subr.bf16.mxu0 %v4705
          %4765 = vmatpush1.bf16.msra.mxu0 %v4704
          %4766 = vmatprep.subr.bf16.mxu0 %v4709
          %4767 = vmatpush1.bf16.msra.mxu0 %v4708
          %4768 = vmatprep.subr.bf16.mxu0 %v4713
          %4769 = vmatpush1.bf16.msra.mxu0 %v4712
          %4770 = vmatprep.subr.bf16.mxu0 %v4717
          %4771 = vmatpush1.bf16.msra.mxu0 %v4716
          %4772 = vmatprep.subr.bf16.mxu0 %v4721
          %4773 = vmatpush1.bf16.msra.mxu0 %v4720
          %4774 = vmatprep.subr.bf16.mxu0 %v4725
          %4775 = vmatpush1.bf16.msra.mxu0 %v4724
          %4776 = vmatprep.subr.bf16.mxu0 0
          %4777 = vmatpush1.bf16.msra.mxu0 0
          %4778 = vmatprep.subr.bf16.mxu0 0
          %4779 = vmatpush1.bf16.msra.mxu0 0
          %4780 = vmatprep.subr.bf16.mxu0 0
          %4781 = vmatpush1.bf16.msra.mxu0 0
          %4782 = vmatprep.subr.bf16.mxu0 0
          %4783 = vmatpush1.bf16.msra.mxu0 0
          %4784 = vmatprep.subr.bf16.mxu0 0
          %4785 = vmatpush1.bf16.msra.mxu0 0
          %4786 = vmatprep.subr.bf16.mxu0 0
          %4787 = vmatpush1.bf16.msra.mxu0 0
          %4788 = vmatprep.subr.bf16.mxu0 0
          %4789 = vmatpush1.bf16.msra.mxu0 0
          %4790 = vmatprep.subr.bf16.mxu0 0
          %4791 = vmatpush1.bf16.msra.mxu0 0
          %4792 = vmatprep.mubr.bf16.mxu0 0
          %4793 = vmatmul.mubr.bf16.gmra.mrb[0].mxu0 %v4756
          %v4794 = vpop.f32.mrb[0].mxu0
          %v4795 = vadd.f32 %v4731, %v4794
          %v4796 = vpop.f32.mrb[0].mxu0
          %v4797 = vadd.f32 %v4731, %v4796
          %v4798 = vpop.f32.mrb[0].mxu0
          %v4799 = vadd.f32 %v4736, %v4798
          %v4800 = vpop.f32.mrb[0].mxu0
          %v4801 = vadd.f32 %v4736, %v4800
          %4802 = vmatprep.mubr.bf16.mxu0 0
          %4803 = vmatmul.mubr.bf16.gmra.mrb[0].mxu0 %v4757
          %v4804 = vpop.f32.mrb[0].mxu0
          %v4805 = vadd.f32 %v4741, %v4804
          %v4806 = vpop.f32.mrb[0].mxu0
          %v4807 = vadd.f32 %v4741, %v4806
          %v4808 = vpop.f32.mrb[0].mxu0
          %v4809 = vadd.f32 %v4746, %v4808
          %v4810 = vpop.f32.mrb[0].mxu0
          %v4811 = vadd.f32 %v4746, %v4810
          %4812 = vdwg.mxu0
          %4813 = vmatprep.subr.bf16.mxu0 %v4699
          %4814 = vmatpush1.bf16.msra.mxu0 %v4698
          %4815 = vmatprep.subr.bf16.mxu0 %v4703
          %4816 = vmatpush1.bf16.msra.mxu0 %v4702
          %4817 = vmatprep.subr.bf16.mxu0 %v4707
          %4818 = vmatpush1.bf16.msra.mxu0 %v4706
          %4819 = vmatprep.subr.bf16.mxu0 %v4711
          %4820 = vmatpush1.bf16.msra.mxu0 %v4710
          %4821 = vmatprep.subr.bf16.mxu0 %v4715
          %4822 = vmatpush1.bf16.msra.mxu0 %v4714
          %4823 = vmatprep.subr.bf16.mxu0 %v4719
          %4824 = vmatpush1.bf16.msra.mxu0 %v4718
          %4825 = vmatprep.subr.bf16.mxu0 %v4723
          %4826 = vmatpush1.bf16.msra.mxu0 %v4722
          %4827 = vmatprep.subr.bf16.mxu0 %v4727
          %4828 = vmatpush1.bf16.msra.mxu0 %v4726
          %4829 = vmatprep.subr.bf16.mxu0 0
          %4830 = vmatpush1.bf16.msra.mxu0 0
          %4831 = vmatprep.subr.bf16.mxu0 0
          %4832 = vmatpush1.bf16.msra.mxu0 0
          %4833 = vmatprep.subr.bf16.mxu0 0
          %4834 = vmatpush1.bf16.msra.mxu0 0
          %4835 = vmatprep.subr.bf16.mxu0 0
          %4836 = vmatpush1.bf16.msra.mxu0 0
          %4837 = vmatprep.subr.bf16.mxu0 0
          %4838 = vmatpush1.bf16.msra.mxu0 0
          %4839 = vmatprep.subr.bf16.mxu0 0
          %4840 = vmatpush1.bf16.msra.mxu0 0
          %4841 = vmatprep.subr.bf16.mxu0 0
          %4842 = vmatpush1.bf16.msra.mxu0 0
          %4843 = vmatprep.subr.bf16.mxu0 0
          %4844 = vmatpush1.bf16.msra.mxu0 0
          %4845 = vmatprep.mubr.bf16.mxu0 0
          %4846 = vmatmul.mubr.bf16.gmra.mrb[0].mxu0 %v4756
          %v4847 = vpop.f32.mrb[0].mxu0
          %v4848 = vadd.f32 %v4731, %v4847
          %v4849 = vpop.f32.mrb[0].mxu0
          %v4850 = vadd.f32 %v4731, %v4849
          %v4851 = vpop.f32.mrb[0].mxu0
          %v4852 = vadd.f32 %v4736, %v4851
          %v4853 = vpop.f32.mrb[0].mxu0
          %v4854 = vadd.f32 %v4736, %v4853
          %4855 = vmatprep.mubr.bf16.mxu0 0
          %4856 = vmatmul.mubr.bf16.gmra.mrb[0].mxu0 %v4757
          %v4857 = vpop.f32.mrb[0].mxu0
          %v4858 = vadd.f32 %v4741, %v4857
          %v4859 = vpop.f32.mrb[0].mxu0
          %v4860 = vadd.f32 %v4741, %v4859
          %v4861 = vpop.f32.mrb[0].mxu0
          %v4862 = vadd.f32 %v4746, %v4861
          %v4863 = vpop.f32.mrb[0].mxu0
          %v4864 = vadd.f32 %v4746, %v4863
          %4865 = vdwg.mxu0
          %v4866 = vadd.f32 %v3699, %v4795
          %v4867 = vadd.f32 %v3700, %v4797
          %v4868 = vadd.f32 %v3701, %v4848
          %v4869 = vadd.f32 %v3702, %v4850
          %v4870 = vadd.f32 %v3703, %v4799
          %v4871 = vadd.f32 %v3704, %v4801
          %v4872 = vadd.f32 %v3705, %v4852
          %v4873 = vadd.f32 %v3706, %v4854
          %v4874 = vadd.f32 %v3707, %v4805
          %v4875 = vadd.f32 %v3708, %v4807
          %v4876 = vadd.f32 %v3709, %v4858
          %v4877 = vadd.f32 %v3710, %v4860
          %v4878 = vadd.f32 %v3711, %v4809
          %v4879 = vadd.f32 %v3712, %v4811
          %v4880 = vadd.f32 %v3713, %v4862
          %v4881 = vadd.f32 %v3714, %v4864
          %v4882 = vadd.f32 %v4866, %v4870
          %v4883 = vadd.f32 %v4882, %v4874
          %v4884 = vadd.f32 %v4883, %v4878
          %v4885 = vrot.slane %v4884, 4
          %v4886 = vadd.f32 %v4884, %v4885
          %v4887 = vrot.slane %v4886, 2
          %v4888 = vadd.f32 %v4886, %v4887
          %v4889 = vrot.slane %v4888, 1
          %v4890 = vadd.f32 %v4888, %v4889
          %v4891 = vadd.f32 %v4867, %v4871
          %v4892 = vadd.f32 %v4891, %v4875
          %v4893 = vadd.f32 %v4892, %v4879
          %v4894 = vrot.slane %v4893, 4
          %v4895 = vadd.f32 %v4893, %v4894
          %v4896 = vrot.slane %v4895, 2
          %v4897 = vadd.f32 %v4895, %v4896
          %v4898 = vrot.slane %v4897, 1
          %v4899 = vadd.f32 %v4897, %v4898
          %v4900 = vadd.f32 %v4868, %v4872
          %v4901 = vadd.f32 %v4900, %v4876
          %v4902 = vadd.f32 %v4901, %v4880
          %v4903 = vrot.slane %v4902, 4
          %v4904 = vadd.f32 %v4902, %v4903
          %v4905 = vrot.slane %v4904, 2
          %v4906 = vadd.f32 %v4904, %v4905
          %v4907 = vrot.slane %v4906, 1
          %v4908 = vadd.f32 %v4906, %v4907
          %v4909 = vadd.f32 %v4869, %v4873
          %v4910 = vadd.f32 %v4909, %v4877
          %v4911 = vadd.f32 %v4910, %v4881
          %v4912 = vrot.slane %v4911, 4
          %v4913 = vadd.f32 %v4911, %v4912
          %v4914 = vrot.slane %v4913, 2
          %v4915 = vadd.f32 %v4913, %v4914
          %v4916 = vrot.slane %v4915, 1
          %v4917 = vadd.f32 %v4915, %v4916
          %v4918 = vmul.f32 %v4890, %v3542
          %v4919 = vmul.f32 %v4899, %v3542
          %v4920 = vmul.f32 %v4908, %v3542
          %v4921 = vmul.f32 %v4917, %v3542
          %v4922 = vsub.f32 %v4866, %v4918
          %v4923 = vsub.f32 %v4867, %v4919
          %v4924 = vsub.f32 %v4868, %v4920
          %v4925 = vsub.f32 %v4869, %v4921
          %v4926 = vsub.f32 %v4870, %v4918
          %v4927 = vsub.f32 %v4871, %v4919
          %v4928 = vsub.f32 %v4872, %v4920
          %v4929 = vsub.f32 %v4873, %v4921
          %v4930 = vsub.f32 %v4874, %v4918
          %v4931 = vsub.f32 %v4875, %v4919
          %v4932 = vsub.f32 %v4876, %v4920
          %v4933 = vsub.f32 %v4877, %v4921
          %v4934 = vsub.f32 %v4878, %v4918
          %v4935 = vsub.f32 %v4879, %v4919
          %v4936 = vsub.f32 %v4880, %v4920
          %v4937 = vsub.f32 %v4881, %v4921
          %v4938 = vmul.f32 %v4922, %v4922
          %v4939 = vmul.f32 %v4923, %v4923
          %v4940 = vmul.f32 %v4924, %v4924
          %v4941 = vmul.f32 %v4925, %v4925
          %v4942 = vmul.f32 %v4926, %v4926
          %v4943 = vmul.f32 %v4927, %v4927
          %v4944 = vmul.f32 %v4928, %v4928
          %v4945 = vmul.f32 %v4929, %v4929
          %v4946 = vmul.f32 %v4930, %v4930
          %v4947 = vmul.f32 %v4931, %v4931
          %v4948 = vmul.f32 %v4932, %v4932
          %v4949 = vmul.f32 %v4933, %v4933
          %v4950 = vmul.f32 %v4934, %v4934
          %v4951 = vmul.f32 %v4935, %v4935
          %v4952 = vmul.f32 %v4936, %v4936
          %v4953 = vmul.f32 %v4937, %v4937
          %v4954 = vadd.f32 %v4938, %v4942
          %v4955 = vadd.f32 %v4954, %v4946
          %v4956 = vadd.f32 %v4955, %v4950
          %v4957 = vrot.slane %v4956, 4
          %v4958 = vadd.f32 %v4956, %v4957
          %v4959 = vrot.slane %v4958, 2
          %v4960 = vadd.f32 %v4958, %v4959
          %v4961 = vrot.slane %v4960, 1
          %v4962 = vadd.f32 %v4960, %v4961
          %v4963 = vadd.f32 %v4939, %v4943
          %v4964 = vadd.f32 %v4963, %v4947
          %v4965 = vadd.f32 %v4964, %v4951
          %v4966 = vrot.slane %v4965, 4
          %v4967 = vadd.f32 %v4965, %v4966
          %v4968 = vrot.slane %v4967, 2
          %v4969 = vadd.f32 %v4967, %v4968
          %v4970 = vrot.slane %v4969, 1
          %v4971 = vadd.f32 %v4969, %v4970
          %v4972 = vadd.f32 %v4940, %v4944
          %v4973 = vadd.f32 %v4972, %v4948
          %v4974 = vadd.f32 %v4973, %v4952
          %v4975 = vrot.slane %v4974, 4
          %v4976 = vadd.f32 %v4974, %v4975
          %v4977 = vrot.slane %v4976, 2
          %v4978 = vadd.f32 %v4976, %v4977
          %v4979 = vrot.slane %v4978, 1
          %v4980 = vadd.f32 %v4978, %v4979
          %v4981 = vadd.f32 %v4941, %v4945
          %v4982 = vadd.f32 %v4981, %v4949
          %v4983 = vadd.f32 %v4982, %v4953
          %v4984 = vrot.slane %v4983, 4
          %v4985 = vadd.f32 %v4983, %v4984
          %v4986 = vrot.slane %v4985, 2
          %v4987 = vadd.f32 %v4985, %v4986
          %v4988 = vrot.slane %v4987, 1
          %v4989 = vadd.f32 %v4987, %v4988
          %v4990 = vmul.f32 %v4962, %v3542
          %v4991 = vmul.f32 %v4971, %v3542
          %v4992 = vmul.f32 %v4980, %v3542
          %v4993 = vmul.f32 %v4989, %v3542
          %v4994 = vadd.f32 %v4990, 1e-05
          %v4995 = vadd.f32 %v4991, 1e-05
          %v4996 = vadd.f32 %v4992, 1e-05
          %v4997 = vadd.f32 %v4993, 1e-05
          %v4998 = vrsqrt.pop %v4994
          %v4999 = vrsqrt.pop %v4995
          %v5000 = vrsqrt.pop %v4996
          %v5001 = vrsqrt.pop %v4997
          %v5002 = vmul.f32 %v4922, %v4998
          %v5003 = vmul.f32 %v4923, %v4999
          %v5004 = vmul.f32 %v4924, %v5000
          %v5005 = vmul.f32 %v4925, %v5001
          %v5006 = vmul.f32 %v4926, %v4998
          %v5007 = vmul.f32 %v4927, %v4999
          %v5008 = vmul.f32 %v4928, %v5000
          %v5009 = vmul.f32 %v4929, %v5001
          %v5010 = vmul.f32 %v4930, %v4998
          %v5011 = vmul.f32 %v4931, %v4999
          %v5012 = vmul.f32 %v4932, %v5000
          %v5013 = vmul.f32 %v4933, %v5001
          %v5014 = vmul.f32 %v4934, %v4998
          %v5015 = vmul.f32 %v4935, %v4999
          %v5016 = vmul.f32 %v4936, %v5000
          %v5017 = vmul.f32 %v4937, %v5001
          %5019 = vset.pattern.permute.xlu0 0
          %5020 = vperm.xlu0 %5019, %v594
          %v5021 = vpop.permute.xlu0 %5020
          %5024 = vset.pattern.permute.xlu0 0
          %5025 = vperm.xlu0 %5024, %v595
          %v5026 = vpop.permute.xlu0 %5025
          %5029 = vset.pattern.permute.xlu0 0
          %5030 = vperm.xlu0 %5029, %v596
          %v5031 = vpop.permute.xlu0 %5030
          %5034 = vset.pattern.permute.xlu0 0
          %5035 = vperm.xlu0 %5034, %v597
          %v5036 = vpop.permute.xlu0 %5035
          %v5038 = vmul.f32 %v5002, %v5021
          %v5039 = vmul.f32 %v5003, %v5021
          %v5040 = vmul.f32 %v5004, %v5021
          %v5041 = vmul.f32 %v5005, %v5021
          %v5042 = vmul.f32 %v5006, %v5026
          %v5043 = vmul.f32 %v5007, %v5026
          %v5044 = vmul.f32 %v5008, %v5026
          %v5045 = vmul.f32 %v5009, %v5026
          %v5046 = vmul.f32 %v5010, %v5031
          %v5047 = vmul.f32 %v5011, %v5031
          %v5048 = vmul.f32 %v5012, %v5031
          %v5049 = vmul.f32 %v5013, %v5031
          %v5050 = vmul.f32 %v5014, %v5036
          %v5051 = vmul.f32 %v5015, %v5036
          %v5052 = vmul.f32 %v5016, %v5036
          %v5053 = vmul.f32 %v5017, %v5036
          %5055 = vset.pattern.permute.xlu0 0
          %5056 = vperm.xlu0 %5055, %v598
          %v5057 = vpop.permute.xlu0 %5056
          %5060 = vset.pattern.permute.xlu0 0
          %5061 = vperm.xlu0 %5060, %v599
          %v5062 = vpop.permute.xlu0 %5061
          %5065 = vset.pattern.permute.xlu0 0
          %5066 = vperm.xlu0 %5065, %v600
          %v5067 = vpop.permute.xlu0 %5066
          %5070 = vset.pattern.permute.xlu0 0
          %5071 = vperm.xlu0 %5070, %v601
          %v5072 = vpop.permute.xlu0 %5071
          %v5074 = vadd.f32 %v5038, %v5057
          %v5075 = vadd.f32 %v5039, %v5057
          %v5076 = vadd.f32 %v5040, %v5057
          %v5077 = vadd.f32 %v5041, %v5057
          %v5078 = vadd.f32 %v5042, %v5062
          %v5079 = vadd.f32 %v5043, %v5062
          %v5080 = vadd.f32 %v5044, %v5062
          %v5081 = vadd.f32 %v5045, %v5062
          %v5082 = vadd.f32 %v5046, %v5067
          %v5083 = vadd.f32 %v5047, %v5067
          %v5084 = vadd.f32 %v5048, %v5067
          %v5085 = vadd.f32 %v5049, %v5067
          %v5086 = vadd.f32 %v5050, %v5072
          %v5087 = vadd.f32 %v5051, %v5072
          %v5088 = vadd.f32 %v5052, %v5072
          %v5089 = vadd.f32 %v5053, %v5072
        $region77: #{classifier_forward.1} parent=71 // loop_footer
          %s547 = sadd.s32 1, %s543
        $region78: #{classifier_forward.1} parent=71 // loop_footer_branch
          %542 = sbr.rel target = $region74
        $region79: #{classifier_forward.1} parent=71 // loop_exit
          _
        %5090 = vmatprep.subr.mxu0 %v549
        %5091 = vmatpush1.xpose.msra.mxu0 %v548
        %5092 = vmatprep.subr.mxu0 %v553
        %5093 = vmatpush1.xpose.msra.mxu0 %v552
        %5094 = vmatprep.subr.mxu0 %v557
        %5095 = vmatpush1.xpose.msra.mxu0 %v556
        %5096 = vmatprep.subr.mxu0 %v561
        %5097 = vmatpush1.xpose.msra.mxu0 %v560
        %5098 = vmatprep.subr.mxu0 0.0
        %5099 = vmatpush1.xpose.msra.mxu0 0.0
        %5100 = vmatprep.subr.mxu0 0.0
        %5101 = vmatpush1.xpose.msra.mxu0 0.0
        %5102 = vmatprep.subr.mxu0 0.0
        %5103 = vmatpush1.xpose.msra.mxu0 0.0
        %5104 = vmatprep.subr.mxu0 0.0
        %5105 = vmatpush1.xpose.msra.mxu0 0.0
        %5106 = vmatprep.subr.mxu0 0.0
        %5107 = vmatpush1.xpose.msra.mxu0 0.0
        %5108 = vmatprep.subr.mxu0 0.0
        %5109 = vmatpush1.xpose.msra.mxu0 0.0
        %5110 = vmatprep.subr.mxu0 0.0
        %5111 = vmatpush1.xpose.msra.mxu0 0.0
        %5112 = vmatprep.subr.mxu0 0.0
        %5113 = vmatpush1.xpose.msra.mxu0 0.0
        %5114 = vmatprep.subr.mxu0 0.0
        %5115 = vmatpush1.xpose.msra.mxu0 0.0
        %5116 = vmatprep.subr.mxu0 0.0
        %5117 = vmatpush1.xpose.msra.mxu0 0.0
        %5118 = vmatprep.subr.mxu0 0.0
        %5119 = vmatpush1.xpose.msra.mxu0 0.0
        %5120 = vmatprep.subr.mxu0 0.0
        %5121 = vmatpush1.xpose.msra.mxu0 0.0
        %5122 = vmatprep.subr.mxu0 0.0
        %5123 = vmatpush1.xpose.msra.mxu0 0.0
        %5124 = vmatprep.subr.mxu0 0.0
        %5125 = vmatpush1.xpose.msra.mxu0 0.0
        %5126 = vmatprep.subr.mxu0 0.0
        %5127 = vmatpush1.xpose.msra.mxu0 0.0
        %5128 = vmatprep.subr.mxu0 0.0
        %5129 = vmatpush1.xpose.msra.mxu0 0.0
        %5130 = vmatprep.subr.mxu0 0.0
        %5131 = vmatpush1.xpose.msra.mxu0 0.0
        %5132 = vmatprep.subr.mxu0 0.0
        %5133 = vmatpush1.xpose.msra.mxu0 0.0
        %5134 = vmatprep.subr.mxu0 0.0
        %5135 = vmatpush1.xpose.msra.mxu0 0.0
        %5136 = vmatprep.subr.mxu0 0.0
        %5137 = vmatpush1.xpose.msra.mxu0 0.0
        %5138 = vmatprep.subr.mxu0 0.0
        %5139 = vmatpush1.xpose.msra.mxu0 0.0
        %5140 = vmatprep.subr.mxu0 0.0
        %5141 = vmatpush1.xpose.msra.mxu0 0.0
        %5142 = vmatprep.subr.mxu0 0.0
        %5143 = vmatpush1.xpose.msra.mxu0 0.0
        %5144 = vmatprep.subr.mxu0 0.0
        %5145 = vmatpush1.xpose.msra.mxu0 0.0
        %5146 = vmatprep.subr.mxu0 0.0
        %5147 = vmatpush1.xpose.msra.mxu0 0.0
        %5148 = vmatprep.subr.mxu0 0.0
        %5149 = vmatpush1.xpose.msra.mxu0 0.0
        %5150 = vmatprep.subr.mxu0 0.0
        %5151 = vmatpush1.xpose.msra.mxu0 0.0
        %5152 = vmatprep.subr.mxu0 0.0
        %5153 = vmatpush1.xpose.msra.mxu0 0.0
        %5154 = vmatprep.mubr.f32.mxu0 1.0
        %5155 = vmatmul.mubr.f32.gmra.mrb[0].mxu0 1.0
        %v5156 = vpop.f32.mrb[0].mxu0
        %v5157 = vadd.f32 0.0, %v5156
        %v5158 = vpop.f32.mrb[0].mxu0
        %5159 = vdwg.mxu0
        %5160 = vmatprep.subr.mxu0 %v551
        %5161 = vmatpush1.xpose.msra.mxu0 %v550
        %5162 = vmatprep.subr.mxu0 %v555
        %5163 = vmatpush1.xpose.msra.mxu0 %v554
        %5164 = vmatprep.subr.mxu0 %v559
        %5165 = vmatpush1.xpose.msra.mxu0 %v558
        %5166 = vmatprep.subr.mxu0 %v563
        %5167 = vmatpush1.xpose.msra.mxu0 %v562
        %5168 = vmatprep.subr.mxu0 0.0
        %5169 = vmatpush1.xpose.msra.mxu0 0.0
        %5170 = vmatprep.subr.mxu0 0.0
        %5171 = vmatpush1.xpose.msra.mxu0 0.0
        %5172 = vmatprep.subr.mxu0 0.0
        %5173 = vmatpush1.xpose.msra.mxu0 0.0
        %5174 = vmatprep.subr.mxu0 0.0
        %5175 = vmatpush1.xpose.msra.mxu0 0.0
        %5176 = vmatprep.subr.mxu0 0.0
        %5177 = vmatpush1.xpose.msra.mxu0 0.0
        %5178 = vmatprep.subr.mxu0 0.0
        %5179 = vmatpush1.xpose.msra.mxu0 0.0
        %5180 = vmatprep.subr.mxu0 0.0
        %5181 = vmatpush1.xpose.msra.mxu0 0.0
        %5182 = vmatprep.subr.mxu0 0.0
        %5183 = vmatpush1.xpose.msra.mxu0 0.0
        %5184 = vmatprep.subr.mxu0 0.0
        %5185 = vmatpush1.xpose.msra.mxu0 0.0
        %5186 = vmatprep.subr.mxu0 0.0
        %5187 = vmatpush1.xpose.msra.mxu0 0.0
        %5188 = vmatprep.subr.mxu0 0.0
        %5189 = vmatpush1.xpose.msra.mxu0 0.0
        %5190 = vmatprep.subr.mxu0 0.0
        %5191 = vmatpush1.xpose.msra.mxu0 0.0
        %5192 = vmatprep.subr.mxu0 0.0
        %5193 = vmatpush1.xpose.msra.mxu0 0.0
        %5194 = vmatprep.subr.mxu0 0.0
        %5195 = vmatpush1.xpose.msra.mxu0 0.0
        %5196 = vmatprep.subr.mxu0 0.0
        %5197 = vmatpush1.xpose.msra.mxu0 0.0
        %5198 = vmatprep.subr.mxu0 0.0
        %5199 = vmatpush1.xpose.msra.mxu0 0.0
        %5200 = vmatprep.subr.mxu0 0.0
        %5201 = vmatpush1.xpose.msra.mxu0 0.0
        %5202 = vmatprep.subr.mxu0 0.0
        %5203 = vmatpush1.xpose.msra.mxu0 0.0
        %5204 = vmatprep.subr.mxu0 0.0
        %5205 = vmatpush1.xpose.msra.mxu0 0.0
        %5206 = vmatprep.subr.mxu0 0.0
        %5207 = vmatpush1.xpose.msra.mxu0 0.0
        %5208 = vmatprep.subr.mxu0 0.0
        %5209 = vmatpush1.xpose.msra.mxu0 0.0
        %5210 = vmatprep.subr.mxu0 0.0
        %5211 = vmatpush1.xpose.msra.mxu0 0.0
        %5212 = vmatprep.subr.mxu0 0.0
        %5213 = vmatpush1.xpose.msra.mxu0 0.0
        %5214 = vmatprep.subr.mxu0 0.0
        %5215 = vmatpush1.xpose.msra.mxu0 0.0
        %5216 = vmatprep.subr.mxu0 0.0
        %5217 = vmatpush1.xpose.msra.mxu0 0.0
        %5218 = vmatprep.subr.mxu0 0.0
        %5219 = vmatpush1.xpose.msra.mxu0 0.0
        %5220 = vmatprep.subr.mxu0 0.0
        %5221 = vmatpush1.xpose.msra.mxu0 0.0
        %5222 = vmatprep.subr.mxu0 0.0
        %5223 = vmatpush1.xpose.msra.mxu0 0.0
        %5224 = vmatprep.mubr.f32.mxu0 1.0
        %5225 = vmatmul.mubr.f32.gmra.mrb[0].mxu0 1.0
        %v5226 = vpop.f32.mrb[0].mxu0
        %v5227 = vadd.f32 %v5157, %v5226
        %v5228 = vpop.f32.mrb[0].mxu0
        %5229 = vdwg.mxu0
        %v5230 = vmul.f32 %v5227, 0.001953125
        %v5231 = vld [vmem:[%s9] sm:$0xff]
        %v5232 = vld [vmem:[%s9 + $0x8] sm:$0xff]
        %v5233 = vld [vmem:[%s9 + $0x10] sm:$0xff]
        %v5234 = vld [vmem:[%s9 + $0x18] sm:$0xff]
        %v5235 = vld [vmem:[%s10] sm:$0x1]
        %vm5236 = vcmask 261120
        %v5238 = vsel %vm5236, %v5230, 0
        %5240 = vmatprep.subr.mxu0 0.0
        %5241 = vmatpush1.msra.mxu0 %v5231
        %5242 = vmatprep.subr.mxu0 0.0
        %5243 = vmatpush1.msra.mxu0 %v5232
        %5244 = vmatprep.subr.mxu0 0.0
        %5245 = vmatpush1.msra.mxu0 %v5233
        %5246 = vmatprep.subr.mxu0 0.0
        %5247 = vmatpush1.msra.mxu0 %v5234
        %5248 = vmatprep.subr.mxu0 0.0
        %5249 = vmatpush1.msra.mxu0 0.0
        %5250 = vmatprep.subr.mxu0 0.0
        %5251 = vmatpush1.msra.mxu0 0.0
        %5252 = vmatprep.subr.mxu0 0.0
        %5253 = vmatpush1.msra.mxu0 0.0
        %5254 = vmatprep.subr.mxu0 0.0
        %5255 = vmatpush1.msra.mxu0 0.0
        %5256 = vmatprep.subr.mxu0 0.0
        %5257 = vmatpush1.msra.mxu0 0.0
        %5258 = vmatprep.subr.mxu0 0.0
        %5259 = vmatpush1.msra.mxu0 0.0
        %5260 = vmatprep.subr.mxu0 0.0
        %5261 = vmatpush1.msra.mxu0 0.0
        %5262 = vmatprep.subr.mxu0 0.0
        %5263 = vmatpush1.msra.mxu0 0.0
        %5264 = vmatprep.subr.mxu0 0.0
        %5265 = vmatpush1.msra.mxu0 0.0
        %5266 = vmatprep.subr.mxu0 0.0
        %5267 = vmatpush1.msra.mxu0 0.0
        %5268 = vmatprep.subr.mxu0 0.0
        %5269 = vmatpush1.msra.mxu0 0.0
        %5270 = vmatprep.subr.mxu0 0.0
        %5271 = vmatpush1.msra.mxu0 0.0
        %5272 = vmatprep.subr.mxu0 0.0
        %5273 = vmatpush1.msra.mxu0 0.0
        %5274 = vmatprep.subr.mxu0 0.0
        %5275 = vmatpush1.msra.mxu0 0.0
        %5276 = vmatprep.subr.mxu0 0.0
        %5277 = vmatpush1.msra.mxu0 0.0
        %5278 = vmatprep.subr.mxu0 0.0
        %5279 = vmatpush1.msra.mxu0 0.0
        %5280 = vmatprep.subr.mxu0 0.0
        %5281 = vmatpush1.msra.mxu0 0.0
        %5282 = vmatprep.subr.mxu0 0.0
        %5283 = vmatpush1.msra.mxu0 0.0
        %5284 = vmatprep.subr.mxu0 0.0
        %5285 = vmatpush1.msra.mxu0 0.0
        %5286 = vmatprep.subr.mxu0 0.0
        %5287 = vmatpush1.msra.mxu0 0.0
        %5288 = vmatprep.subr.mxu0 0.0
        %5289 = vmatpush1.msra.mxu0 0.0
        %5290 = vmatprep.subr.mxu0 0.0
        %5291 = vmatpush1.msra.mxu0 0.0
        %5292 = vmatprep.subr.mxu0 0.0
        %5293 = vmatpush1.msra.mxu0 0.0
        %5294 = vmatprep.subr.mxu0 0.0
        %5295 = vmatpush1.msra.mxu0 0.0
        %5296 = vmatprep.subr.mxu0 0.0
        %5297 = vmatpush1.msra.mxu0 0.0
        %5298 = vmatprep.subr.mxu0 0.0
        %5299 = vmatpush1.msra.mxu0 0.0
        %5300 = vmatprep.subr.mxu0 0.0
        %5301 = vmatpush1.msra.mxu0 0.0
        %5302 = vmatprep.subr.mxu0 0.0
        %5303 = vmatpush1.msra.mxu0 0.0
        %5304 = vmatprep.mubr.f32.mxu0 0.0
        %5305 = vmatmul.mubr.f32.gmra.mrb[0].mxu0 %v5238
        %v5306 = vpop.f32.mrb[0].mxu0
        %v5307 = vadd.f32 %v5235, %v5306
        %v5308 = vpop.f32.mrb[0].mxu0
        %5309 = vdwg.mxu0
        %v5310 = vmul.f32 %v5307, 0.5
        %v5311 = vmul.f32 %v5307, 0.044715
        %v5312 = vmul.f32 %v5311, %v5307
        %v5313 = vmul.f32 %v5312, %v5307
        %v5314 = vadd.f32 %v5307, %v5313
        %v5315 = vmul.f32 %v5314, 0.7978846
        %v5316 = vtanh.pop %v5315
        %v5317 = vadd.f32 %v5316, 1.0
        %v5318 = vmul.f32 %v5310, %v5317
        %v5319 = vld [vmem:[%s11] sm:$0xff]
        %v5320 = vld [vmem:[%s11 + $0x8] sm:$0xff]
        %v5321 = vld [vmem:[%s11 + $0x10] sm:$0xff]
        %v5322 = vld [vmem:[%s11 + $0x18] sm:$0xff]
        %v5323 = vld [vmem:[%s11 + $0x20] sm:$0xff]
        %v5324 = vld [vmem:[%s11 + $0x28] sm:$0xff]
        %v5325 = vld [vmem:[%s11 + $0x30] sm:$0xff]
        %v5326 = vld [vmem:[%s11 + $0x38] sm:$0xff]
        %v5327 = vld [vmem:[%s12] sm:$0x1]
        %vm5328 = vcmask 523264
        %v5330 = vsel %vm5328, %v5318, 0
        %5332 = vmatprep.subr.mxu0 0.0
        %5333 = vmatpush1.msra.mxu0 %v5319
        %5334 = vmatprep.subr.mxu0 0.0
        %5335 = vmatpush1.msra.mxu0 %v5320
        %5336 = vmatprep.subr.mxu0 0.0
        %5337 = vmatpush1.msra.mxu0 %v5321
        %5338 = vmatprep.subr.mxu0 0.0
        %5339 = vmatpush1.msra.mxu0 %v5322
        %5340 = vmatprep.subr.mxu0 0.0
        %5341 = vmatpush1.msra.mxu0 %v5323
        %5342 = vmatprep.subr.mxu0 0.0
        %5343 = vmatpush1.msra.mxu0 %v5324
        %5344 = vmatprep.subr.mxu0 0.0
        %5345 = vmatpush1.msra.mxu0 %v5325
        %5346 = vmatprep.subr.mxu0 0.0
        %5347 = vmatpush1.msra.mxu0 %v5326
        %5348 = vmatprep.subr.mxu0 0.0
        %5349 = vmatpush1.msra.mxu0 0.0
        %5350 = vmatprep.subr.mxu0 0.0
        %5351 = vmatpush1.msra.mxu0 0.0
        %5352 = vmatprep.subr.mxu0 0.0
        %5353 = vmatpush1.msra.mxu0 0.0
        %5354 = vmatprep.subr.mxu0 0.0
        %5355 = vmatpush1.msra.mxu0 0.0
        %5356 = vmatprep.subr.mxu0 0.0
        %5357 = vmatpush1.msra.mxu0 0.0
        %5358 = vmatprep.subr.mxu0 0.0
        %5359 = vmatpush1.msra.mxu0 0.0
        %5360 = vmatprep.subr.mxu0 0.0
        %5361 = vmatpush1.msra.mxu0 0.0
        %5362 = vmatprep.subr.mxu0 0.0
        %5363 = vmatpush1.msra.mxu0 0.0
        %5364 = vmatprep.subr.mxu0 0.0
        %5365 = vmatpush1.msra.mxu0 0.0
        %5366 = vmatprep.subr.mxu0 0.0
        %5367 = vmatpush1.msra.mxu0 0.0
        %5368 = vmatprep.subr.mxu0 0.0
        %5369 = vmatpush1.msra.mxu0 0.0
        %5370 = vmatprep.subr.mxu0 0.0
        %5371 = vmatpush1.msra.mxu0 0.0
        %5372 = vmatprep.subr.mxu0 0.0
        %5373 = vmatpush1.msra.mxu0 0.0
        %5374 = vmatprep.subr.mxu0 0.0
        %5375 = vmatpush1.msra.mxu0 0.0
        %5376 = vmatprep.subr.mxu0 0.0
        %5377 = vmatpush1.msra.mxu0 0.0
        %5378 = vmatprep.subr.mxu0 0.0
        %5379 = vmatpush1.msra.mxu0 0.0
        %5380 = vmatprep.subr.mxu0 0.0
        %5381 = vmatpush1.msra.mxu0 0.0
        %5382 = vmatprep.subr.mxu0 0.0
        %5383 = vmatpush1.msra.mxu0 0.0
        %5384 = vmatprep.subr.mxu0 0.0
        %5385 = vmatpush1.msra.mxu0 0.0
        %5386 = vmatprep.subr.mxu0 0.0
        %5387 = vmatpush1.msra.mxu0 0.0
        %5388 = vmatprep.subr.mxu0 0.0
        %5389 = vmatpush1.msra.mxu0 0.0
        %5390 = vmatprep.subr.mxu0 0.0
        %5391 = vmatpush1.msra.mxu0 0.0
        %5392 = vmatprep.subr.mxu0 0.0
        %5393 = vmatpush1.msra.mxu0 0.0
        %5394 = vmatprep.subr.mxu0 0.0
        %5395 = vmatpush1.msra.mxu0 0.0
        %5396 = vmatprep.mubr.f32.mxu0 0.0
        %5397 = vmatmul.mubr.f32.gmra.mrb[0].mxu0 %v5330
        %v5398 = vpop.f32.mrb[0].mxu0
        %v5399 = vadd.f32 %v5327, %v5398
        %v5400 = vpop.f32.mrb[0].mxu0
        %5401 = vdwg.mxu0
        %5402 = vst [vmem:[%s445] sm:$0x1] %v5399
        %s5403 = sand.u32 %s318, 1
        %s5404 = scalar_lea.sflag [#allocation3], %s5403
        %s5405 = sand.u32 %s318, 1
        %s5406 = scalar_lea.vmem [#allocation2], %s5405
        // Predicated region
        $region87: #{classifier_forward.1} parent=71 // pred_check
          %p5407 = pneg %p328
        $region88: #{classifier_forward.1} parent=71 // pred_check_branch
          %5409 = sbr.rel (%p5407) target = $region90
        $region89: #{classifier_forward.1} parent=71 // pred_region
          %s5411 = ssub.s32 16, 16
          %5412 = vsyncadd %s5404, %s5411
          %s5413 = smul.addr %s27, 16
          %s5414 = scalar_lea.hbm %s13, %s5413
          %s5416 = sshll.u32 %s5406, 4
          %s5417 = int_to_ptr.vmem [resolvable:$true] %s5416
          %5419 = dma.vmem_to_hbm [thread:$0]  %s5417, 16, %s5414, %s5404
        $region90: #{classifier_forward.1} parent=71 // pred_fallthru
          _
      $region72: #{classifier_forward.1} parent=5 // pred_fallthru
        _
      %p5420 = scmp.le.s32.totalorder 2, %s22
      // Predicated region
      $region91: #{classifier_forward.1} parent=5 // pred_check
        %p5421 = pneg %p5420
      $region92: #{classifier_forward.1} parent=5 // pred_check_branch
        %5423 = sbr.rel (%p5421) target = $region94
      $region93: #{classifier_forward.1} parent=5 // pred_region
        %s5424 = ssub.s32 %s22, 2
        // Predicated region
        $region95: #{classifier_forward.1} parent=93 // pred_check
          %p5425 = pneg %p334
        $region96: #{classifier_forward.1} parent=93 // pred_check_branch
          %5427 = sbr.rel (%p5425) target = $region98
        $region97: #{classifier_forward.1} parent=93 // pred_region
          %s5428 = sand.u32 %s319, 1
          %s5429 = scalar_lea.sflag [#allocation3], %s5428
          %s5430 = sand.u32 %s319, 1
          %s5431 = scalar_lea.vmem [#allocation2], %s5430
          %5432 = dma.done %s5429, 16
        $region98: #{classifier_forward.1} parent=93 // pred_fallthru
          _
      $region94: #{classifier_forward.1} parent=5 // pred_fallthru
        _
    $region6: #{classifier_forward.1} parent=1 // loop_footer
      %s26 = sadd.s32 1, %s22
    $region7: #{classifier_forward.1} parent=1 // loop_footer_branch
      %21 = sbr.rel target = $region3
    $region8: #{classifier_forward.1} parent=1 // loop_exit
      _
    %5433 = vsyncpa [#allocation3], 1
    %s5434 = scalar_lea.sflag [#allocation3], 1
    %5435 = vsyncpa %s5434, 1

</llo_original>
